<compile_context>
chip_gen: v6e
topology: v6e:2x2x1
jax: 0.10.0
libtpu: 0.0.40
codegen_flags: <defaults>
</compile_context>

<pallas_src>
import functools

import jax
import jax.numpy as jnp
from jax.experimental import pallas as pl
from jax.experimental.pallas import tpu as pltpu

INPUT_DIM = 5
HIDDEN = 512
OUTPUT_DIM = 3
OUT_PAD = 128      # lane-dense output slab; sliced back to 3 in the wrapper
TB_MAX = 1024      # batch tile cap (multiple of 256 -> v6e/v7x M, v5e 128)


def _detect_fc1_on_mxu():
    """fc1 on the MXU for v6e/v7x (bf16-native MXU, VALU-bound otherwise);
    keep the VPU broadcast-FMA path on v5e where the MXU is the binding unit."""
    try:
        kind = jax.devices()[0].device_kind.lower()
        return "v5" not in kind
    except Exception:
        return True


_FC1_ON_MXU = _detect_fc1_on_mxu()


def _pick_tiling(batch):
    """Pick (TB, B_pad): TB a multiple-of-256 divisor of B_pad, <= TB_MAX,
    preferring >= 2 grid steps (v7x megacore) when the batch allows."""
    b_pad = ((batch + 255) // 256) * 256
    tb = 256
    for cand in (TB_MAX, 768, 512):
        if cand <= b_pad and b_pad % cand == 0:
            tb = cand
            break
    if b_pad // tb < 2 and b_pad >= 512:          # keep both v7x TCs busy
        for cand in (512, 256):
            if b_pad % cand == 0 and b_pad // cand >= 2:
                tb = cand
                break
    return tb, b_pad


def _mlp_kernel(x_ref,
                w1_ref, b1_ref,
                w2_ref, b2_ref,
                w3_ref, b3_ref,
                w4_ref, b4_ref,
                o_ref, *, fc1_on_mxu):
    x = x_ref[...]                                   # [TB, 5]  f32

    # ---- fc1 ----
    if fc1_on_mxu:
        # K=5 MXU pass (bf16 inputs, f32 accumulate) -- noise on the MXU,
        # frees ~300 VALU cycles/tile on v6e/v7x.
        h = jnp.dot(x.astype(jnp.bfloat16),
                    w1_ref[...].astype(jnp.bfloat16),
                    preferred_element_type=jnp.float32)
    else:
        # v5e: 5 unrolled VPU broadcast-FMAs (MXU is the binding unit there).
        w1 = w1_ref[...]                             # [5, 512] f32
        h = x[:, 0:1] * w1[0:1, :]
        for k in range(1, INPUT_DIM):                # static unroll, 4 iters
            h = h + x[:, k:k + 1] * w1[k:k + 1, :]
    h = jnp.maximum(h + b1_ref[...], 0.0)            # [TB, 512] f32

    # ---- fc2 / fc3: bf16 MXU matmuls, f32 accumulate, f32 bias + ReLU ----
    h = jnp.dot(h.astype(jnp.bfloat16), w2_ref[...],
                preferred_element_type=jnp.float32) + b2_ref[...]
    h = jnp.maximum(h, 0.0)
    h = jnp.dot(h.astype(jnp.bfloat16), w3_ref[...],
                preferred_element_type=jnp.float32) + b3_ref[...]
    h = jnp.maximum(h, 0.0)

    # ---- fc4: [TB,512] x [512,OUT_PAD] (lane-dense padded output) ----
    out = jnp.dot(h.astype(jnp.bfloat16), w4_ref[...],
                  preferred_element_type=jnp.float32) + b4_ref[...]
    o_ref[...] = out.astype(o_ref.dtype)


@jax.jit
def simple_net_forward(x, params):
    """x: [B, INPUT_DIM] float32. params: dict (w1/b* f32, w2..w4 bf16)."""
    B = x.shape[0]
    TB, B_pad = _pick_tiling(B)
    if B_pad != B:
        x = jnp.pad(x, ((0, B_pad - B), (0, 0)))
    grid = (B_pad // TB,)

    # Zero-pad fc4 to a lane-dense (>=128) output slab.
    w4 = jnp.pad(params["w4"], ((0, 0), (0, OUT_PAD - OUTPUT_DIM)))
    b4 = jnp.pad(params["b4"], ((0, 0), (0, OUT_PAD - OUTPUT_DIM)))

    const = lambda i: (0, 0)   # weights/biases resident across batch tiles
    in_specs = [
        pl.BlockSpec((TB, INPUT_DIM), lambda i: (i, 0)),          # x tile
        pl.BlockSpec((INPUT_DIM, HIDDEN), const),                 # w1
        pl.BlockSpec((1, HIDDEN), const),                         # b1
        pl.BlockSpec((HIDDEN, HIDDEN), const),                    # w2
        pl.BlockSpec((1, HIDDEN), const),                         # b2
        pl.BlockSpec((HIDDEN, HIDDEN), const),                    # w3
        pl.BlockSpec((1, HIDDEN), const),                         # b3
        pl.BlockSpec((HIDDEN, OUT_PAD), const),                   # w4 (padded)
        pl.BlockSpec((1, OUT_PAD), const),                        # b4 (padded)
    ]
    out_spec = pl.BlockSpec((TB, OUT_PAD), lambda i: (i, 0))

    kernel = functools.partial(_mlp_kernel, fc1_on_mxu=_FC1_ON_MXU)

    out = pl.pallas_call(
        kernel,
        out_shape=jax.ShapeDtypeStruct((B_pad, OUT_PAD), jnp.float32),
        grid=grid,
        in_specs=in_specs,
        out_specs=out_spec,
        compiler_params=pltpu.CompilerParams(
            dimension_semantics=("parallel",),        # megacore on v7x
            vmem_limit_bytes=32 * 1024 * 1024,        # portable across gens
        ),
    )(x,
      params["w1"], params["b1"],
      params["w2"], params["b2"],
      params["w3"], params["b3"],
      w4, b4)
    return out[:B, :OUTPUT_DIM]


def init_params(key):
    """Init mimicking torch.nn.Linear (U[-1/sqrt(fan_in), +]); w2..w4 bf16."""
    def linear(key, fan_in, fan_out, w_dtype):
        kw, kb = jax.random.split(key)
        bound = 1.0 / (fan_in ** 0.5)
        w = jax.random.uniform(kw, (fan_in, fan_out), jnp.float32, -bound, bound)
        b = jax.random.uniform(kb, (1, fan_out), jnp.float32, -bound, bound)
        return w.astype(w_dtype), b

    k1, k2, k3, k4 = jax.random.split(key, 4)
    w1, b1 = linear(k1, INPUT_DIM, HIDDEN, jnp.float32)   # fc1 cast in-kernel
    w2, b2 = linear(k2, HIDDEN, HIDDEN, jnp.bfloat16)
    w3, b3 = linear(k3, HIDDEN, HIDDEN, jnp.bfloat16)
    w4, b4 = linear(k4, HIDDEN, OUTPUT_DIM, jnp.bfloat16)
    return dict(w1=w1, b1=b1, w2=w2, b2=b2, w3=w3, b3=b3, w4=w4, b4=b4)


def reference_forward(x, p, fc1_on_mxu):
    """Pure-JAX reference with the same bf16-weight / f32-accumulate math.
    Intentional accuracy tradeoff vs pure-f32 PyTorch: fc2..fc4 (and fc1 on
    v6e/v7x) use bf16 operands with f32 accumulation."""
    if fc1_on_mxu:
        h = jnp.dot(x.astype(jnp.bfloat16), p["w1"].astype(jnp.bfloat16),
                    preferred_element_type=jnp.float32) + p["b1"]
    else:
        h = x @ p["w1"] + p["b1"]
    h = jnp.maximum(h, 0.0)
    h = jnp.maximum(
        jnp.dot(h.astype(jnp.bfloat16), p["w2"],
                preferred_element_type=jnp.float32) + p["b2"], 0.0)
    h = jnp.maximum(
        jnp.dot(h.astype(jnp.bfloat16), p["w3"],
                preferred_element_type=jnp.float32) + p["b3"], 0.0)
    return jnp.dot(h.astype(jnp.bfloat16), p["w4"],
                   preferred_element_type=jnp.float32) + p["b4"]


if __name__ == "__main__":
    key = jax.random.PRNGKey(0)
    kx, kp = jax.random.split(key)

    B = 8
    x = jax.random.normal(kx, (B, INPUT_DIM), jnp.float32)
    params = init_params(kp)

    out = simple_net_forward(x, params)
    out = jax.block_until_ready(out)

    ref = reference_forward(x, params, _FC1_ON_MXU)
    assert out.shape == (B, OUTPUT_DIM), out.shape
    assert jnp.allclose(out, ref, atol=5e-3, rtol=5e-3), "mismatch vs JAX reference"

    print("KERNEL_OK")
</pallas_src>

<mosaic_0001>
module attributes {stable_mosaic.version = 11 : i64} {
  func.func @_mlp_kernel(%arg0: i32, %arg1: memref<256x5xf32, #tpu.memory_space<vmem>>, %arg2: memref<5x512xf32, #tpu.memory_space<vmem>>, %arg3: memref<1x512xf32, #tpu.memory_space<vmem>>, %arg4: memref<512x512xbf16, #tpu.memory_space<vmem>>, %arg5: memref<1x512xf32, #tpu.memory_space<vmem>>, %arg6: memref<512x512xbf16, #tpu.memory_space<vmem>>, %arg7: memref<1x512xf32, #tpu.memory_space<vmem>>, %arg8: memref<512x128xbf16, #tpu.memory_space<vmem>>, %arg9: memref<1x128xf32, #tpu.memory_space<vmem>>, %arg10: memref<256x128xf32, #tpu.memory_space<vmem>>) attributes {dimension_semantics = [#tpu.dimension_semantics<parallel>], iteration_bounds = array<i64: 1>, scalar_prefetch = 0 : i64, scratch_operands = 0 : i64, tpu.core_type = #tpu.core_type<tc>, window_params = [{transform_indices = @transform_0, window_bounds = array<i64: 256, 5>}, {pipeline_mode = #tpu.pipeline_mode<synchronous>, transform_indices = @transform_1, window_bounds = array<i64: 5, 512>}, {pipeline_mode = #tpu.pipeline_mode<synchronous>, transform_indices = @transform_2, window_bounds = array<i64: 1, 512>}, {pipeline_mode = #tpu.pipeline_mode<synchronous>, transform_indices = @transform_3, window_bounds = array<i64: 512, 512>}, {pipeline_mode = #tpu.pipeline_mode<synchronous>, transform_indices = @transform_4, window_bounds = array<i64: 1, 512>}, {pipeline_mode = #tpu.pipeline_mode<synchronous>, transform_indices = @transform_5, window_bounds = array<i64: 512, 512>}, {pipeline_mode = #tpu.pipeline_mode<synchronous>, transform_indices = @transform_6, window_bounds = array<i64: 1, 512>}, {pipeline_mode = #tpu.pipeline_mode<synchronous>, transform_indices = @transform_7, window_bounds = array<i64: 512, 128>}, {pipeline_mode = #tpu.pipeline_mode<synchronous>, transform_indices = @transform_8, window_bounds = array<i64: 1, 128>}, {transform_indices = @transform_9, window_bounds = array<i64: 256, 128>}]} {
    %c0 = arith.constant 0 : index
    %c0_0 = arith.constant 0 : index
    %0 = vector.load %arg1[%c0, %c0_0] : memref<256x5xf32, #tpu.memory_space<vmem>>, vector<256x5xf32>
    %1 = arith.truncf %0 : vector<256x5xf32> to vector<256x5xbf16>
    %c0_1 = arith.constant 0 : index
    %c0_2 = arith.constant 0 : index
    %2 = vector.load %arg2[%c0_1, %c0_2] : memref<5x512xf32, #tpu.memory_space<vmem>>, vector<5x512xf32>
    %3 = arith.truncf %2 : vector<5x512xf32> to vector<5x512xbf16>
    %cst = arith.constant dense<0.000000e+00> : vector<256x512xf32>
    %4 = tpu.matmul %1, %3, %cst {dimension_numbers = #tpu.dot_dimension_numbers<[1], [0], [0], [1], [0, 0, 1, 1], [], []>} : vector<256x5xbf16>, vector<5x512xbf16>, vector<256x512xf32> -> vector<256x512xf32>
    %c0_3 = arith.constant 0 : index
    %c0_4 = arith.constant 0 : index
    %5 = vector.load %arg3[%c0_3, %c0_4] : memref<1x512xf32, #tpu.memory_space<vmem>>, vector<1x512xf32>
    %6 = vector.broadcast %5 : vector<1x512xf32> to vector<256x512xf32>
    %7 = arith.addf %4, %6 : vector<256x512xf32>
    %cst_5 = arith.constant 0.000000e+00 : f32
    %8 = vector.broadcast %cst_5 : f32 to vector<256x512xf32>
    %9 = arith.maximumf %7, %8 : vector<256x512xf32>
    %10 = arith.truncf %9 : vector<256x512xf32> to vector<256x512xbf16>
    %c0_6 = arith.constant 0 : index
    %c0_7 = arith.constant 0 : index
    %11 = vector.load %arg4[%c0_6, %c0_7] : memref<512x512xbf16, #tpu.memory_space<vmem>>, vector<512x512xbf16>
    %cst_8 = arith.constant dense<0.000000e+00> : vector<256x512xf32>
    %12 = tpu.matmul %10, %11, %cst_8 {dimension_numbers = #tpu.dot_dimension_numbers<[1], [0], [0], [1], [0, 0, 1, 1], [], []>} : vector<256x512xbf16>, vector<512x512xbf16>, vector<256x512xf32> -> vector<256x512xf32>
    %c0_9 = arith.constant 0 : index
    %c0_10 = arith.constant 0 : index
    %13 = vector.load %arg5[%c0_9, %c0_10] : memref<1x512xf32, #tpu.memory_space<vmem>>, vector<1x512xf32>
    %14 = vector.broadcast %13 : vector<1x512xf32> to vector<256x512xf32>
    %15 = arith.addf %12, %14 : vector<256x512xf32>
    %cst_11 = arith.constant 0.000000e+00 : f32
    %16 = vector.broadcast %cst_11 : f32 to vector<256x512xf32>
    %17 = arith.maximumf %15, %16 : vector<256x512xf32>
    %18 = arith.truncf %17 : vector<256x512xf32> to vector<256x512xbf16>
    %c0_12 = arith.constant 0 : index
    %c0_13 = arith.constant 0 : index
    %19 = vector.load %arg6[%c0_12, %c0_13] : memref<512x512xbf16, #tpu.memory_space<vmem>>, vector<512x512xbf16>
    %cst_14 = arith.constant dense<0.000000e+00> : vector<256x512xf32>
    %20 = tpu.matmul %18, %19, %cst_14 {dimension_numbers = #tpu.dot_dimension_numbers<[1], [0], [0], [1], [0, 0, 1, 1], [], []>} : vector<256x512xbf16>, vector<512x512xbf16>, vector<256x512xf32> -> vector<256x512xf32>
    %c0_15 = arith.constant 0 : index
    %c0_16 = arith.constant 0 : index
    %21 = vector.load %arg7[%c0_15, %c0_16] : memref<1x512xf32, #tpu.memory_space<vmem>>, vector<1x512xf32>
    %22 = vector.broadcast %21 : vector<1x512xf32> to vector<256x512xf32>
    %23 = arith.addf %20, %22 : vector<256x512xf32>
    %cst_17 = arith.constant 0.000000e+00 : f32
    %24 = vector.broadcast %cst_17 : f32 to vector<256x512xf32>
    %25 = arith.maximumf %23, %24 : vector<256x512xf32>
    %26 = arith.truncf %25 : vector<256x512xf32> to vector<256x512xbf16>
    %c0_18 = arith.constant 0 : index
    %c0_19 = arith.constant 0 : index
    %27 = vector.load %arg8[%c0_18, %c0_19] : memref<512x128xbf16, #tpu.memory_space<vmem>>, vector<512x128xbf16>
    %cst_20 = arith.constant dense<0.000000e+00> : vector<256x128xf32>
    %28 = tpu.matmul %26, %27, %cst_20 {dimension_numbers = #tpu.dot_dimension_numbers<[1], [0], [0], [1], [0, 0, 1, 1], [], []>} : vector<256x512xbf16>, vector<512x128xbf16>, vector<256x128xf32> -> vector<256x128xf32>
    %c0_21 = arith.constant 0 : index
    %c0_22 = arith.constant 0 : index
    %29 = vector.load %arg9[%c0_21, %c0_22] : memref<1x128xf32, #tpu.memory_space<vmem>>, vector<1x128xf32>
    %30 = vector.broadcast %29 : vector<1x128xf32> to vector<256x128xf32>
    %31 = arith.addf %28, %30 : vector<256x128xf32>
    %c0_23 = arith.constant 0 : index
    %c0_24 = arith.constant 0 : index
    %32 = vector.load %arg10[%c0_23, %c0_24] : memref<256x128xf32, #tpu.memory_space<vmem>>, vector<256x128xf32>
    tpu.vector_store %arg10[%c0_23, %c0_24], %31 {strides = array<i32>} : memref<256x128xf32, #tpu.memory_space<vmem>>, vector<256x128xf32>,
    return
  }
  func.func @transform_0(%arg0: i32) -> (i32, i32) {
    %c0_i32 = arith.constant 0 : i32
    %c0_i32_0 = arith.constant 0 : i32
    return %arg0, %c0_i32 : i32, i32
  }
  func.func @transform_1(%arg0: i32) -> (i32, i32) {
    %c0_i32 = arith.constant 0 : i32
    %c0_i32_0 = arith.constant 0 : i32
    %c0_i32_1 = arith.constant 0 : i32
    return %c0_i32, %c0_i32_0 : i32, i32
  }
  func.func @transform_2(%arg0: i32) -> (i32, i32) {
    %c0_i32 = arith.constant 0 : i32
    %c0_i32_0 = arith.constant 0 : i32
    %c0_i32_1 = arith.constant 0 : i32
    return %c0_i32, %c0_i32_0 : i32, i32
  }
  func.func @transform_3(%arg0: i32) -> (i32, i32) {
    %c0_i32 = arith.constant 0 : i32
    %c0_i32_0 = arith.constant 0 : i32
    %c0_i32_1 = arith.constant 0 : i32
    return %c0_i32, %c0_i32_0 : i32, i32
  }
  func.func @transform_4(%arg0: i32) -> (i32, i32) {
    %c0_i32 = arith.constant 0 : i32
    %c0_i32_0 = arith.constant 0 : i32
    %c0_i32_1 = arith.constant 0 : i32
    return %c0_i32, %c0_i32_0 : i32, i32
  }
  func.func @transform_5(%arg0: i32) -> (i32, i32) {
    %c0_i32 = arith.constant 0 : i32
    %c0_i32_0 = arith.constant 0 : i32
    %c0_i32_1 = arith.constant 0 : i32
    return %c0_i32, %c0_i32_0 : i32, i32
  }
  func.func @transform_6(%arg0: i32) -> (i32, i32) {
    %c0_i32 = arith.constant 0 : i32
    %c0_i32_0 = arith.constant 0 : i32
    %c0_i32_1 = arith.constant 0 : i32
    return %c0_i32, %c0_i32_0 : i32, i32
  }
  func.func @transform_7(%arg0: i32) -> (i32, i32) {
    %c0_i32 = arith.constant 0 : i32
    %c0_i32_0 = arith.constant 0 : i32
    %c0_i32_1 = arith.constant 0 : i32
    return %c0_i32, %c0_i32_0 : i32, i32
  }
  func.func @transform_8(%arg0: i32) -> (i32, i32) {
    %c0_i32 = arith.constant 0 : i32
    %c0_i32_0 = arith.constant 0 : i32
    %c0_i32_1 = arith.constant 0 : i32
    return %c0_i32, %c0_i32_0 : i32, i32
  }
  func.func @transform_9(%arg0: i32) -> (i32, i32) {
    %c0_i32 = arith.constant 0 : i32
    %c0_i32_0 = arith.constant 0 : i32
    return %arg0, %c0_i32 : i32, i32
  }
}

</mosaic_0001>

<llo_original>
// kernel: simple_net_forward.1
$region0: #{simple_net_forward.1}
  #allocation0 [shape = 'u32[]', space=smem, size = 0x4, offset = 0x4, fixed_abs, tag = 'smem constant byte address 0x4 - core index']
  #allocation1 [shape = 'u32[144,128]{1,0:T(1,128)}', space=vmem, size = 0x12000, scoped, tag = 'internal scratch']
  %s0 = inlined_call_operand.vmem [shape: f32[256,5], index: 0, kind: input, shape index: {}]
  %s1 = inlined_call_operand.hbm [shape: f32[5,512], index: 1, kind: input, shape index: {}]
  %s2 = inlined_call_operand.vmem [shape: f32[1,512], index: 2, kind: input, shape index: {}]
  %s3 = inlined_call_operand.vmem [shape: bf16[512,512], index: 3, kind: input, shape index: {}]
  %s4 = inlined_call_operand.vmem [shape: f32[1,512], index: 4, kind: input, shape index: {}]
  %s5 = inlined_call_operand.hbm [shape: bf16[512,512], index: 5, kind: input, shape index: {}]
  %s6 = inlined_call_operand.vmem [shape: f32[1,512], index: 6, kind: input, shape index: {}]
  %s7 = inlined_call_operand.vmem [shape: bf16[512,128], index: 7, kind: input, shape index: {}]
  %s8 = inlined_call_operand.vmem [shape: f32[1,128], index: 8, kind: input, shape index: {}]
  %s9 = inlined_call_operand.vmem [shape: f32[256,128], index: 9, kind: output, shape index: {}]
  %s10 = sld [smem:[#allocation0]]
  $region54: #{simple_net_forward.1} parent=0
    _
  %s12 = ssub.s32 1, %s10
  %s13 = scalar_select 0, %s12, %s10
  $region1: #{simple_net_forward.1} parent=0
    #allocation2 [shape = 'u8[16384]{0}', space=vmem, size = 0x4000, scoped, tag = 'input window, operand 1, single buffered']
    #allocation3 [shape = 's32[1]{0}', space=sflag, size = 0x4, scoped, tag = 'scoped memory for simple_net_forward.1']
    #allocation4 [shape = 'u8[524288]{0}', space=vmem, size = 0x80000, scoped, tag = 'input window, operand 5, single buffered']
    #allocation5 [shape = 's32[1]{0}', space=sflag, size = 0x4, scoped, tag = 'scoped memory for simple_net_forward.1']
    %14 = vsyncpa [#allocation3], 0
    %15 = vsyncpa [#allocation5], 0
    // Predicated region
    $region2: #{simple_net_forward.1} parent=1 // pred_check
      _
    $region3: #{simple_net_forward.1} parent=1 // pred_check_branch
      %17 = sbr.rel (0) target = $region5
    $region4: #{simple_net_forward.1} parent=1 // pred_region
      _
    $region5: #{simple_net_forward.1} parent=1 // pred_fallthru
      _
    // Predicated region
    $region6: #{simple_net_forward.1} parent=1 // pred_check
      _
    $region7: #{simple_net_forward.1} parent=1 // pred_check_branch
      %19 = sbr.rel (0) target = $region9
    $region8: #{simple_net_forward.1} parent=1 // pred_region
      %s21 = ssub.s32 512, 512
      %22 = vsyncadd [#allocation3], %s21
      %s24 = sshll.u32 [#allocation2], 4
      %s25 = int_to_ptr.vmem [resolvable:$true] %s24
      %27 = dma.hbm_to_vmem [thread:$0]  %s1, 512, %s25, [#allocation3]
    $region9: #{simple_net_forward.1} parent=1 // pred_fallthru
      _
    // Predicated region
    $region10: #{simple_net_forward.1} parent=1 // pred_check
      _
    $region11: #{simple_net_forward.1} parent=1 // pred_check_branch
      %29 = sbr.rel (0) target = $region13
    $region12: #{simple_net_forward.1} parent=1 // pred_region
      _
    $region13: #{simple_net_forward.1} parent=1 // pred_fallthru
      _
    // Predicated region
    $region14: #{simple_net_forward.1} parent=1 // pred_check
      _
    $region15: #{simple_net_forward.1} parent=1 // pred_check_branch
      %31 = sbr.rel (0) target = $region17
    $region16: #{simple_net_forward.1} parent=1 // pred_region
      _
    $region17: #{simple_net_forward.1} parent=1 // pred_fallthru
      _
    // Predicated region
    $region18: #{simple_net_forward.1} parent=1 // pred_check
      _
    $region19: #{simple_net_forward.1} parent=1 // pred_check_branch
      %33 = sbr.rel (0) target = $region21
    $region20: #{simple_net_forward.1} parent=1 // pred_region
      _
    $region21: #{simple_net_forward.1} parent=1 // pred_fallthru
      _
    // Predicated region
    $region22: #{simple_net_forward.1} parent=1 // pred_check
      _
    $region23: #{simple_net_forward.1} parent=1 // pred_check_branch
      %35 = sbr.rel (0) target = $region25
    $region24: #{simple_net_forward.1} parent=1 // pred_region
      %s37 = ssub.s32 16384, 16384
      %38 = vsyncadd [#allocation5], %s37
      %s39 = sshll.u32 [#allocation4], 4
      %s40 = int_to_ptr.vmem [resolvable:$true] %s39
      %45 = dma.hbm_to_vmem [thread:$0]  %s5, 16384, %s40, [#allocation5], 256, 256, 16
    $region25: #{simple_net_forward.1} parent=1 // pred_fallthru
      _
    // Predicated region
    $region26: #{simple_net_forward.1} parent=1 // pred_check
      _
    $region27: #{simple_net_forward.1} parent=1 // pred_check_branch
      %47 = sbr.rel (0) target = $region29
    $region28: #{simple_net_forward.1} parent=1 // pred_region
      _
    $region29: #{simple_net_forward.1} parent=1 // pred_fallthru
      _
    // Predicated region
    $region30: #{simple_net_forward.1} parent=1 // pred_check
      _
    $region31: #{simple_net_forward.1} parent=1 // pred_check_branch
      %49 = sbr.rel (0) target = $region33
    $region32: #{simple_net_forward.1} parent=1 // pred_region
      _
    $region33: #{simple_net_forward.1} parent=1 // pred_fallthru
      _
    // Predicated region
    $region34: #{simple_net_forward.1} parent=1 // pred_check
      _
    $region35: #{simple_net_forward.1} parent=1 // pred_check_branch
      %51 = sbr.rel (0) target = $region37
    $region36: #{simple_net_forward.1} parent=1 // pred_region
      _
    $region37: #{simple_net_forward.1} parent=1 // pred_fallthru
      _
    // Predicated region
    $region38: #{simple_net_forward.1} parent=1 // pred_check
      _
    $region39: #{simple_net_forward.1} parent=1 // pred_check_branch
      %53 = sbr.rel (0) target = $region41
    $region40: #{simple_net_forward.1} parent=1 // pred_region
      %54 = dma.done [#allocation3], 512
    $region41: #{simple_net_forward.1} parent=1 // pred_fallthru
      _
    // Predicated region
    $region42: #{simple_net_forward.1} parent=1 // pred_check
      _
    $region43: #{simple_net_forward.1} parent=1 // pred_check_branch
      %56 = sbr.rel (0) target = $region45
    $region44: #{simple_net_forward.1} parent=1 // pred_region
      %57 = dma.done [#allocation5], 16384
    $region45: #{simple_net_forward.1} parent=1 // pred_fallthru
      _
    %v59 = vld [vmem:[%s0] sm:$0xff]
    %v60 = vld [vmem:[%s0 + $0x8] sm:$0xff]
    %v61 = vld [vmem:[%s0 + $0x10] sm:$0xff]
    %v62 = vld [vmem:[%s0 + $0x18] sm:$0xff]
    %v63 = vld [vmem:[%s0 + $0x20] sm:$0xff]
    %v64 = vld [vmem:[%s0 + $0x28] sm:$0xff]
    %v65 = vld [vmem:[%s0 + $0x30] sm:$0xff]
    %v66 = vld [vmem:[%s0 + $0x38] sm:$0xff]
    %v67 = vld [vmem:[%s0 + $0x40] sm:$0xff]
    %v68 = vld [vmem:[%s0 + $0x48] sm:$0xff]
    %v69 = vld [vmem:[%s0 + $0x50] sm:$0xff]
    %v70 = vld [vmem:[%s0 + $0x58] sm:$0xff]
    %v71 = vld [vmem:[%s0 + $0x60] sm:$0xff]
    %v72 = vld [vmem:[%s0 + $0x68] sm:$0xff]
    %v73 = vld [vmem:[%s0 + $0x70] sm:$0xff]
    %v74 = vld [vmem:[%s0 + $0x78] sm:$0xff]
    %v75 = vld [vmem:[%s0 + $0x80] sm:$0xff]
    %v76 = vld [vmem:[%s0 + $0x88] sm:$0xff]
    %v77 = vld [vmem:[%s0 + $0x90] sm:$0xff]
    %v78 = vld [vmem:[%s0 + $0x98] sm:$0xff]
    %v79 = vld [vmem:[%s0 + $0xa0] sm:$0xff]
    %v80 = vld [vmem:[%s0 + $0xa8] sm:$0xff]
    %v81 = vld [vmem:[%s0 + $0xb0] sm:$0xff]
    %v82 = vld [vmem:[%s0 + $0xb8] sm:$0xff]
    %v83 = vld [vmem:[%s0 + $0xc0] sm:$0xff]
    %v84 = vld [vmem:[%s0 + $0xc8] sm:$0xff]
    %v85 = vld [vmem:[%s0 + $0xd0] sm:$0xff]
    %v86 = vld [vmem:[%s0 + $0xd8] sm:$0xff]
    %v87 = vld [vmem:[%s0 + $0xe0] sm:$0xff]
    %v88 = vld [vmem:[%s0 + $0xe8] sm:$0xff]
    %v89 = vld [vmem:[%s0 + $0xf0] sm:$0xff]
    %v90 = vld [vmem:[%s0 + $0xf8] sm:$0xff]
    %v91 = vpack.c.bf16 %v60, %v59
    %v92 = vpack.c.bf16 %v62, %v61
    %v93 = vpack.c.bf16 %v64, %v63
    %v94 = vpack.c.bf16 %v66, %v65
    %v95 = vpack.c.bf16 %v68, %v67
    %v96 = vpack.c.bf16 %v70, %v69
    %v97 = vpack.c.bf16 %v72, %v71
    %v98 = vpack.c.bf16 %v74, %v73
    %v99 = vpack.c.bf16 %v76, %v75
    %v100 = vpack.c.bf16 %v78, %v77
    %v101 = vpack.c.bf16 %v80, %v79
    %v102 = vpack.c.bf16 %v82, %v81
    %v103 = vpack.c.bf16 %v84, %v83
    %v104 = vpack.c.bf16 %v86, %v85
    %v105 = vpack.c.bf16 %v88, %v87
    %v106 = vpack.c.bf16 %v90, %v89
    %v107 = vld [vmem:[#allocation2] sm:$0x1f]
    %v108 = vld [vmem:[#allocation2 + $0x8] sm:$0x1f]
    %v109 = vld [vmem:[#allocation2 + $0x10] sm:$0x1f]
    %v110 = vld [vmem:[#allocation2 + $0x18] sm:$0x1f]
    %v111 = vpack.c.bf16 %v107, %v107
    %v112 = vpack.c.bf16 %v108, %v108
    %v113 = vpack.c.bf16 %v109, %v109
    %v114 = vpack.c.bf16 %v110, %v110
    %v115 = vld [vmem:[%s2] sm:$0xf]
    %v117 = vlaneseq
    %v118 = vshrl.u32 %v117, 7
    %v119 = vsub.s32 0, %v118
    %v120 = vrot.slane %v115, %v119
    %v121 = vlaneseq
    %v122 = vshrl.u32 %v121, 7
    %v123 = vsub.s32 1, %v122
    %v124 = vrot.slane %v115, %v123
    %v125 = vlaneseq
    %v126 = vshrl.u32 %v125, 7
    %v127 = vsub.s32 2, %v126
    %v128 = vrot.slane %v115, %v127
    %v129 = vlaneseq
    %v130 = vshrl.u32 %v129, 7
    %v131 = vsub.s32 3, %v130
    %v132 = vrot.slane %v115, %v131
    %vm137 = vcmask 39936
    %v139 = vsel %vm137, %v91, 0
    %v142 = vsel %vm137, %v92, 0
    %v145 = vsel %vm137, %v93, 0
    %v148 = vsel %vm137, %v94, 0
    %v151 = vsel %vm137, %v95, 0
    %v154 = vsel %vm137, %v96, 0
    %v157 = vsel %vm137, %v97, 0
    %v160 = vsel %vm137, %v98, 0
    %v163 = vsel %vm137, %v99, 0
    %v166 = vsel %vm137, %v100, 0
    %v169 = vsel %vm137, %v101, 0
    %v172 = vsel %vm137, %v102, 0
    %v175 = vsel %vm137, %v103, 0
    %v178 = vsel %vm137, %v104, 0
    %v181 = vsel %vm137, %v105, 0
    %v184 = vsel %vm137, %v106, 0
    %vm186 = vcmask 1041408
    %vm187 = vcmask 1042432
    %v188 = vsel %vm186, 4294967295, 65535
    %v189 = vsel %vm187, %v188, 0
    %v191 = vand.u32 %v111, %v189
    %v194 = vand.u32 %v112, %v189
    %v197 = vand.u32 %v113, %v189
    %v200 = vand.u32 %v114, %v189
    %202 = vmatprep.subr.bf16.mxu0 0
    %203 = vmatpush1.bf16.msra.mxu0 0
    %204 = vmatprep.subr.bf16.mxu0 0
    %205 = vmatpush1.bf16.msra.mxu0 0
    %206 = vmatprep.subr.bf16.mxu0 0
    %207 = vmatpush1.bf16.msra.mxu0 0
    %208 = vmatprep.subr.bf16.mxu0 0
    %209 = vmatpush1.bf16.msra.mxu0 0
    %210 = vmatprep.subr.bf16.mxu0 0
    %211 = vmatpush1.bf16.msra.mxu0 0
    %212 = vmatprep.subr.bf16.mxu0 0
    %213 = vmatpush1.bf16.msra.mxu0 0
    %214 = vmatprep.subr.bf16.mxu0 0
    %215 = vmatpush1.bf16.msra.mxu0 0
    %216 = vmatprep.subr.bf16.mxu0 %v194
    %217 = vmatpush1.bf16.msra.mxu0 %v191
    %218 = vmatprep.subr.bf16.mxu0 0
    %219 = vmatpush2.bf16.msra.mxu0 0
    %220 = vmatprep.subr.bf16.mxu0 0
    %221 = vmatpush2.bf16.msra.mxu0 0
    %222 = vmatprep.subr.bf16.mxu0 0
    %223 = vmatpush2.bf16.msra.mxu0 0
    %224 = vmatprep.subr.bf16.mxu0 0
    %225 = vmatpush2.bf16.msra.mxu0 0
    %226 = vmatprep.subr.bf16.mxu0 0
    %227 = vmatpush2.bf16.msra.mxu0 0
    %228 = vmatprep.subr.bf16.mxu0 0
    %229 = vmatpush2.bf16.msra.mxu0 0
    %230 = vmatprep.subr.bf16.mxu0 0
    %231 = vmatpush2.bf16.msra.mxu0 0
    %232 = vmatprep.subr.bf16.mxu0 0
    %233 = vmatpush2.bf16.msra.mxu0 0
    %234 = vmatprep.mubr.bf16.mxu0 0
    %235 = vmatmul.mubr.bf16.gmra.mxu0 %v139
    %v236 = vpop.f32.mrf.mxu0
    %v237 = vadd.f32 %v120, %v236
    %v238 = vpop.f32.mrf.mxu0
    %v239 = vadd.f32 %v124, %v238
    %v240 = vpop.f32.mrf.mxu0
    %v241 = vadd.f32 %v120, %v240
    %v242 = vpop.f32.mrf.mxu0
    %v243 = vadd.f32 %v124, %v242
    %244 = vmatprep.mubr.bf16.mxu0 0
    %245 = vmatmul.mubr.bf16.gmra.mxu0 %v142
    %v246 = vpop.f32.mrf.mxu0
    %v247 = vadd.f32 %v120, %v246
    %v248 = vpop.f32.mrf.mxu0
    %v249 = vadd.f32 %v124, %v248
    %v250 = vpop.f32.mrf.mxu0
    %v251 = vadd.f32 %v120, %v250
    %v252 = vpop.f32.mrf.mxu0
    %v253 = vadd.f32 %v124, %v252
    %254 = vmatprep.mubr.bf16.mxu0 0
    %255 = vmatmul.mubr.bf16.gmra.mxu0 %v145
    %v256 = vpop.f32.mrf.mxu0
    %v257 = vadd.f32 %v120, %v256
    %v258 = vpop.f32.mrf.mxu0
    %v259 = vadd.f32 %v124, %v258
    %v260 = vpop.f32.mrf.mxu0
    %v261 = vadd.f32 %v120, %v260
    %v262 = vpop.f32.mrf.mxu0
    %v263 = vadd.f32 %v124, %v262
    %264 = vmatprep.mubr.bf16.mxu0 0
    %265 = vmatmul.mubr.bf16.gmra.mxu0 %v148
    %v266 = vpop.f32.mrf.mxu0
    %v267 = vadd.f32 %v120, %v266
    %v268 = vpop.f32.mrf.mxu0
    %v269 = vadd.f32 %v124, %v268
    %v270 = vpop.f32.mrf.mxu0
    %v271 = vadd.f32 %v120, %v270
    %v272 = vpop.f32.mrf.mxu0
    %v273 = vadd.f32 %v124, %v272
    %274 = vmatprep.mubr.bf16.mxu0 0
    %275 = vmatmul.mubr.bf16.gmra.mxu0 %v151
    %v276 = vpop.f32.mrf.mxu0
    %v277 = vadd.f32 %v120, %v276
    %v278 = vpop.f32.mrf.mxu0
    %v279 = vadd.f32 %v124, %v278
    %v280 = vpop.f32.mrf.mxu0
    %v281 = vadd.f32 %v120, %v280
    %v282 = vpop.f32.mrf.mxu0
    %v283 = vadd.f32 %v124, %v282
    %284 = vmatprep.mubr.bf16.mxu0 0
    %285 = vmatmul.mubr.bf16.gmra.mxu0 %v154
    %v286 = vpop.f32.mrf.mxu0
    %v287 = vadd.f32 %v120, %v286
    %v288 = vpop.f32.mrf.mxu0
    %v289 = vadd.f32 %v124, %v288
    %v290 = vpop.f32.mrf.mxu0
    %v291 = vadd.f32 %v120, %v290
    %v292 = vpop.f32.mrf.mxu0
    %v293 = vadd.f32 %v124, %v292
    %294 = vmatprep.mubr.bf16.mxu0 0
    %295 = vmatmul.mubr.bf16.gmra.mxu0 %v157
    %v296 = vpop.f32.mrf.mxu0
    %v297 = vadd.f32 %v120, %v296
    %v298 = vpop.f32.mrf.mxu0
    %v299 = vadd.f32 %v124, %v298
    %v300 = vpop.f32.mrf.mxu0
    %v301 = vadd.f32 %v120, %v300
    %v302 = vpop.f32.mrf.mxu0
    %v303 = vadd.f32 %v124, %v302
    %304 = vmatprep.mubr.bf16.mxu0 0
    %305 = vmatmul.mubr.bf16.gmra.mxu0 %v160
    %v306 = vpop.f32.mrf.mxu0
    %v307 = vadd.f32 %v120, %v306
    %v308 = vpop.f32.mrf.mxu0
    %v309 = vadd.f32 %v124, %v308
    %v310 = vpop.f32.mrf.mxu0
    %v311 = vadd.f32 %v120, %v310
    %v312 = vpop.f32.mrf.mxu0
    %v313 = vadd.f32 %v124, %v312
    %314 = vmatprep.mubr.bf16.mxu0 0
    %315 = vmatmul.mubr.bf16.gmra.mxu0 %v163
    %v316 = vpop.f32.mrf.mxu0
    %v317 = vadd.f32 %v120, %v316
    %v318 = vpop.f32.mrf.mxu0
    %v319 = vadd.f32 %v124, %v318
    %v320 = vpop.f32.mrf.mxu0
    %v321 = vadd.f32 %v120, %v320
    %v322 = vpop.f32.mrf.mxu0
    %v323 = vadd.f32 %v124, %v322
    %324 = vmatprep.mubr.bf16.mxu0 0
    %325 = vmatmul.mubr.bf16.gmra.mxu0 %v166
    %v326 = vpop.f32.mrf.mxu0
    %v327 = vadd.f32 %v120, %v326
    %v328 = vpop.f32.mrf.mxu0
    %v329 = vadd.f32 %v124, %v328
    %v330 = vpop.f32.mrf.mxu0
    %v331 = vadd.f32 %v120, %v330
    %v332 = vpop.f32.mrf.mxu0
    %v333 = vadd.f32 %v124, %v332
    %334 = vmatprep.mubr.bf16.mxu0 0
    %335 = vmatmul.mubr.bf16.gmra.mxu0 %v169
    %v336 = vpop.f32.mrf.mxu0
    %v337 = vadd.f32 %v120, %v336
    %v338 = vpop.f32.mrf.mxu0
    %v339 = vadd.f32 %v124, %v338
    %v340 = vpop.f32.mrf.mxu0
    %v341 = vadd.f32 %v120, %v340
    %v342 = vpop.f32.mrf.mxu0
    %v343 = vadd.f32 %v124, %v342
    %344 = vmatprep.mubr.bf16.mxu0 0
    %345 = vmatmul.mubr.bf16.gmra.mxu0 %v172
    %v346 = vpop.f32.mrf.mxu0
    %v347 = vadd.f32 %v120, %v346
    %v348 = vpop.f32.mrf.mxu0
    %v349 = vadd.f32 %v124, %v348
    %v350 = vpop.f32.mrf.mxu0
    %v351 = vadd.f32 %v120, %v350
    %v352 = vpop.f32.mrf.mxu0
    %v353 = vadd.f32 %v124, %v352
    %354 = vmatprep.mubr.bf16.mxu0 0
    %355 = vmatmul.mubr.bf16.gmra.mxu0 %v175
    %v356 = vpop.f32.mrf.mxu0
    %v357 = vadd.f32 %v120, %v356
    %v358 = vpop.f32.mrf.mxu0
    %v359 = vadd.f32 %v124, %v358
    %v360 = vpop.f32.mrf.mxu0
    %v361 = vadd.f32 %v120, %v360
    %v362 = vpop.f32.mrf.mxu0
    %v363 = vadd.f32 %v124, %v362
    %364 = vmatprep.mubr.bf16.mxu0 0
    %365 = vmatmul.mubr.bf16.gmra.mxu0 %v178
    %v366 = vpop.f32.mrf.mxu0
    %v367 = vadd.f32 %v120, %v366
    %v368 = vpop.f32.mrf.mxu0
    %v369 = vadd.f32 %v124, %v368
    %v370 = vpop.f32.mrf.mxu0
    %v371 = vadd.f32 %v120, %v370
    %v372 = vpop.f32.mrf.mxu0
    %v373 = vadd.f32 %v124, %v372
    %374 = vmatprep.mubr.bf16.mxu0 0
    %375 = vmatmul.mubr.bf16.gmra.mxu0 %v181
    %v376 = vpop.f32.mrf.mxu0
    %v377 = vadd.f32 %v120, %v376
    %v378 = vpop.f32.mrf.mxu0
    %v379 = vadd.f32 %v124, %v378
    %v380 = vpop.f32.mrf.mxu0
    %v381 = vadd.f32 %v120, %v380
    %v382 = vpop.f32.mrf.mxu0
    %v383 = vadd.f32 %v124, %v382
    %384 = vmatprep.mubr.bf16.mxu0 0
    %385 = vmatmul.mubr.bf16.gmra.mxu0 %v184
    %v386 = vpop.f32.mrf.mxu0
    %v387 = vadd.f32 %v120, %v386
    %v388 = vpop.f32.mrf.mxu0
    %v389 = vadd.f32 %v124, %v388
    %v390 = vpop.f32.mrf.mxu0
    %v391 = vadd.f32 %v120, %v390
    %v392 = vpop.f32.mrf.mxu0
    %v393 = vadd.f32 %v124, %v392
    %394 = vdwg.mxu0
    %395 = vmatprep.subr.bf16.mxu0 0
    %396 = vmatpush1.bf16.msra.mxu0 0
    %397 = vmatprep.subr.bf16.mxu0 0
    %398 = vmatpush1.bf16.msra.mxu0 0
    %399 = vmatprep.subr.bf16.mxu0 0
    %400 = vmatpush1.bf16.msra.mxu0 0
    %401 = vmatprep.subr.bf16.mxu0 0
    %402 = vmatpush1.bf16.msra.mxu0 0
    %403 = vmatprep.subr.bf16.mxu0 0
    %404 = vmatpush1.bf16.msra.mxu0 0
    %405 = vmatprep.subr.bf16.mxu0 0
    %406 = vmatpush1.bf16.msra.mxu0 0
    %407 = vmatprep.subr.bf16.mxu0 0
    %408 = vmatpush1.bf16.msra.mxu0 0
    %409 = vmatprep.subr.bf16.mxu0 %v200
    %410 = vmatpush1.bf16.msra.mxu0 %v197
    %411 = vmatprep.subr.bf16.mxu0 0
    %412 = vmatpush2.bf16.msra.mxu0 0
    %413 = vmatprep.subr.bf16.mxu0 0
    %414 = vmatpush2.bf16.msra.mxu0 0
    %415 = vmatprep.subr.bf16.mxu0 0
    %416 = vmatpush2.bf16.msra.mxu0 0
    %417 = vmatprep.subr.bf16.mxu0 0
    %418 = vmatpush2.bf16.msra.mxu0 0
    %419 = vmatprep.subr.bf16.mxu0 0
    %420 = vmatpush2.bf16.msra.mxu0 0
    %421 = vmatprep.subr.bf16.mxu0 0
    %422 = vmatpush2.bf16.msra.mxu0 0
    %423 = vmatprep.subr.bf16.mxu0 0
    %424 = vmatpush2.bf16.msra.mxu0 0
    %425 = vmatprep.subr.bf16.mxu0 0
    %426 = vmatpush2.bf16.msra.mxu0 0
    %427 = vmatprep.mubr.bf16.mxu0 0
    %428 = vmatmul.mubr.bf16.gmra.mxu0 %v139
    %v429 = vpop.f32.mrf.mxu0
    %v430 = vadd.f32 %v128, %v429
    %v431 = vpop.f32.mrf.mxu0
    %v432 = vadd.f32 %v132, %v431
    %v433 = vpop.f32.mrf.mxu0
    %v434 = vadd.f32 %v128, %v433
    %v435 = vpop.f32.mrf.mxu0
    %v436 = vadd.f32 %v132, %v435
    %437 = vmatprep.mubr.bf16.mxu0 0
    %438 = vmatmul.mubr.bf16.gmra.mxu0 %v142
    %v439 = vpop.f32.mrf.mxu0
    %v440 = vadd.f32 %v128, %v439
    %v441 = vpop.f32.mrf.mxu0
    %v442 = vadd.f32 %v132, %v441
    %v443 = vpop.f32.mrf.mxu0
    %v444 = vadd.f32 %v128, %v443
    %v445 = vpop.f32.mrf.mxu0
    %v446 = vadd.f32 %v132, %v445
    %447 = vmatprep.mubr.bf16.mxu0 0
    %448 = vmatmul.mubr.bf16.gmra.mxu0 %v145
    %v449 = vpop.f32.mrf.mxu0
    %v450 = vadd.f32 %v128, %v449
    %v451 = vpop.f32.mrf.mxu0
    %v452 = vadd.f32 %v132, %v451
    %v453 = vpop.f32.mrf.mxu0
    %v454 = vadd.f32 %v128, %v453
    %v455 = vpop.f32.mrf.mxu0
    %v456 = vadd.f32 %v132, %v455
    %457 = vmatprep.mubr.bf16.mxu0 0
    %458 = vmatmul.mubr.bf16.gmra.mxu0 %v148
    %v459 = vpop.f32.mrf.mxu0
    %v460 = vadd.f32 %v128, %v459
    %v461 = vpop.f32.mrf.mxu0
    %v462 = vadd.f32 %v132, %v461
    %v463 = vpop.f32.mrf.mxu0
    %v464 = vadd.f32 %v128, %v463
    %v465 = vpop.f32.mrf.mxu0
    %v466 = vadd.f32 %v132, %v465
    %467 = vmatprep.mubr.bf16.mxu0 0
    %468 = vmatmul.mubr.bf16.gmra.mxu0 %v151
    %v469 = vpop.f32.mrf.mxu0
    %v470 = vadd.f32 %v128, %v469
    %v471 = vpop.f32.mrf.mxu0
    %v472 = vadd.f32 %v132, %v471
    %v473 = vpop.f32.mrf.mxu0
    %v474 = vadd.f32 %v128, %v473
    %v475 = vpop.f32.mrf.mxu0
    %v476 = vadd.f32 %v132, %v475
    %477 = vmatprep.mubr.bf16.mxu0 0
    %478 = vmatmul.mubr.bf16.gmra.mxu0 %v154
    %v479 = vpop.f32.mrf.mxu0
    %v480 = vadd.f32 %v128, %v479
    %v481 = vpop.f32.mrf.mxu0
    %v482 = vadd.f32 %v132, %v481
    %v483 = vpop.f32.mrf.mxu0
    %v484 = vadd.f32 %v128, %v483
    %v485 = vpop.f32.mrf.mxu0
    %v486 = vadd.f32 %v132, %v485
    %487 = vmatprep.mubr.bf16.mxu0 0
    %488 = vmatmul.mubr.bf16.gmra.mxu0 %v157
    %v489 = vpop.f32.mrf.mxu0
    %v490 = vadd.f32 %v128, %v489
    %v491 = vpop.f32.mrf.mxu0
    %v492 = vadd.f32 %v132, %v491
    %v493 = vpop.f32.mrf.mxu0
    %v494 = vadd.f32 %v128, %v493
    %v495 = vpop.f32.mrf.mxu0
    %v496 = vadd.f32 %v132, %v495
    %497 = vmatprep.mubr.bf16.mxu0 0
    %498 = vmatmul.mubr.bf16.gmra.mxu0 %v160
    %v499 = vpop.f32.mrf.mxu0
    %v500 = vadd.f32 %v128, %v499
    %v501 = vpop.f32.mrf.mxu0
    %v502 = vadd.f32 %v132, %v501
    %v503 = vpop.f32.mrf.mxu0
    %v504 = vadd.f32 %v128, %v503
    %v505 = vpop.f32.mrf.mxu0
    %v506 = vadd.f32 %v132, %v505
    %507 = vmatprep.mubr.bf16.mxu0 0
    %508 = vmatmul.mubr.bf16.gmra.mxu0 %v163
    %v509 = vpop.f32.mrf.mxu0
    %v510 = vadd.f32 %v128, %v509
    %v511 = vpop.f32.mrf.mxu0
    %v512 = vadd.f32 %v132, %v511
    %v513 = vpop.f32.mrf.mxu0
    %v514 = vadd.f32 %v128, %v513
    %v515 = vpop.f32.mrf.mxu0
    %v516 = vadd.f32 %v132, %v515
    %517 = vmatprep.mubr.bf16.mxu0 0
    %518 = vmatmul.mubr.bf16.gmra.mxu0 %v166
    %v519 = vpop.f32.mrf.mxu0
    %v520 = vadd.f32 %v128, %v519
    %v521 = vpop.f32.mrf.mxu0
    %v522 = vadd.f32 %v132, %v521
    %v523 = vpop.f32.mrf.mxu0
    %v524 = vadd.f32 %v128, %v523
    %v525 = vpop.f32.mrf.mxu0
    %v526 = vadd.f32 %v132, %v525
    %527 = vmatprep.mubr.bf16.mxu0 0
    %528 = vmatmul.mubr.bf16.gmra.mxu0 %v169
    %v529 = vpop.f32.mrf.mxu0
    %v530 = vadd.f32 %v128, %v529
    %v531 = vpop.f32.mrf.mxu0
    %v532 = vadd.f32 %v132, %v531
    %v533 = vpop.f32.mrf.mxu0
    %v534 = vadd.f32 %v128, %v533
    %v535 = vpop.f32.mrf.mxu0
    %v536 = vadd.f32 %v132, %v535
    %537 = vmatprep.mubr.bf16.mxu0 0
    %538 = vmatmul.mubr.bf16.gmra.mxu0 %v172
    %v539 = vpop.f32.mrf.mxu0
    %v540 = vadd.f32 %v128, %v539
    %v541 = vpop.f32.mrf.mxu0
    %v542 = vadd.f32 %v132, %v541
    %v543 = vpop.f32.mrf.mxu0
    %v544 = vadd.f32 %v128, %v543
    %v545 = vpop.f32.mrf.mxu0
    %v546 = vadd.f32 %v132, %v545
    %547 = vmatprep.mubr.bf16.mxu0 0
    %548 = vmatmul.mubr.bf16.gmra.mxu0 %v175
    %v549 = vpop.f32.mrf.mxu0
    %v550 = vadd.f32 %v128, %v549
    %v551 = vpop.f32.mrf.mxu0
    %v552 = vadd.f32 %v132, %v551
    %v553 = vpop.f32.mrf.mxu0
    %v554 = vadd.f32 %v128, %v553
    %v555 = vpop.f32.mrf.mxu0
    %v556 = vadd.f32 %v132, %v555
    %557 = vmatprep.mubr.bf16.mxu0 0
    %558 = vmatmul.mubr.bf16.gmra.mxu0 %v178
    %v559 = vpop.f32.mrf.mxu0
    %v560 = vadd.f32 %v128, %v559
    %v561 = vpop.f32.mrf.mxu0
    %v562 = vadd.f32 %v132, %v561
    %v563 = vpop.f32.mrf.mxu0
    %v564 = vadd.f32 %v128, %v563
    %v565 = vpop.f32.mrf.mxu0
    %v566 = vadd.f32 %v132, %v565
    %567 = vmatprep.mubr.bf16.mxu0 0
    %568 = vmatmul.mubr.bf16.gmra.mxu0 %v181
    %v569 = vpop.f32.mrf.mxu0
    %v570 = vadd.f32 %v128, %v569
    %v571 = vpop.f32.mrf.mxu0
    %v572 = vadd.f32 %v132, %v571
    %v573 = vpop.f32.mrf.mxu0
    %v574 = vadd.f32 %v128, %v573
    %v575 = vpop.f32.mrf.mxu0
    %v576 = vadd.f32 %v132, %v575
    %577 = vmatprep.mubr.bf16.mxu0 0
    %578 = vmatmul.mubr.bf16.gmra.mxu0 %v184
    %v579 = vpop.f32.mrf.mxu0
    %v580 = vadd.f32 %v128, %v579
    %v581 = vpop.f32.mrf.mxu0
    %v582 = vadd.f32 %v132, %v581
    %v583 = vpop.f32.mrf.mxu0
    %v584 = vadd.f32 %v128, %v583
    %v585 = vpop.f32.mrf.mxu0
    %v586 = vadd.f32 %v132, %v585
    %587 = vdwg.mxu0
    %v588 = vmax.f32 %v237, 0.0
    %v589 = vmax.f32 %v239, 0.0
    %v590 = vmax.f32 %v430, 0.0
    %v591 = vmax.f32 %v432, 0.0
    %v592 = vmax.f32 %v241, 0.0
    %v593 = vmax.f32 %v243, 0.0
    %v594 = vmax.f32 %v434, 0.0
    %v595 = vmax.f32 %v436, 0.0
    %v596 = vmax.f32 %v247, 0.0
    %v597 = vmax.f32 %v249, 0.0
    %v598 = vmax.f32 %v440, 0.0
    %v599 = vmax.f32 %v442, 0.0
    %v600 = vmax.f32 %v251, 0.0
    %v601 = vmax.f32 %v253, 0.0
    %v602 = vmax.f32 %v444, 0.0
    %v603 = vmax.f32 %v446, 0.0
    %v604 = vmax.f32 %v257, 0.0
    %v605 = vmax.f32 %v259, 0.0
    %v606 = vmax.f32 %v450, 0.0
    %v607 = vmax.f32 %v452, 0.0
    %v608 = vmax.f32 %v261, 0.0
    %v609 = vmax.f32 %v263, 0.0
    %v610 = vmax.f32 %v454, 0.0
    %v611 = vmax.f32 %v456, 0.0
    %v612 = vmax.f32 %v267, 0.0
    %v613 = vmax.f32 %v269, 0.0
    %v614 = vmax.f32 %v460, 0.0
    %v615 = vmax.f32 %v462, 0.0
    %v616 = vmax.f32 %v271, 0.0
    %v617 = vmax.f32 %v273, 0.0
    %v618 = vmax.f32 %v464, 0.0
    %v619 = vmax.f32 %v466, 0.0
    %v620 = vmax.f32 %v277, 0.0
    %v621 = vmax.f32 %v279, 0.0
    %v622 = vmax.f32 %v470, 0.0
    %v623 = vmax.f32 %v472, 0.0
    %v624 = vmax.f32 %v281, 0.0
    %v625 = vmax.f32 %v283, 0.0
    %v626 = vmax.f32 %v474, 0.0
    %v627 = vmax.f32 %v476, 0.0
    %v628 = vmax.f32 %v287, 0.0
    %v629 = vmax.f32 %v289, 0.0
    %v630 = vmax.f32 %v480, 0.0
    %v631 = vmax.f32 %v482, 0.0
    %v632 = vmax.f32 %v291, 0.0
    %v633 = vmax.f32 %v293, 0.0
    %v634 = vmax.f32 %v484, 0.0
    %v635 = vmax.f32 %v486, 0.0
    %v636 = vmax.f32 %v297, 0.0
    %v637 = vmax.f32 %v299, 0.0
    %v638 = vmax.f32 %v490, 0.0
    %v639 = vmax.f32 %v492, 0.0
    %v640 = vmax.f32 %v301, 0.0
    %v641 = vmax.f32 %v303, 0.0
    %v642 = vmax.f32 %v494, 0.0
    %v643 = vmax.f32 %v496, 0.0
    %v644 = vmax.f32 %v307, 0.0
    %v645 = vmax.f32 %v309, 0.0
    %v646 = vmax.f32 %v500, 0.0
    %v647 = vmax.f32 %v502, 0.0
    %v648 = vmax.f32 %v311, 0.0
    %v649 = vmax.f32 %v313, 0.0
    %v650 = vmax.f32 %v504, 0.0
    %v651 = vmax.f32 %v506, 0.0
    %v652 = vmax.f32 %v317, 0.0
    %v653 = vmax.f32 %v319, 0.0
    %v654 = vmax.f32 %v510, 0.0
    %v655 = vmax.f32 %v512, 0.0
    %v656 = vmax.f32 %v321, 0.0
    %v657 = vmax.f32 %v323, 0.0
    %v658 = vmax.f32 %v514, 0.0
    %v659 = vmax.f32 %v516, 0.0
    %v660 = vmax.f32 %v327, 0.0
    %v661 = vmax.f32 %v329, 0.0
    %v662 = vmax.f32 %v520, 0.0
    %v663 = vmax.f32 %v522, 0.0
    %v664 = vmax.f32 %v331, 0.0
    %v665 = vmax.f32 %v333, 0.0
    %v666 = vmax.f32 %v524, 0.0
    %v667 = vmax.f32 %v526, 0.0
    %v668 = vmax.f32 %v337, 0.0
    %v669 = vmax.f32 %v339, 0.0
    %v670 = vmax.f32 %v530, 0.0
    %v671 = vmax.f32 %v532, 0.0
    %v672 = vmax.f32 %v341, 0.0
    %v673 = vmax.f32 %v343, 0.0
    %v674 = vmax.f32 %v534, 0.0
    %v675 = vmax.f32 %v536, 0.0
    %v676 = vmax.f32 %v347, 0.0
    %v677 = vmax.f32 %v349, 0.0
    %v678 = vmax.f32 %v540, 0.0
    %v679 = vmax.f32 %v542, 0.0
    %v680 = vmax.f32 %v351, 0.0
    %v681 = vmax.f32 %v353, 0.0
    %v682 = vmax.f32 %v544, 0.0
    %v683 = vmax.f32 %v546, 0.0
    %v684 = vmax.f32 %v357, 0.0
    %v685 = vmax.f32 %v359, 0.0
    %v686 = vmax.f32 %v550, 0.0
    %v687 = vmax.f32 %v552, 0.0
    %v688 = vmax.f32 %v361, 0.0
    %v689 = vmax.f32 %v363, 0.0
    %v690 = vmax.f32 %v554, 0.0
    %v691 = vmax.f32 %v556, 0.0
    %v692 = vmax.f32 %v367, 0.0
    %v693 = vmax.f32 %v369, 0.0
    %v694 = vmax.f32 %v560, 0.0
    %v695 = vmax.f32 %v562, 0.0
    %v696 = vmax.f32 %v371, 0.0
    %v697 = vmax.f32 %v373, 0.0
    %v698 = vmax.f32 %v564, 0.0
    %v699 = vmax.f32 %v566, 0.0
    %v700 = vmax.f32 %v377, 0.0
    %v701 = vmax.f32 %v379, 0.0
    %v702 = vmax.f32 %v570, 0.0
    %v703 = vmax.f32 %v572, 0.0
    %v704 = vmax.f32 %v381, 0.0
    %v705 = vmax.f32 %v383, 0.0
    %v706 = vmax.f32 %v574, 0.0
    %v707 = vmax.f32 %v576, 0.0
    %v708 = vmax.f32 %v387, 0.0
    %v709 = vmax.f32 %v389, 0.0
    %v710 = vmax.f32 %v580, 0.0
    %v711 = vmax.f32 %v582, 0.0
    %v712 = vmax.f32 %v391, 0.0
    %v713 = vmax.f32 %v393, 0.0
    %v714 = vmax.f32 %v584, 0.0
    %v715 = vmax.f32 %v586, 0.0
    %v716 = vpack.c.bf16 %v592, %v588
    %v717 = vpack.c.bf16 %v593, %v589
    %v718 = vpack.c.bf16 %v594, %v590
    %v719 = vpack.c.bf16 %v595, %v591
    %v720 = vpack.c.bf16 %v600, %v596
    %v721 = vpack.c.bf16 %v601, %v597
    %v722 = vpack.c.bf16 %v602, %v598
    %v723 = vpack.c.bf16 %v603, %v599
    %v724 = vpack.c.bf16 %v608, %v604
    %v725 = vpack.c.bf16 %v609, %v605
    %v726 = vpack.c.bf16 %v610, %v606
    %v727 = vpack.c.bf16 %v611, %v607
    %v728 = vpack.c.bf16 %v616, %v612
    %v729 = vpack.c.bf16 %v617, %v613
    %v730 = vpack.c.bf16 %v618, %v614
    %v731 = vpack.c.bf16 %v619, %v615
    %v732 = vpack.c.bf16 %v624, %v620
    %v733 = vpack.c.bf16 %v625, %v621
    %v734 = vpack.c.bf16 %v626, %v622
    %v735 = vpack.c.bf16 %v627, %v623
    %v736 = vpack.c.bf16 %v632, %v628
    %v737 = vpack.c.bf16 %v633, %v629
    %v738 = vpack.c.bf16 %v634, %v630
    %v739 = vpack.c.bf16 %v635, %v631
    %v740 = vpack.c.bf16 %v640, %v636
    %v741 = vpack.c.bf16 %v641, %v637
    %v742 = vpack.c.bf16 %v642, %v638
    %v743 = vpack.c.bf16 %v643, %v639
    %v744 = vpack.c.bf16 %v648, %v644
    %v745 = vpack.c.bf16 %v649, %v645
    %v746 = vpack.c.bf16 %v650, %v646
    %v747 = vpack.c.bf16 %v651, %v647
    %v748 = vpack.c.bf16 %v656, %v652
    %v749 = vpack.c.bf16 %v657, %v653
    %v750 = vpack.c.bf16 %v658, %v654
    %v751 = vpack.c.bf16 %v659, %v655
    %v752 = vpack.c.bf16 %v664, %v660
    %v753 = vpack.c.bf16 %v665, %v661
    %v754 = vpack.c.bf16 %v666, %v662
    %v755 = vpack.c.bf16 %v667, %v663
    %v756 = vpack.c.bf16 %v672, %v668
    %v757 = vpack.c.bf16 %v673, %v669
    %v758 = vpack.c.bf16 %v674, %v670
    %v759 = vpack.c.bf16 %v675, %v671
    %v760 = vpack.c.bf16 %v680, %v676
    %v761 = vpack.c.bf16 %v681, %v677
    %v762 = vpack.c.bf16 %v682, %v678
    %v763 = vpack.c.bf16 %v683, %v679
    %v764 = vpack.c.bf16 %v688, %v684
    %v765 = vpack.c.bf16 %v689, %v685
    %v766 = vpack.c.bf16 %v690, %v686
    %v767 = vpack.c.bf16 %v691, %v687
    %v768 = vpack.c.bf16 %v696, %v692
    %v769 = vpack.c.bf16 %v697, %v693
    %v770 = vpack.c.bf16 %v698, %v694
    %v771 = vpack.c.bf16 %v699, %v695
    %v772 = vpack.c.bf16 %v704, %v700
    %v773 = vpack.c.bf16 %v705, %v701
    %v774 = vpack.c.bf16 %v706, %v702
    %v775 = vpack.c.bf16 %v707, %v703
    %v776 = vpack.c.bf16 %v712, %v708
    %v777 = vpack.c.bf16 %v713, %v709
    %v778 = vpack.c.bf16 %v714, %v710
    %v779 = vpack.c.bf16 %v715, %v711
    %v780 = vld [vmem:[%s3] sm:$0xff]
    %v781 = vld [vmem:[%s3 + $0x8] sm:$0xff]
    %v782 = vld [vmem:[%s3 + $0x10] sm:$0xff]
    %v783 = vld [vmem:[%s3 + $0x18] sm:$0xff]
    %v784 = vld [vmem:[%s3 + $0x20] sm:$0xff]
    %v785 = vld [vmem:[%s3 + $0x28] sm:$0xff]
    %v786 = vld [vmem:[%s3 + $0x30] sm:$0xff]
    %v787 = vld [vmem:[%s3 + $0x38] sm:$0xff]
    %v788 = vld [vmem:[%s3 + $0x40] sm:$0xff]
    %v789 = vld [vmem:[%s3 + $0x48] sm:$0xff]
    %v790 = vld [vmem:[%s3 + $0x50] sm:$0xff]
    %v791 = vld [vmem:[%s3 + $0x58] sm:$0xff]
    %v792 = vld [vmem:[%s3 + $0x60] sm:$0xff]
    %v793 = vld [vmem:[%s3 + $0x68] sm:$0xff]
    %v794 = vld [vmem:[%s3 + $0x70] sm:$0xff]
    %v795 = vld [vmem:[%s3 + $0x78] sm:$0xff]
    %v796 = vld [vmem:[%s3 + $0x80] sm:$0xff]
    %v797 = vld [vmem:[%s3 + $0x88] sm:$0xff]
    %v798 = vld [vmem:[%s3 + $0x90] sm:$0xff]
    %v799 = vld [vmem:[%s3 + $0x98] sm:$0xff]
    %v800 = vld [vmem:[%s3 + $0xa0] sm:$0xff]
    %v801 = vld [vmem:[%s3 + $0xa8] sm:$0xff]
    %v802 = vld [vmem:[%s3 + $0xb0] sm:$0xff]
    %v803 = vld [vmem:[%s3 + $0xb8] sm:$0xff]
    %v804 = vld [vmem:[%s3 + $0xc0] sm:$0xff]
    %v805 = vld [vmem:[%s3 + $0xc8] sm:$0xff]
    %v806 = vld [vmem:[%s3 + $0xd0] sm:$0xff]
    %v807 = vld [vmem:[%s3 + $0xd8] sm:$0xff]
    %v808 = vld [vmem:[%s3 + $0xe0] sm:$0xff]
    %v809 = vld [vmem:[%s3 + $0xe8] sm:$0xff]
    %v810 = vld [vmem:[%s3 + $0xf0] sm:$0xff]
    %v811 = vld [vmem:[%s3 + $0xf8] sm:$0xff]
    %v812 = vld [vmem:[%s3 + $0x100] sm:$0xff]
    %v813 = vld [vmem:[%s3 + $0x108] sm:$0xff]
    %v814 = vld [vmem:[%s3 + $0x110] sm:$0xff]
    %v815 = vld [vmem:[%s3 + $0x118] sm:$0xff]
    %v816 = vld [vmem:[%s3 + $0x120] sm:$0xff]
    %v817 = vld [vmem:[%s3 + $0x128] sm:$0xff]
    %v818 = vld [vmem:[%s3 + $0x130] sm:$0xff]
    %v819 = vld [vmem:[%s3 + $0x138] sm:$0xff]
    %v820 = vld [vmem:[%s3 + $0x140] sm:$0xff]
    %v821 = vld [vmem:[%s3 + $0x148] sm:$0xff]
    %v822 = vld [vmem:[%s3 + $0x150] sm:$0xff]
    %v823 = vld [vmem:[%s3 + $0x158] sm:$0xff]
    %v824 = vld [vmem:[%s3 + $0x160] sm:$0xff]
    %v825 = vld [vmem:[%s3 + $0x168] sm:$0xff]
    %v826 = vld [vmem:[%s3 + $0x170] sm:$0xff]
    %v827 = vld [vmem:[%s3 + $0x178] sm:$0xff]
    %v828 = vld [vmem:[%s3 + $0x180] sm:$0xff]
    %v829 = vld [vmem:[%s3 + $0x188] sm:$0xff]
    %v830 = vld [vmem:[%s3 + $0x190] sm:$0xff]
    %v831 = vld [vmem:[%s3 + $0x198] sm:$0xff]
    %v832 = vld [vmem:[%s3 + $0x1a0] sm:$0xff]
    %v833 = vld [vmem:[%s3 + $0x1a8] sm:$0xff]
    %v834 = vld [vmem:[%s3 + $0x1b0] sm:$0xff]
    %v835 = vld [vmem:[%s3 + $0x1b8] sm:$0xff]
    %v836 = vld [vmem:[%s3 + $0x1c0] sm:$0xff]
    %v837 = vld [vmem:[%s3 + $0x1c8] sm:$0xff]
    %v838 = vld [vmem:[%s3 + $0x1d0] sm:$0xff]
    %v839 = vld [vmem:[%s3 + $0x1d8] sm:$0xff]
    %v840 = vld [vmem:[%s3 + $0x1e0] sm:$0xff]
    %v841 = vld [vmem:[%s3 + $0x1e8] sm:$0xff]
    %v842 = vld [vmem:[%s3 + $0x1f0] sm:$0xff]
    %v843 = vld [vmem:[%s3 + $0x1f8] sm:$0xff]
    %v844 = vld [vmem:[%s3 + $0x200] sm:$0xff]
    %v845 = vld [vmem:[%s3 + $0x208] sm:$0xff]
    %v846 = vld [vmem:[%s3 + $0x210] sm:$0xff]
    %v847 = vld [vmem:[%s3 + $0x218] sm:$0xff]
    %v848 = vld [vmem:[%s3 + $0x220] sm:$0xff]
    %v849 = vld [vmem:[%s3 + $0x228] sm:$0xff]
    %v850 = vld [vmem:[%s3 + $0x230] sm:$0xff]
    %v851 = vld [vmem:[%s3 + $0x238] sm:$0xff]
    %v852 = vld [vmem:[%s3 + $0x240] sm:$0xff]
    %v853 = vld [vmem:[%s3 + $0x248] sm:$0xff]
    %v854 = vld [vmem:[%s3 + $0x250] sm:$0xff]
    %v855 = vld [vmem:[%s3 + $0x258] sm:$0xff]
    %v856 = vld [vmem:[%s3 + $0x260] sm:$0xff]
    %v857 = vld [vmem:[%s3 + $0x268] sm:$0xff]
    %v858 = vld [vmem:[%s3 + $0x270] sm:$0xff]
    %v859 = vld [vmem:[%s3 + $0x278] sm:$0xff]
    %v860 = vld [vmem:[%s3 + $0x280] sm:$0xff]
    %v861 = vld [vmem:[%s3 + $0x288] sm:$0xff]
    %v862 = vld [vmem:[%s3 + $0x290] sm:$0xff]
    %v863 = vld [vmem:[%s3 + $0x298] sm:$0xff]
    %v864 = vld [vmem:[%s3 + $0x2a0] sm:$0xff]
    %v865 = vld [vmem:[%s3 + $0x2a8] sm:$0xff]
    %v866 = vld [vmem:[%s3 + $0x2b0] sm:$0xff]
    %v867 = vld [vmem:[%s3 + $0x2b8] sm:$0xff]
    %v868 = vld [vmem:[%s3 + $0x2c0] sm:$0xff]
    %v869 = vld [vmem:[%s3 + $0x2c8] sm:$0xff]
    %v870 = vld [vmem:[%s3 + $0x2d0] sm:$0xff]
    %v871 = vld [vmem:[%s3 + $0x2d8] sm:$0xff]
    %v872 = vld [vmem:[%s3 + $0x2e0] sm:$0xff]
    %v873 = vld [vmem:[%s3 + $0x2e8] sm:$0xff]
    %v874 = vld [vmem:[%s3 + $0x2f0] sm:$0xff]
    %v875 = vld [vmem:[%s3 + $0x2f8] sm:$0xff]
    %v876 = vld [vmem:[%s3 + $0x300] sm:$0xff]
    %v877 = vld [vmem:[%s3 + $0x308] sm:$0xff]
    %v878 = vld [vmem:[%s3 + $0x310] sm:$0xff]
    %v879 = vld [vmem:[%s3 + $0x318] sm:$0xff]
    %v880 = vld [vmem:[%s3 + $0x320] sm:$0xff]
    %v881 = vld [vmem:[%s3 + $0x328] sm:$0xff]
    %v882 = vld [vmem:[%s3 + $0x330] sm:$0xff]
    %v883 = vld [vmem:[%s3 + $0x338] sm:$0xff]
    %v884 = vld [vmem:[%s3 + $0x340] sm:$0xff]
    %v885 = vld [vmem:[%s3 + $0x348] sm:$0xff]
    %v886 = vld [vmem:[%s3 + $0x350] sm:$0xff]
    %v887 = vld [vmem:[%s3 + $0x358] sm:$0xff]
    %v888 = vld [vmem:[%s3 + $0x360] sm:$0xff]
    %v889 = vld [vmem:[%s3 + $0x368] sm:$0xff]
    %v890 = vld [vmem:[%s3 + $0x370] sm:$0xff]
    %v891 = vld [vmem:[%s3 + $0x378] sm:$0xff]
    %v892 = vld [vmem:[%s3 + $0x380] sm:$0xff]
    %v893 = vld [vmem:[%s3 + $0x388] sm:$0xff]
    %v894 = vld [vmem:[%s3 + $0x390] sm:$0xff]
    %v895 = vld [vmem:[%s3 + $0x398] sm:$0xff]
    %v896 = vld [vmem:[%s3 + $0x3a0] sm:$0xff]
    %v897 = vld [vmem:[%s3 + $0x3a8] sm:$0xff]
    %v898 = vld [vmem:[%s3 + $0x3b0] sm:$0xff]
    %v899 = vld [vmem:[%s3 + $0x3b8] sm:$0xff]
    %v900 = vld [vmem:[%s3 + $0x3c0] sm:$0xff]
    %v901 = vld [vmem:[%s3 + $0x3c8] sm:$0xff]
    %v902 = vld [vmem:[%s3 + $0x3d0] sm:$0xff]
    %v903 = vld [vmem:[%s3 + $0x3d8] sm:$0xff]
    %v904 = vld [vmem:[%s3 + $0x3e0] sm:$0xff]
    %v905 = vld [vmem:[%s3 + $0x3e8] sm:$0xff]
    %v906 = vld [vmem:[%s3 + $0x3f0] sm:$0xff]
    %v907 = vld [vmem:[%s3 + $0x3f8] sm:$0xff]
    %v908 = vld [vmem:[%s4] sm:$0xf]
    %v910 = vlaneseq
    %v911 = vshrl.u32 %v910, 7
    %v912 = vsub.s32 0, %v911
    %v913 = vrot.slane %v908, %v912
    %v914 = vlaneseq
    %v915 = vshrl.u32 %v914, 7
    %v916 = vsub.s32 1, %v915
    %v917 = vrot.slane %v908, %v916
    %v918 = vlaneseq
    %v919 = vshrl.u32 %v918, 7
    %v920 = vsub.s32 2, %v919
    %v921 = vrot.slane %v908, %v920
    %v922 = vlaneseq
    %v923 = vshrl.u32 %v922, 7
    %v924 = vsub.s32 3, %v923
    %v925 = vrot.slane %v908, %v924
    %v1058 = vunpack.c.l.b16 %v780
    %v1059 = vunpack.c.h.b16 %v780
    %v1060 = vunpack.c.l.b16 %v781
    %v1061 = vunpack.c.h.b16 %v781
    %v1062 = vunpack.c.l.b16 %v782
    %v1063 = vunpack.c.h.b16 %v782
    %v1064 = vunpack.c.l.b16 %v783
    %v1065 = vunpack.c.h.b16 %v783
    %v1066 = vunpack.c.l.b16 %v784
    %v1067 = vunpack.c.h.b16 %v784
    %v1068 = vunpack.c.l.b16 %v785
    %v1069 = vunpack.c.h.b16 %v785
    %v1070 = vunpack.c.l.b16 %v786
    %v1071 = vunpack.c.h.b16 %v786
    %v1072 = vunpack.c.l.b16 %v787
    %v1073 = vunpack.c.h.b16 %v787
    %v1074 = vunpack.c.l.b16 %v788
    %v1075 = vunpack.c.h.b16 %v788
    %v1076 = vunpack.c.l.b16 %v789
    %v1077 = vunpack.c.h.b16 %v789
    %v1078 = vunpack.c.l.b16 %v790
    %v1079 = vunpack.c.h.b16 %v790
    %v1080 = vunpack.c.l.b16 %v791
    %v1081 = vunpack.c.h.b16 %v791
    %v1082 = vunpack.c.l.b16 %v792
    %v1083 = vunpack.c.h.b16 %v792
    %v1084 = vunpack.c.l.b16 %v793
    %v1085 = vunpack.c.h.b16 %v793
    %v1086 = vunpack.c.l.b16 %v794
    %v1087 = vunpack.c.h.b16 %v794
    %v1088 = vunpack.c.l.b16 %v795
    %v1089 = vunpack.c.h.b16 %v795
    %v1090 = vunpack.c.l.b16 %v796
    %v1091 = vunpack.c.h.b16 %v796
    %v1092 = vunpack.c.l.b16 %v797
    %v1093 = vunpack.c.h.b16 %v797
    %v1094 = vunpack.c.l.b16 %v798
    %v1095 = vunpack.c.h.b16 %v798
    %v1096 = vunpack.c.l.b16 %v799
    %v1097 = vunpack.c.h.b16 %v799
    %v1098 = vunpack.c.l.b16 %v800
    %v1099 = vunpack.c.h.b16 %v800
    %v1100 = vunpack.c.l.b16 %v801
    %v1101 = vunpack.c.h.b16 %v801
    %v1102 = vunpack.c.l.b16 %v802
    %v1103 = vunpack.c.h.b16 %v802
    %v1104 = vunpack.c.l.b16 %v803
    %v1105 = vunpack.c.h.b16 %v803
    %v1106 = vunpack.c.l.b16 %v804
    %v1107 = vunpack.c.h.b16 %v804
    %v1108 = vunpack.c.l.b16 %v805
    %v1109 = vunpack.c.h.b16 %v805
    %v1110 = vunpack.c.l.b16 %v806
    %v1111 = vunpack.c.h.b16 %v806
    %v1112 = vunpack.c.l.b16 %v807
    %v1113 = vunpack.c.h.b16 %v807
    %v1114 = vunpack.c.l.b16 %v808
    %v1115 = vunpack.c.h.b16 %v808
    %v1116 = vunpack.c.l.b16 %v809
    %v1117 = vunpack.c.h.b16 %v809
    %v1118 = vunpack.c.l.b16 %v810
    %v1119 = vunpack.c.h.b16 %v810
    %v1120 = vunpack.c.l.b16 %v811
    %v1121 = vunpack.c.h.b16 %v811
    %v1122 = vunpack.c.l.b16 %v812
    %v1123 = vunpack.c.h.b16 %v812
    %v1124 = vunpack.c.l.b16 %v813
    %v1125 = vunpack.c.h.b16 %v813
    %v1126 = vunpack.c.l.b16 %v814
    %v1127 = vunpack.c.h.b16 %v814
    %v1128 = vunpack.c.l.b16 %v815
    %v1129 = vunpack.c.h.b16 %v815
    %v1130 = vunpack.c.l.b16 %v816
    %v1131 = vunpack.c.h.b16 %v816
    %v1132 = vunpack.c.l.b16 %v817
    %v1133 = vunpack.c.h.b16 %v817
    %v1134 = vunpack.c.l.b16 %v818
    %v1135 = vunpack.c.h.b16 %v818
    %v1136 = vunpack.c.l.b16 %v819
    %v1137 = vunpack.c.h.b16 %v819
    %v1138 = vunpack.c.l.b16 %v820
    %v1139 = vunpack.c.h.b16 %v820
    %v1140 = vunpack.c.l.b16 %v821
    %v1141 = vunpack.c.h.b16 %v821
    %v1142 = vunpack.c.l.b16 %v822
    %v1143 = vunpack.c.h.b16 %v822
    %v1144 = vunpack.c.l.b16 %v823
    %v1145 = vunpack.c.h.b16 %v823
    %v1146 = vunpack.c.l.b16 %v824
    %v1147 = vunpack.c.h.b16 %v824
    %v1148 = vunpack.c.l.b16 %v825
    %v1149 = vunpack.c.h.b16 %v825
    %v1150 = vunpack.c.l.b16 %v826
    %v1151 = vunpack.c.h.b16 %v826
    %v1152 = vunpack.c.l.b16 %v827
    %v1153 = vunpack.c.h.b16 %v827
    %v1154 = vunpack.c.l.b16 %v828
    %v1155 = vunpack.c.h.b16 %v828
    %v1156 = vunpack.c.l.b16 %v829
    %v1157 = vunpack.c.h.b16 %v829
    %v1158 = vunpack.c.l.b16 %v830
    %v1159 = vunpack.c.h.b16 %v830
    %v1160 = vunpack.c.l.b16 %v831
    %v1161 = vunpack.c.h.b16 %v831
    %v1162 = vunpack.c.l.b16 %v832
    %v1163 = vunpack.c.h.b16 %v832
    %v1164 = vunpack.c.l.b16 %v833
    %v1165 = vunpack.c.h.b16 %v833
    %v1166 = vunpack.c.l.b16 %v834
    %v1167 = vunpack.c.h.b16 %v834
    %v1168 = vunpack.c.l.b16 %v835
    %v1169 = vunpack.c.h.b16 %v835
    %v1170 = vunpack.c.l.b16 %v836
    %v1171 = vunpack.c.h.b16 %v836
    %v1172 = vunpack.c.l.b16 %v837
    %v1173 = vunpack.c.h.b16 %v837
    %v1174 = vunpack.c.l.b16 %v838
    %v1175 = vunpack.c.h.b16 %v838
    %v1176 = vunpack.c.l.b16 %v839
    %v1177 = vunpack.c.h.b16 %v839
    %v1178 = vunpack.c.l.b16 %v840
    %v1179 = vunpack.c.h.b16 %v840
    %v1180 = vunpack.c.l.b16 %v841
    %v1181 = vunpack.c.h.b16 %v841
    %v1182 = vunpack.c.l.b16 %v842
    %v1183 = vunpack.c.h.b16 %v842
    %v1184 = vunpack.c.l.b16 %v843
    %v1185 = vunpack.c.h.b16 %v843
    %v1186 = vunpack.c.l.b16 %v844
    %v1187 = vunpack.c.h.b16 %v844
    %v1188 = vunpack.c.l.b16 %v845
    %v1189 = vunpack.c.h.b16 %v845
    %v1190 = vunpack.c.l.b16 %v846
    %v1191 = vunpack.c.h.b16 %v846
    %v1192 = vunpack.c.l.b16 %v847
    %v1193 = vunpack.c.h.b16 %v847
    %v1194 = vunpack.c.l.b16 %v848
    %v1195 = vunpack.c.h.b16 %v848
    %v1196 = vunpack.c.l.b16 %v849
    %v1197 = vunpack.c.h.b16 %v849
    %v1198 = vunpack.c.l.b16 %v850
    %v1199 = vunpack.c.h.b16 %v850
    %v1200 = vunpack.c.l.b16 %v851
    %v1201 = vunpack.c.h.b16 %v851
    %v1202 = vunpack.c.l.b16 %v852
    %v1203 = vunpack.c.h.b16 %v852
    %v1204 = vunpack.c.l.b16 %v853
    %v1205 = vunpack.c.h.b16 %v853
    %v1206 = vunpack.c.l.b16 %v854
    %v1207 = vunpack.c.h.b16 %v854
    %v1208 = vunpack.c.l.b16 %v855
    %v1209 = vunpack.c.h.b16 %v855
    %v1210 = vunpack.c.l.b16 %v856
    %v1211 = vunpack.c.h.b16 %v856
    %v1212 = vunpack.c.l.b16 %v857
    %v1213 = vunpack.c.h.b16 %v857
    %v1214 = vunpack.c.l.b16 %v858
    %v1215 = vunpack.c.h.b16 %v858
    %v1216 = vunpack.c.l.b16 %v859
    %v1217 = vunpack.c.h.b16 %v859
    %v1218 = vunpack.c.l.b16 %v860
    %v1219 = vunpack.c.h.b16 %v860
    %v1220 = vunpack.c.l.b16 %v861
    %v1221 = vunpack.c.h.b16 %v861
    %v1222 = vunpack.c.l.b16 %v862
    %v1223 = vunpack.c.h.b16 %v862
    %v1224 = vunpack.c.l.b16 %v863
    %v1225 = vunpack.c.h.b16 %v863
    %v1226 = vunpack.c.l.b16 %v864
    %v1227 = vunpack.c.h.b16 %v864
    %v1228 = vunpack.c.l.b16 %v865
    %v1229 = vunpack.c.h.b16 %v865
    %v1230 = vunpack.c.l.b16 %v866
    %v1231 = vunpack.c.h.b16 %v866
    %v1232 = vunpack.c.l.b16 %v867
    %v1233 = vunpack.c.h.b16 %v867
    %v1234 = vunpack.c.l.b16 %v868
    %v1235 = vunpack.c.h.b16 %v868
    %v1236 = vunpack.c.l.b16 %v869
    %v1237 = vunpack.c.h.b16 %v869
    %v1238 = vunpack.c.l.b16 %v870
    %v1239 = vunpack.c.h.b16 %v870
    %v1240 = vunpack.c.l.b16 %v871
    %v1241 = vunpack.c.h.b16 %v871
    %v1242 = vunpack.c.l.b16 %v872
    %v1243 = vunpack.c.h.b16 %v872
    %v1244 = vunpack.c.l.b16 %v873
    %v1245 = vunpack.c.h.b16 %v873
    %v1246 = vunpack.c.l.b16 %v874
    %v1247 = vunpack.c.h.b16 %v874
    %v1248 = vunpack.c.l.b16 %v875
    %v1249 = vunpack.c.h.b16 %v875
    %v1250 = vunpack.c.l.b16 %v876
    %v1251 = vunpack.c.h.b16 %v876
    %v1252 = vunpack.c.l.b16 %v877
    %v1253 = vunpack.c.h.b16 %v877
    %v1254 = vunpack.c.l.b16 %v878
    %v1255 = vunpack.c.h.b16 %v878
    %v1256 = vunpack.c.l.b16 %v879
    %v1257 = vunpack.c.h.b16 %v879
    %v1258 = vunpack.c.l.b16 %v880
    %v1259 = vunpack.c.h.b16 %v880
    %v1260 = vunpack.c.l.b16 %v881
    %v1261 = vunpack.c.h.b16 %v881
    %v1262 = vunpack.c.l.b16 %v882
    %v1263 = vunpack.c.h.b16 %v882
    %v1264 = vunpack.c.l.b16 %v883
    %v1265 = vunpack.c.h.b16 %v883
    %v1266 = vunpack.c.l.b16 %v884
    %v1267 = vunpack.c.h.b16 %v884
    %v1268 = vunpack.c.l.b16 %v885
    %v1269 = vunpack.c.h.b16 %v885
    %v1270 = vunpack.c.l.b16 %v886
    %v1271 = vunpack.c.h.b16 %v886
    %v1272 = vunpack.c.l.b16 %v887
    %v1273 = vunpack.c.h.b16 %v887
    %v1274 = vunpack.c.l.b16 %v888
    %v1275 = vunpack.c.h.b16 %v888
    %v1276 = vunpack.c.l.b16 %v889
    %v1277 = vunpack.c.h.b16 %v889
    %v1278 = vunpack.c.l.b16 %v890
    %v1279 = vunpack.c.h.b16 %v890
    %v1280 = vunpack.c.l.b16 %v891
    %v1281 = vunpack.c.h.b16 %v891
    %v1282 = vunpack.c.l.b16 %v892
    %v1283 = vunpack.c.h.b16 %v892
    %v1284 = vunpack.c.l.b16 %v893
    %v1285 = vunpack.c.h.b16 %v893
    %v1286 = vunpack.c.l.b16 %v894
    %v1287 = vunpack.c.h.b16 %v894
    %v1288 = vunpack.c.l.b16 %v895
    %v1289 = vunpack.c.h.b16 %v895
    %v1290 = vunpack.c.l.b16 %v896
    %v1291 = vunpack.c.h.b16 %v896
    %v1292 = vunpack.c.l.b16 %v897
    %v1293 = vunpack.c.h.b16 %v897
    %v1294 = vunpack.c.l.b16 %v898
    %v1295 = vunpack.c.h.b16 %v898
    %v1296 = vunpack.c.l.b16 %v899
    %v1297 = vunpack.c.h.b16 %v899
    %v1298 = vunpack.c.l.b16 %v900
    %v1299 = vunpack.c.h.b16 %v900
    %v1300 = vunpack.c.l.b16 %v901
    %v1301 = vunpack.c.h.b16 %v901
    %v1302 = vunpack.c.l.b16 %v902
    %v1303 = vunpack.c.h.b16 %v902
    %v1304 = vunpack.c.l.b16 %v903
    %v1305 = vunpack.c.h.b16 %v903
    %v1306 = vunpack.c.l.b16 %v904
    %v1307 = vunpack.c.h.b16 %v904
    %v1308 = vunpack.c.l.b16 %v905
    %v1309 = vunpack.c.h.b16 %v905
    %v1310 = vunpack.c.l.b16 %v906
    %v1311 = vunpack.c.h.b16 %v906
    %v1312 = vunpack.c.l.b16 %v907
    %v1313 = vunpack.c.h.b16 %v907
    %v1314 = vpack.c.b16 %v1062, %v1058
    %v1315 = vpack.c.b16 %v1063, %v1059
    %v1316 = vpack.c.b16 %v1064, %v1060
    %v1317 = vpack.c.b16 %v1065, %v1061
    %v1318 = vpack.c.b16 %v1070, %v1066
    %v1319 = vpack.c.b16 %v1071, %v1067
    %v1320 = vpack.c.b16 %v1072, %v1068
    %v1321 = vpack.c.b16 %v1073, %v1069
    %v1322 = vpack.c.b16 %v1078, %v1074
    %v1323 = vpack.c.b16 %v1079, %v1075
    %v1324 = vpack.c.b16 %v1080, %v1076
    %v1325 = vpack.c.b16 %v1081, %v1077
    %v1326 = vpack.c.b16 %v1086, %v1082
    %v1327 = vpack.c.b16 %v1087, %v1083
    %v1328 = vpack.c.b16 %v1088, %v1084
    %v1329 = vpack.c.b16 %v1089, %v1085
    %v1330 = vpack.c.b16 %v1094, %v1090
    %v1331 = vpack.c.b16 %v1095, %v1091
    %v1332 = vpack.c.b16 %v1096, %v1092
    %v1333 = vpack.c.b16 %v1097, %v1093
    %v1334 = vpack.c.b16 %v1102, %v1098
    %v1335 = vpack.c.b16 %v1103, %v1099
    %v1336 = vpack.c.b16 %v1104, %v1100
    %v1337 = vpack.c.b16 %v1105, %v1101
    %v1338 = vpack.c.b16 %v1110, %v1106
    %v1339 = vpack.c.b16 %v1111, %v1107
    %v1340 = vpack.c.b16 %v1112, %v1108
    %v1341 = vpack.c.b16 %v1113, %v1109
    %v1342 = vpack.c.b16 %v1118, %v1114
    %v1343 = vpack.c.b16 %v1119, %v1115
    %v1344 = vpack.c.b16 %v1120, %v1116
    %v1345 = vpack.c.b16 %v1121, %v1117
    %v1346 = vpack.c.b16 %v1126, %v1122
    %v1347 = vpack.c.b16 %v1127, %v1123
    %v1348 = vpack.c.b16 %v1128, %v1124
    %v1349 = vpack.c.b16 %v1129, %v1125
    %v1350 = vpack.c.b16 %v1134, %v1130
    %v1351 = vpack.c.b16 %v1135, %v1131
    %v1352 = vpack.c.b16 %v1136, %v1132
    %v1353 = vpack.c.b16 %v1137, %v1133
    %v1354 = vpack.c.b16 %v1142, %v1138
    %v1355 = vpack.c.b16 %v1143, %v1139
    %v1356 = vpack.c.b16 %v1144, %v1140
    %v1357 = vpack.c.b16 %v1145, %v1141
    %v1358 = vpack.c.b16 %v1150, %v1146
    %v1359 = vpack.c.b16 %v1151, %v1147
    %v1360 = vpack.c.b16 %v1152, %v1148
    %v1361 = vpack.c.b16 %v1153, %v1149
    %v1362 = vpack.c.b16 %v1158, %v1154
    %v1363 = vpack.c.b16 %v1159, %v1155
    %v1364 = vpack.c.b16 %v1160, %v1156
    %v1365 = vpack.c.b16 %v1161, %v1157
    %v1366 = vpack.c.b16 %v1166, %v1162
    %v1367 = vpack.c.b16 %v1167, %v1163
    %v1368 = vpack.c.b16 %v1168, %v1164
    %v1369 = vpack.c.b16 %v1169, %v1165
    %v1370 = vpack.c.b16 %v1174, %v1170
    %v1371 = vpack.c.b16 %v1175, %v1171
    %v1372 = vpack.c.b16 %v1176, %v1172
    %v1373 = vpack.c.b16 %v1177, %v1173
    %v1374 = vpack.c.b16 %v1182, %v1178
    %v1375 = vpack.c.b16 %v1183, %v1179
    %v1376 = vpack.c.b16 %v1184, %v1180
    %v1377 = vpack.c.b16 %v1185, %v1181
    %v1378 = vpack.c.b16 %v1190, %v1186
    %v1379 = vpack.c.b16 %v1191, %v1187
    %v1380 = vpack.c.b16 %v1192, %v1188
    %v1381 = vpack.c.b16 %v1193, %v1189
    %v1382 = vpack.c.b16 %v1198, %v1194
    %v1383 = vpack.c.b16 %v1199, %v1195
    %v1384 = vpack.c.b16 %v1200, %v1196
    %v1385 = vpack.c.b16 %v1201, %v1197
    %v1386 = vpack.c.b16 %v1206, %v1202
    %v1387 = vpack.c.b16 %v1207, %v1203
    %v1388 = vpack.c.b16 %v1208, %v1204
    %v1389 = vpack.c.b16 %v1209, %v1205
    %v1390 = vpack.c.b16 %v1214, %v1210
    %v1391 = vpack.c.b16 %v1215, %v1211
    %v1392 = vpack.c.b16 %v1216, %v1212
    %v1393 = vpack.c.b16 %v1217, %v1213
    %v1394 = vpack.c.b16 %v1222, %v1218
    %v1395 = vpack.c.b16 %v1223, %v1219
    %v1396 = vpack.c.b16 %v1224, %v1220
    %v1397 = vpack.c.b16 %v1225, %v1221
    %v1398 = vpack.c.b16 %v1230, %v1226
    %v1399 = vpack.c.b16 %v1231, %v1227
    %v1400 = vpack.c.b16 %v1232, %v1228
    %v1401 = vpack.c.b16 %v1233, %v1229
    %v1402 = vpack.c.b16 %v1238, %v1234
    %v1403 = vpack.c.b16 %v1239, %v1235
    %v1404 = vpack.c.b16 %v1240, %v1236
    %v1405 = vpack.c.b16 %v1241, %v1237
    %v1406 = vpack.c.b16 %v1246, %v1242
    %v1407 = vpack.c.b16 %v1247, %v1243
    %v1408 = vpack.c.b16 %v1248, %v1244
    %v1409 = vpack.c.b16 %v1249, %v1245
    %v1410 = vpack.c.b16 %v1254, %v1250
    %v1411 = vpack.c.b16 %v1255, %v1251
    %v1412 = vpack.c.b16 %v1256, %v1252
    %v1413 = vpack.c.b16 %v1257, %v1253
    %v1414 = vpack.c.b16 %v1262, %v1258
    %v1415 = vpack.c.b16 %v1263, %v1259
    %v1416 = vpack.c.b16 %v1264, %v1260
    %v1417 = vpack.c.b16 %v1265, %v1261
    %v1418 = vpack.c.b16 %v1270, %v1266
    %v1419 = vpack.c.b16 %v1271, %v1267
    %v1420 = vpack.c.b16 %v1272, %v1268
    %v1421 = vpack.c.b16 %v1273, %v1269
    %v1422 = vpack.c.b16 %v1278, %v1274
    %v1423 = vpack.c.b16 %v1279, %v1275
    %v1424 = vpack.c.b16 %v1280, %v1276
    %v1425 = vpack.c.b16 %v1281, %v1277
    %v1426 = vpack.c.b16 %v1286, %v1282
    %v1427 = vpack.c.b16 %v1287, %v1283
    %v1428 = vpack.c.b16 %v1288, %v1284
    %v1429 = vpack.c.b16 %v1289, %v1285
    %v1430 = vpack.c.b16 %v1294, %v1290
    %v1431 = vpack.c.b16 %v1295, %v1291
    %v1432 = vpack.c.b16 %v1296, %v1292
    %v1433 = vpack.c.b16 %v1297, %v1293
    %v1434 = vpack.c.b16 %v1302, %v1298
    %v1435 = vpack.c.b16 %v1303, %v1299
    %v1436 = vpack.c.b16 %v1304, %v1300
    %v1437 = vpack.c.b16 %v1305, %v1301
    %v1438 = vpack.c.b16 %v1310, %v1306
    %v1439 = vpack.c.b16 %v1311, %v1307
    %v1440 = vpack.c.b16 %v1312, %v1308
    %v1441 = vpack.c.b16 %v1313, %v1309
    %1570 = vmatprep.subr.bf16.mxu0 %v1343
    %1571 = vmatpush1.bf16.msra.mxu0 %v1342
    %1572 = vmatprep.subr.bf16.mxu0 %v1339
    %1573 = vmatpush1.bf16.msra.mxu0 %v1338
    %1574 = vmatprep.subr.bf16.mxu0 %v1335
    %1575 = vmatpush1.bf16.msra.mxu0 %v1334
    %1576 = vmatprep.subr.bf16.mxu0 %v1331
    %1577 = vmatpush1.bf16.msra.mxu0 %v1330
    %1578 = vmatprep.subr.bf16.mxu0 %v1327
    %1579 = vmatpush1.bf16.msra.mxu0 %v1326
    %1580 = vmatprep.subr.bf16.mxu0 %v1323
    %1581 = vmatpush1.bf16.msra.mxu0 %v1322
    %1582 = vmatprep.subr.bf16.mxu0 %v1319
    %1583 = vmatpush1.bf16.msra.mxu0 %v1318
    %1584 = vmatprep.subr.bf16.mxu0 %v1315
    %1585 = vmatpush1.bf16.msra.mxu0 %v1314
    %1586 = vmatprep.subr.bf16.mxu0 %v1375
    %1587 = vmatpush2.bf16.msra.mxu0 %v1374
    %1588 = vmatprep.subr.bf16.mxu0 %v1371
    %1589 = vmatpush2.bf16.msra.mxu0 %v1370
    %1590 = vmatprep.subr.bf16.mxu0 %v1367
    %1591 = vmatpush2.bf16.msra.mxu0 %v1366
    %1592 = vmatprep.subr.bf16.mxu0 %v1363
    %1593 = vmatpush2.bf16.msra.mxu0 %v1362
    %1594 = vmatprep.subr.bf16.mxu0 %v1359
    %1595 = vmatpush2.bf16.msra.mxu0 %v1358
    %1596 = vmatprep.subr.bf16.mxu0 %v1355
    %1597 = vmatpush2.bf16.msra.mxu0 %v1354
    %1598 = vmatprep.subr.bf16.mxu0 %v1351
    %1599 = vmatpush2.bf16.msra.mxu0 %v1350
    %1600 = vmatprep.subr.bf16.mxu0 %v1347
    %1601 = vmatpush2.bf16.msra.mxu0 %v1346
    %1602 = vmatprep.mubr.bf16.mxu0 %v717
    %1603 = vmatmul.mubr.bf16.gmra.mxu0 %v716
    %v1604 = vpop.f32.mrf.mxu0
    %v1605 = vadd.f32 %v913, %v1604
    %v1606 = vpop.f32.mrf.mxu0
    %v1607 = vadd.f32 %v917, %v1606
    %v1608 = vpop.f32.mrf.mxu0
    %v1609 = vadd.f32 %v913, %v1608
    %v1610 = vpop.f32.mrf.mxu0
    %v1611 = vadd.f32 %v917, %v1610
    %1612 = vmatprep.mubr.bf16.mxu0 %v721
    %1613 = vmatmul.mubr.bf16.gmra.mxu0 %v720
    %v1614 = vpop.f32.mrf.mxu0
    %v1615 = vadd.f32 %v913, %v1614
    %v1616 = vpop.f32.mrf.mxu0
    %v1617 = vadd.f32 %v917, %v1616
    %v1618 = vpop.f32.mrf.mxu0
    %v1619 = vadd.f32 %v913, %v1618
    %v1620 = vpop.f32.mrf.mxu0
    %v1621 = vadd.f32 %v917, %v1620
    %1622 = vmatprep.mubr.bf16.mxu0 %v725
    %1623 = vmatmul.mubr.bf16.gmra.mxu0 %v724
    %v1624 = vpop.f32.mrf.mxu0
    %v1625 = vadd.f32 %v913, %v1624
    %v1626 = vpop.f32.mrf.mxu0
    %v1627 = vadd.f32 %v917, %v1626
    %v1628 = vpop.f32.mrf.mxu0
    %v1629 = vadd.f32 %v913, %v1628
    %v1630 = vpop.f32.mrf.mxu0
    %v1631 = vadd.f32 %v917, %v1630
    %1632 = vmatprep.mubr.bf16.mxu0 %v729
    %1633 = vmatmul.mubr.bf16.gmra.mxu0 %v728
    %v1634 = vpop.f32.mrf.mxu0
    %v1635 = vadd.f32 %v913, %v1634
    %v1636 = vpop.f32.mrf.mxu0
    %v1637 = vadd.f32 %v917, %v1636
    %v1638 = vpop.f32.mrf.mxu0
    %v1639 = vadd.f32 %v913, %v1638
    %v1640 = vpop.f32.mrf.mxu0
    %v1641 = vadd.f32 %v917, %v1640
    %1642 = vmatprep.mubr.bf16.mxu0 %v733
    %1643 = vmatmul.mubr.bf16.gmra.mxu0 %v732
    %v1644 = vpop.f32.mrf.mxu0
    %v1645 = vadd.f32 %v913, %v1644
    %v1646 = vpop.f32.mrf.mxu0
    %v1647 = vadd.f32 %v917, %v1646
    %v1648 = vpop.f32.mrf.mxu0
    %v1649 = vadd.f32 %v913, %v1648
    %v1650 = vpop.f32.mrf.mxu0
    %v1651 = vadd.f32 %v917, %v1650
    %1652 = vmatprep.mubr.bf16.mxu0 %v737
    %1653 = vmatmul.mubr.bf16.gmra.mxu0 %v736
    %v1654 = vpop.f32.mrf.mxu0
    %v1655 = vadd.f32 %v913, %v1654
    %v1656 = vpop.f32.mrf.mxu0
    %v1657 = vadd.f32 %v917, %v1656
    %v1658 = vpop.f32.mrf.mxu0
    %v1659 = vadd.f32 %v913, %v1658
    %v1660 = vpop.f32.mrf.mxu0
    %v1661 = vadd.f32 %v917, %v1660
    %1662 = vmatprep.mubr.bf16.mxu0 %v741
    %1663 = vmatmul.mubr.bf16.gmra.mxu0 %v740
    %v1664 = vpop.f32.mrf.mxu0
    %v1665 = vadd.f32 %v913, %v1664
    %v1666 = vpop.f32.mrf.mxu0
    %v1667 = vadd.f32 %v917, %v1666
    %v1668 = vpop.f32.mrf.mxu0
    %v1669 = vadd.f32 %v913, %v1668
    %v1670 = vpop.f32.mrf.mxu0
    %v1671 = vadd.f32 %v917, %v1670
    %1672 = vmatprep.mubr.bf16.mxu0 %v745
    %1673 = vmatmul.mubr.bf16.gmra.mxu0 %v744
    %v1674 = vpop.f32.mrf.mxu0
    %v1675 = vadd.f32 %v913, %v1674
    %v1676 = vpop.f32.mrf.mxu0
    %v1677 = vadd.f32 %v917, %v1676
    %v1678 = vpop.f32.mrf.mxu0
    %v1679 = vadd.f32 %v913, %v1678
    %v1680 = vpop.f32.mrf.mxu0
    %v1681 = vadd.f32 %v917, %v1680
    %1682 = vmatprep.mubr.bf16.mxu0 %v749
    %1683 = vmatmul.mubr.bf16.gmra.mxu0 %v748
    %v1684 = vpop.f32.mrf.mxu0
    %v1685 = vadd.f32 %v913, %v1684
    %v1686 = vpop.f32.mrf.mxu0
    %v1687 = vadd.f32 %v917, %v1686
    %v1688 = vpop.f32.mrf.mxu0
    %v1689 = vadd.f32 %v913, %v1688
    %v1690 = vpop.f32.mrf.mxu0
    %v1691 = vadd.f32 %v917, %v1690
    %1692 = vmatprep.mubr.bf16.mxu0 %v753
    %1693 = vmatmul.mubr.bf16.gmra.mxu0 %v752
    %v1694 = vpop.f32.mrf.mxu0
    %v1695 = vadd.f32 %v913, %v1694
    %v1696 = vpop.f32.mrf.mxu0
    %v1697 = vadd.f32 %v917, %v1696
    %v1698 = vpop.f32.mrf.mxu0
    %v1699 = vadd.f32 %v913, %v1698
    %v1700 = vpop.f32.mrf.mxu0
    %v1701 = vadd.f32 %v917, %v1700
    %1702 = vmatprep.mubr.bf16.mxu0 %v757
    %1703 = vmatmul.mubr.bf16.gmra.mxu0 %v756
    %v1704 = vpop.f32.mrf.mxu0
    %v1705 = vadd.f32 %v913, %v1704
    %v1706 = vpop.f32.mrf.mxu0
    %v1707 = vadd.f32 %v917, %v1706
    %v1708 = vpop.f32.mrf.mxu0
    %v1709 = vadd.f32 %v913, %v1708
    %v1710 = vpop.f32.mrf.mxu0
    %v1711 = vadd.f32 %v917, %v1710
    %1712 = vmatprep.mubr.bf16.mxu0 %v761
    %1713 = vmatmul.mubr.bf16.gmra.mxu0 %v760
    %v1714 = vpop.f32.mrf.mxu0
    %v1715 = vadd.f32 %v913, %v1714
    %v1716 = vpop.f32.mrf.mxu0
    %v1717 = vadd.f32 %v917, %v1716
    %v1718 = vpop.f32.mrf.mxu0
    %v1719 = vadd.f32 %v913, %v1718
    %v1720 = vpop.f32.mrf.mxu0
    %v1721 = vadd.f32 %v917, %v1720
    %1722 = vmatprep.mubr.bf16.mxu0 %v765
    %1723 = vmatmul.mubr.bf16.gmra.mxu0 %v764
    %v1724 = vpop.f32.mrf.mxu0
    %v1725 = vadd.f32 %v913, %v1724
    %v1726 = vpop.f32.mrf.mxu0
    %v1727 = vadd.f32 %v917, %v1726
    %v1728 = vpop.f32.mrf.mxu0
    %v1729 = vadd.f32 %v913, %v1728
    %v1730 = vpop.f32.mrf.mxu0
    %v1731 = vadd.f32 %v917, %v1730
    %1732 = vmatprep.mubr.bf16.mxu0 %v769
    %1733 = vmatmul.mubr.bf16.gmra.mxu0 %v768
    %v1734 = vpop.f32.mrf.mxu0
    %v1735 = vadd.f32 %v913, %v1734
    %v1736 = vpop.f32.mrf.mxu0
    %v1737 = vadd.f32 %v917, %v1736
    %v1738 = vpop.f32.mrf.mxu0
    %v1739 = vadd.f32 %v913, %v1738
    %v1740 = vpop.f32.mrf.mxu0
    %v1741 = vadd.f32 %v917, %v1740
    %1742 = vmatprep.mubr.bf16.mxu0 %v773
    %1743 = vmatmul.mubr.bf16.gmra.mxu0 %v772
    %v1744 = vpop.f32.mrf.mxu0
    %v1745 = vadd.f32 %v913, %v1744
    %v1746 = vpop.f32.mrf.mxu0
    %v1747 = vadd.f32 %v917, %v1746
    %v1748 = vpop.f32.mrf.mxu0
    %v1749 = vadd.f32 %v913, %v1748
    %v1750 = vpop.f32.mrf.mxu0
    %v1751 = vadd.f32 %v917, %v1750
    %1752 = vmatprep.mubr.bf16.mxu0 %v777
    %1753 = vmatmul.mubr.bf16.gmra.mxu0 %v776
    %v1754 = vpop.f32.mrf.mxu0
    %v1755 = vadd.f32 %v913, %v1754
    %v1756 = vpop.f32.mrf.mxu0
    %v1757 = vadd.f32 %v917, %v1756
    %v1758 = vpop.f32.mrf.mxu0
    %v1759 = vadd.f32 %v913, %v1758
    %v1760 = vpop.f32.mrf.mxu0
    %v1761 = vadd.f32 %v917, %v1760
    %1762 = vdwg.mxu0
    %1763 = vmatprep.subr.bf16.mxu0 %v1407
    %1764 = vmatpush1.bf16.msra.mxu0 %v1406
    %1765 = vmatprep.subr.bf16.mxu0 %v1403
    %1766 = vmatpush1.bf16.msra.mxu0 %v1402
    %1767 = vmatprep.subr.bf16.mxu0 %v1399
    %1768 = vmatpush1.bf16.msra.mxu0 %v1398
    %1769 = vmatprep.subr.bf16.mxu0 %v1395
    %1770 = vmatpush1.bf16.msra.mxu0 %v1394
    %1771 = vmatprep.subr.bf16.mxu0 %v1391
    %1772 = vmatpush1.bf16.msra.mxu0 %v1390
    %1773 = vmatprep.subr.bf16.mxu0 %v1387
    %1774 = vmatpush1.bf16.msra.mxu0 %v1386
    %1775 = vmatprep.subr.bf16.mxu0 %v1383
    %1776 = vmatpush1.bf16.msra.mxu0 %v1382
    %1777 = vmatprep.subr.bf16.mxu0 %v1379
    %1778 = vmatpush1.bf16.msra.mxu0 %v1378
    %1779 = vmatprep.subr.bf16.mxu0 %v1439
    %1780 = vmatpush2.bf16.msra.mxu0 %v1438
    %1781 = vmatprep.subr.bf16.mxu0 %v1435
    %1782 = vmatpush2.bf16.msra.mxu0 %v1434
    %1783 = vmatprep.subr.bf16.mxu0 %v1431
    %1784 = vmatpush2.bf16.msra.mxu0 %v1430
    %1785 = vmatprep.subr.bf16.mxu0 %v1427
    %1786 = vmatpush2.bf16.msra.mxu0 %v1426
    %1787 = vmatprep.subr.bf16.mxu0 %v1423
    %1788 = vmatpush2.bf16.msra.mxu0 %v1422
    %1789 = vmatprep.subr.bf16.mxu0 %v1419
    %1790 = vmatpush2.bf16.msra.mxu0 %v1418
    %1791 = vmatprep.subr.bf16.mxu0 %v1415
    %1792 = vmatpush2.bf16.msra.mxu0 %v1414
    %1793 = vmatprep.subr.bf16.mxu0 %v1411
    %1794 = vmatpush2.bf16.msra.mxu0 %v1410
    %1795 = vmatprep.mubr.bf16.mxu0 %v719
    %1796 = vmatmul.mubr.bf16.gmra.mxu0 %v718
    %v1797 = vpop.f32.mrf.mxu0
    %v1798 = vadd.f32 %v1605, %v1797
    %v1799 = vpop.f32.mrf.mxu0
    %v1800 = vadd.f32 %v1607, %v1799
    %v1801 = vpop.f32.mrf.mxu0
    %v1802 = vadd.f32 %v1609, %v1801
    %v1803 = vpop.f32.mrf.mxu0
    %v1804 = vadd.f32 %v1611, %v1803
    %1805 = vmatprep.mubr.bf16.mxu0 %v723
    %1806 = vmatmul.mubr.bf16.gmra.mxu0 %v722
    %v1807 = vpop.f32.mrf.mxu0
    %v1808 = vadd.f32 %v1615, %v1807
    %v1809 = vpop.f32.mrf.mxu0
    %v1810 = vadd.f32 %v1617, %v1809
    %v1811 = vpop.f32.mrf.mxu0
    %v1812 = vadd.f32 %v1619, %v1811
    %v1813 = vpop.f32.mrf.mxu0
    %v1814 = vadd.f32 %v1621, %v1813
    %1815 = vmatprep.mubr.bf16.mxu0 %v727
    %1816 = vmatmul.mubr.bf16.gmra.mxu0 %v726
    %v1817 = vpop.f32.mrf.mxu0
    %v1818 = vadd.f32 %v1625, %v1817
    %v1819 = vpop.f32.mrf.mxu0
    %v1820 = vadd.f32 %v1627, %v1819
    %v1821 = vpop.f32.mrf.mxu0
    %v1822 = vadd.f32 %v1629, %v1821
    %v1823 = vpop.f32.mrf.mxu0
    %v1824 = vadd.f32 %v1631, %v1823
    %1825 = vmatprep.mubr.bf16.mxu0 %v731
    %1826 = vmatmul.mubr.bf16.gmra.mxu0 %v730
    %v1827 = vpop.f32.mrf.mxu0
    %v1828 = vadd.f32 %v1635, %v1827
    %v1829 = vpop.f32.mrf.mxu0
    %v1830 = vadd.f32 %v1637, %v1829
    %v1831 = vpop.f32.mrf.mxu0
    %v1832 = vadd.f32 %v1639, %v1831
    %v1833 = vpop.f32.mrf.mxu0
    %v1834 = vadd.f32 %v1641, %v1833
    %1835 = vmatprep.mubr.bf16.mxu0 %v735
    %1836 = vmatmul.mubr.bf16.gmra.mxu0 %v734
    %v1837 = vpop.f32.mrf.mxu0
    %v1838 = vadd.f32 %v1645, %v1837
    %v1839 = vpop.f32.mrf.mxu0
    %v1840 = vadd.f32 %v1647, %v1839
    %v1841 = vpop.f32.mrf.mxu0
    %v1842 = vadd.f32 %v1649, %v1841
    %v1843 = vpop.f32.mrf.mxu0
    %v1844 = vadd.f32 %v1651, %v1843
    %1845 = vmatprep.mubr.bf16.mxu0 %v739
    %1846 = vmatmul.mubr.bf16.gmra.mxu0 %v738
    %v1847 = vpop.f32.mrf.mxu0
    %v1848 = vadd.f32 %v1655, %v1847
    %v1849 = vpop.f32.mrf.mxu0
    %v1850 = vadd.f32 %v1657, %v1849
    %v1851 = vpop.f32.mrf.mxu0
    %v1852 = vadd.f32 %v1659, %v1851
    %v1853 = vpop.f32.mrf.mxu0
    %v1854 = vadd.f32 %v1661, %v1853
    %1855 = vmatprep.mubr.bf16.mxu0 %v743
    %1856 = vmatmul.mubr.bf16.gmra.mxu0 %v742
    %v1857 = vpop.f32.mrf.mxu0
    %v1858 = vadd.f32 %v1665, %v1857
    %v1859 = vpop.f32.mrf.mxu0
    %v1860 = vadd.f32 %v1667, %v1859
    %v1861 = vpop.f32.mrf.mxu0
    %v1862 = vadd.f32 %v1669, %v1861
    %v1863 = vpop.f32.mrf.mxu0
    %v1864 = vadd.f32 %v1671, %v1863
    %1865 = vmatprep.mubr.bf16.mxu0 %v747
    %1866 = vmatmul.mubr.bf16.gmra.mxu0 %v746
    %v1867 = vpop.f32.mrf.mxu0
    %v1868 = vadd.f32 %v1675, %v1867
    %v1869 = vpop.f32.mrf.mxu0
    %v1870 = vadd.f32 %v1677, %v1869
    %v1871 = vpop.f32.mrf.mxu0
    %v1872 = vadd.f32 %v1679, %v1871
    %v1873 = vpop.f32.mrf.mxu0
    %v1874 = vadd.f32 %v1681, %v1873
    %1875 = vmatprep.mubr.bf16.mxu0 %v751
    %1876 = vmatmul.mubr.bf16.gmra.mxu0 %v750
    %v1877 = vpop.f32.mrf.mxu0
    %v1878 = vadd.f32 %v1685, %v1877
    %v1879 = vpop.f32.mrf.mxu0
    %v1880 = vadd.f32 %v1687, %v1879
    %v1881 = vpop.f32.mrf.mxu0
    %v1882 = vadd.f32 %v1689, %v1881
    %v1883 = vpop.f32.mrf.mxu0
    %v1884 = vadd.f32 %v1691, %v1883
    %1885 = vmatprep.mubr.bf16.mxu0 %v755
    %1886 = vmatmul.mubr.bf16.gmra.mxu0 %v754
    %v1887 = vpop.f32.mrf.mxu0
    %v1888 = vadd.f32 %v1695, %v1887
    %v1889 = vpop.f32.mrf.mxu0
    %v1890 = vadd.f32 %v1697, %v1889
    %v1891 = vpop.f32.mrf.mxu0
    %v1892 = vadd.f32 %v1699, %v1891
    %v1893 = vpop.f32.mrf.mxu0
    %v1894 = vadd.f32 %v1701, %v1893
    %1895 = vmatprep.mubr.bf16.mxu0 %v759
    %1896 = vmatmul.mubr.bf16.gmra.mxu0 %v758
    %v1897 = vpop.f32.mrf.mxu0
    %v1898 = vadd.f32 %v1705, %v1897
    %v1899 = vpop.f32.mrf.mxu0
    %v1900 = vadd.f32 %v1707, %v1899
    %v1901 = vpop.f32.mrf.mxu0
    %v1902 = vadd.f32 %v1709, %v1901
    %v1903 = vpop.f32.mrf.mxu0
    %v1904 = vadd.f32 %v1711, %v1903
    %1905 = vmatprep.mubr.bf16.mxu0 %v763
    %1906 = vmatmul.mubr.bf16.gmra.mxu0 %v762
    %v1907 = vpop.f32.mrf.mxu0
    %v1908 = vadd.f32 %v1715, %v1907
    %v1909 = vpop.f32.mrf.mxu0
    %v1910 = vadd.f32 %v1717, %v1909
    %v1911 = vpop.f32.mrf.mxu0
    %v1912 = vadd.f32 %v1719, %v1911
    %v1913 = vpop.f32.mrf.mxu0
    %v1914 = vadd.f32 %v1721, %v1913
    %1915 = vmatprep.mubr.bf16.mxu0 %v767
    %1916 = vmatmul.mubr.bf16.gmra.mxu0 %v766
    %v1917 = vpop.f32.mrf.mxu0
    %v1918 = vadd.f32 %v1725, %v1917
    %v1919 = vpop.f32.mrf.mxu0
    %v1920 = vadd.f32 %v1727, %v1919
    %v1921 = vpop.f32.mrf.mxu0
    %v1922 = vadd.f32 %v1729, %v1921
    %v1923 = vpop.f32.mrf.mxu0
    %v1924 = vadd.f32 %v1731, %v1923
    %1925 = vmatprep.mubr.bf16.mxu0 %v771
    %1926 = vmatmul.mubr.bf16.gmra.mxu0 %v770
    %v1927 = vpop.f32.mrf.mxu0
    %v1928 = vadd.f32 %v1735, %v1927
    %v1929 = vpop.f32.mrf.mxu0
    %v1930 = vadd.f32 %v1737, %v1929
    %v1931 = vpop.f32.mrf.mxu0
    %v1932 = vadd.f32 %v1739, %v1931
    %v1933 = vpop.f32.mrf.mxu0
    %v1934 = vadd.f32 %v1741, %v1933
    %1935 = vmatprep.mubr.bf16.mxu0 %v775
    %1936 = vmatmul.mubr.bf16.gmra.mxu0 %v774
    %v1937 = vpop.f32.mrf.mxu0
    %v1938 = vadd.f32 %v1745, %v1937
    %v1939 = vpop.f32.mrf.mxu0
    %v1940 = vadd.f32 %v1747, %v1939
    %v1941 = vpop.f32.mrf.mxu0
    %v1942 = vadd.f32 %v1749, %v1941
    %v1943 = vpop.f32.mrf.mxu0
    %v1944 = vadd.f32 %v1751, %v1943
    %1945 = vmatprep.mubr.bf16.mxu0 %v779
    %1946 = vmatmul.mubr.bf16.gmra.mxu0 %v778
    %v1947 = vpop.f32.mrf.mxu0
    %v1948 = vadd.f32 %v1755, %v1947
    %v1949 = vpop.f32.mrf.mxu0
    %v1950 = vadd.f32 %v1757, %v1949
    %v1951 = vpop.f32.mrf.mxu0
    %v1952 = vadd.f32 %v1759, %v1951
    %v1953 = vpop.f32.mrf.mxu0
    %v1954 = vadd.f32 %v1761, %v1953
    %1955 = vdwg.mxu0
    %1956 = vmatprep.subr.bf16.mxu0 %v1345
    %1957 = vmatpush1.bf16.msra.mxu0 %v1344
    %1958 = vmatprep.subr.bf16.mxu0 %v1341
    %1959 = vmatpush1.bf16.msra.mxu0 %v1340
    %1960 = vmatprep.subr.bf16.mxu0 %v1337
    %1961 = vmatpush1.bf16.msra.mxu0 %v1336
    %1962 = vmatprep.subr.bf16.mxu0 %v1333
    %1963 = vmatpush1.bf16.msra.mxu0 %v1332
    %1964 = vmatprep.subr.bf16.mxu0 %v1329
    %1965 = vmatpush1.bf16.msra.mxu0 %v1328
    %1966 = vmatprep.subr.bf16.mxu0 %v1325
    %1967 = vmatpush1.bf16.msra.mxu0 %v1324
    %1968 = vmatprep.subr.bf16.mxu0 %v1321
    %1969 = vmatpush1.bf16.msra.mxu0 %v1320
    %1970 = vmatprep.subr.bf16.mxu0 %v1317
    %1971 = vmatpush1.bf16.msra.mxu0 %v1316
    %1972 = vmatprep.subr.bf16.mxu0 %v1377
    %1973 = vmatpush2.bf16.msra.mxu0 %v1376
    %1974 = vmatprep.subr.bf16.mxu0 %v1373
    %1975 = vmatpush2.bf16.msra.mxu0 %v1372
    %1976 = vmatprep.subr.bf16.mxu0 %v1369
    %1977 = vmatpush2.bf16.msra.mxu0 %v1368
    %1978 = vmatprep.subr.bf16.mxu0 %v1365
    %1979 = vmatpush2.bf16.msra.mxu0 %v1364
    %1980 = vmatprep.subr.bf16.mxu0 %v1361
    %1981 = vmatpush2.bf16.msra.mxu0 %v1360
    %1982 = vmatprep.subr.bf16.mxu0 %v1357
    %1983 = vmatpush2.bf16.msra.mxu0 %v1356
    %1984 = vmatprep.subr.bf16.mxu0 %v1353
    %1985 = vmatpush2.bf16.msra.mxu0 %v1352
    %1986 = vmatprep.subr.bf16.mxu0 %v1349
    %1987 = vmatpush2.bf16.msra.mxu0 %v1348
    %1988 = vmatprep.mubr.bf16.mxu0 %v717
    %1989 = vmatmul.mubr.bf16.gmra.mxu0 %v716
    %v1990 = vpop.f32.mrf.mxu0
    %v1991 = vadd.f32 %v921, %v1990
    %v1992 = vpop.f32.mrf.mxu0
    %v1993 = vadd.f32 %v925, %v1992
    %v1994 = vpop.f32.mrf.mxu0
    %v1995 = vadd.f32 %v921, %v1994
    %v1996 = vpop.f32.mrf.mxu0
    %v1997 = vadd.f32 %v925, %v1996
    %1998 = vmatprep.mubr.bf16.mxu0 %v721
    %1999 = vmatmul.mubr.bf16.gmra.mxu0 %v720
    %v2000 = vpop.f32.mrf.mxu0
    %v2001 = vadd.f32 %v921, %v2000
    %v2002 = vpop.f32.mrf.mxu0
    %v2003 = vadd.f32 %v925, %v2002
    %v2004 = vpop.f32.mrf.mxu0
    %v2005 = vadd.f32 %v921, %v2004
    %v2006 = vpop.f32.mrf.mxu0
    %v2007 = vadd.f32 %v925, %v2006
    %2008 = vmatprep.mubr.bf16.mxu0 %v725
    %2009 = vmatmul.mubr.bf16.gmra.mxu0 %v724
    %v2010 = vpop.f32.mrf.mxu0
    %v2011 = vadd.f32 %v921, %v2010
    %v2012 = vpop.f32.mrf.mxu0
    %v2013 = vadd.f32 %v925, %v2012
    %v2014 = vpop.f32.mrf.mxu0
    %v2015 = vadd.f32 %v921, %v2014
    %v2016 = vpop.f32.mrf.mxu0
    %v2017 = vadd.f32 %v925, %v2016
    %2018 = vmatprep.mubr.bf16.mxu0 %v729
    %2019 = vmatmul.mubr.bf16.gmra.mxu0 %v728
    %v2020 = vpop.f32.mrf.mxu0
    %v2021 = vadd.f32 %v921, %v2020
    %v2022 = vpop.f32.mrf.mxu0
    %v2023 = vadd.f32 %v925, %v2022
    %v2024 = vpop.f32.mrf.mxu0
    %v2025 = vadd.f32 %v921, %v2024
    %v2026 = vpop.f32.mrf.mxu0
    %v2027 = vadd.f32 %v925, %v2026
    %2028 = vmatprep.mubr.bf16.mxu0 %v733
    %2029 = vmatmul.mubr.bf16.gmra.mxu0 %v732
    %v2030 = vpop.f32.mrf.mxu0
    %v2031 = vadd.f32 %v921, %v2030
    %v2032 = vpop.f32.mrf.mxu0
    %v2033 = vadd.f32 %v925, %v2032
    %v2034 = vpop.f32.mrf.mxu0
    %v2035 = vadd.f32 %v921, %v2034
    %v2036 = vpop.f32.mrf.mxu0
    %v2037 = vadd.f32 %v925, %v2036
    %2038 = vmatprep.mubr.bf16.mxu0 %v737
    %2039 = vmatmul.mubr.bf16.gmra.mxu0 %v736
    %v2040 = vpop.f32.mrf.mxu0
    %v2041 = vadd.f32 %v921, %v2040
    %v2042 = vpop.f32.mrf.mxu0
    %v2043 = vadd.f32 %v925, %v2042
    %v2044 = vpop.f32.mrf.mxu0
    %v2045 = vadd.f32 %v921, %v2044
    %v2046 = vpop.f32.mrf.mxu0
    %v2047 = vadd.f32 %v925, %v2046
    %2048 = vmatprep.mubr.bf16.mxu0 %v741
    %2049 = vmatmul.mubr.bf16.gmra.mxu0 %v740
    %v2050 = vpop.f32.mrf.mxu0
    %v2051 = vadd.f32 %v921, %v2050
    %v2052 = vpop.f32.mrf.mxu0
    %v2053 = vadd.f32 %v925, %v2052
    %v2054 = vpop.f32.mrf.mxu0
    %v2055 = vadd.f32 %v921, %v2054
    %v2056 = vpop.f32.mrf.mxu0
    %v2057 = vadd.f32 %v925, %v2056
    %2058 = vmatprep.mubr.bf16.mxu0 %v745
    %2059 = vmatmul.mubr.bf16.gmra.mxu0 %v744
    %v2060 = vpop.f32.mrf.mxu0
    %v2061 = vadd.f32 %v921, %v2060
    %v2062 = vpop.f32.mrf.mxu0
    %v2063 = vadd.f32 %v925, %v2062
    %v2064 = vpop.f32.mrf.mxu0
    %v2065 = vadd.f32 %v921, %v2064
    %v2066 = vpop.f32.mrf.mxu0
    %v2067 = vadd.f32 %v925, %v2066
    %2068 = vmatprep.mubr.bf16.mxu0 %v749
    %2069 = vmatmul.mubr.bf16.gmra.mxu0 %v748
    %v2070 = vpop.f32.mrf.mxu0
    %v2071 = vadd.f32 %v921, %v2070
    %v2072 = vpop.f32.mrf.mxu0
    %v2073 = vadd.f32 %v925, %v2072
    %v2074 = vpop.f32.mrf.mxu0
    %v2075 = vadd.f32 %v921, %v2074
    %v2076 = vpop.f32.mrf.mxu0
    %v2077 = vadd.f32 %v925, %v2076
    %2078 = vmatprep.mubr.bf16.mxu0 %v753
    %2079 = vmatmul.mubr.bf16.gmra.mxu0 %v752
    %v2080 = vpop.f32.mrf.mxu0
    %v2081 = vadd.f32 %v921, %v2080
    %v2082 = vpop.f32.mrf.mxu0
    %v2083 = vadd.f32 %v925, %v2082
    %v2084 = vpop.f32.mrf.mxu0
    %v2085 = vadd.f32 %v921, %v2084
    %v2086 = vpop.f32.mrf.mxu0
    %v2087 = vadd.f32 %v925, %v2086
    %2088 = vmatprep.mubr.bf16.mxu0 %v757
    %2089 = vmatmul.mubr.bf16.gmra.mxu0 %v756
    %v2090 = vpop.f32.mrf.mxu0
    %v2091 = vadd.f32 %v921, %v2090
    %v2092 = vpop.f32.mrf.mxu0
    %v2093 = vadd.f32 %v925, %v2092
    %v2094 = vpop.f32.mrf.mxu0
    %v2095 = vadd.f32 %v921, %v2094
    %v2096 = vpop.f32.mrf.mxu0
    %v2097 = vadd.f32 %v925, %v2096
    %2098 = vmatprep.mubr.bf16.mxu0 %v761
    %2099 = vmatmul.mubr.bf16.gmra.mxu0 %v760
    %v2100 = vpop.f32.mrf.mxu0
    %v2101 = vadd.f32 %v921, %v2100
    %v2102 = vpop.f32.mrf.mxu0
    %v2103 = vadd.f32 %v925, %v2102
    %v2104 = vpop.f32.mrf.mxu0
    %v2105 = vadd.f32 %v921, %v2104
    %v2106 = vpop.f32.mrf.mxu0
    %v2107 = vadd.f32 %v925, %v2106
    %2108 = vmatprep.mubr.bf16.mxu0 %v765
    %2109 = vmatmul.mubr.bf16.gmra.mxu0 %v764
    %v2110 = vpop.f32.mrf.mxu0
    %v2111 = vadd.f32 %v921, %v2110
    %v2112 = vpop.f32.mrf.mxu0
    %v2113 = vadd.f32 %v925, %v2112
    %v2114 = vpop.f32.mrf.mxu0
    %v2115 = vadd.f32 %v921, %v2114
    %v2116 = vpop.f32.mrf.mxu0
    %v2117 = vadd.f32 %v925, %v2116
    %2118 = vmatprep.mubr.bf16.mxu0 %v769
    %2119 = vmatmul.mubr.bf16.gmra.mxu0 %v768
    %v2120 = vpop.f32.mrf.mxu0
    %v2121 = vadd.f32 %v921, %v2120
    %v2122 = vpop.f32.mrf.mxu0
    %v2123 = vadd.f32 %v925, %v2122
    %v2124 = vpop.f32.mrf.mxu0
    %v2125 = vadd.f32 %v921, %v2124
    %v2126 = vpop.f32.mrf.mxu0
    %v2127 = vadd.f32 %v925, %v2126
    %2128 = vmatprep.mubr.bf16.mxu0 %v773
    %2129 = vmatmul.mubr.bf16.gmra.mxu0 %v772
    %v2130 = vpop.f32.mrf.mxu0
    %v2131 = vadd.f32 %v921, %v2130
    %v2132 = vpop.f32.mrf.mxu0
    %v2133 = vadd.f32 %v925, %v2132
    %v2134 = vpop.f32.mrf.mxu0
    %v2135 = vadd.f32 %v921, %v2134
    %v2136 = vpop.f32.mrf.mxu0
    %v2137 = vadd.f32 %v925, %v2136
    %2138 = vmatprep.mubr.bf16.mxu0 %v777
    %2139 = vmatmul.mubr.bf16.gmra.mxu0 %v776
    %v2140 = vpop.f32.mrf.mxu0
    %v2141 = vadd.f32 %v921, %v2140
    %v2142 = vpop.f32.mrf.mxu0
    %v2143 = vadd.f32 %v925, %v2142
    %v2144 = vpop.f32.mrf.mxu0
    %v2145 = vadd.f32 %v921, %v2144
    %v2146 = vpop.f32.mrf.mxu0
    %v2147 = vadd.f32 %v925, %v2146
    %2148 = vdwg.mxu0
    %2149 = vmatprep.subr.bf16.mxu0 %v1409
    %2150 = vmatpush1.bf16.msra.mxu0 %v1408
    %2151 = vmatprep.subr.bf16.mxu0 %v1405
    %2152 = vmatpush1.bf16.msra.mxu0 %v1404
    %2153 = vmatprep.subr.bf16.mxu0 %v1401
    %2154 = vmatpush1.bf16.msra.mxu0 %v1400
    %2155 = vmatprep.subr.bf16.mxu0 %v1397
    %2156 = vmatpush1.bf16.msra.mxu0 %v1396
    %2157 = vmatprep.subr.bf16.mxu0 %v1393
    %2158 = vmatpush1.bf16.msra.mxu0 %v1392
    %2159 = vmatprep.subr.bf16.mxu0 %v1389
    %2160 = vmatpush1.bf16.msra.mxu0 %v1388
    %2161 = vmatprep.subr.bf16.mxu0 %v1385
    %2162 = vmatpush1.bf16.msra.mxu0 %v1384
    %2163 = vmatprep.subr.bf16.mxu0 %v1381
    %2164 = vmatpush1.bf16.msra.mxu0 %v1380
    %2165 = vmatprep.subr.bf16.mxu0 %v1441
    %2166 = vmatpush2.bf16.msra.mxu0 %v1440
    %2167 = vmatprep.subr.bf16.mxu0 %v1437
    %2168 = vmatpush2.bf16.msra.mxu0 %v1436
    %2169 = vmatprep.subr.bf16.mxu0 %v1433
    %2170 = vmatpush2.bf16.msra.mxu0 %v1432
    %2171 = vmatprep.subr.bf16.mxu0 %v1429
    %2172 = vmatpush2.bf16.msra.mxu0 %v1428
    %2173 = vmatprep.subr.bf16.mxu0 %v1425
    %2174 = vmatpush2.bf16.msra.mxu0 %v1424
    %2175 = vmatprep.subr.bf16.mxu0 %v1421
    %2176 = vmatpush2.bf16.msra.mxu0 %v1420
    %2177 = vmatprep.subr.bf16.mxu0 %v1417
    %2178 = vmatpush2.bf16.msra.mxu0 %v1416
    %2179 = vmatprep.subr.bf16.mxu0 %v1413
    %2180 = vmatpush2.bf16.msra.mxu0 %v1412
    %2181 = vmatprep.mubr.bf16.mxu0 %v719
    %2182 = vmatmul.mubr.bf16.gmra.mxu0 %v718
    %v2183 = vpop.f32.mrf.mxu0
    %v2184 = vadd.f32 %v1991, %v2183
    %v2185 = vpop.f32.mrf.mxu0
    %v2186 = vadd.f32 %v1993, %v2185
    %v2187 = vpop.f32.mrf.mxu0
    %v2188 = vadd.f32 %v1995, %v2187
    %v2189 = vpop.f32.mrf.mxu0
    %v2190 = vadd.f32 %v1997, %v2189
    %2191 = vmatprep.mubr.bf16.mxu0 %v723
    %2192 = vmatmul.mubr.bf16.gmra.mxu0 %v722
    %v2193 = vpop.f32.mrf.mxu0
    %v2194 = vadd.f32 %v2001, %v2193
    %v2195 = vpop.f32.mrf.mxu0
    %v2196 = vadd.f32 %v2003, %v2195
    %v2197 = vpop.f32.mrf.mxu0
    %v2198 = vadd.f32 %v2005, %v2197
    %v2199 = vpop.f32.mrf.mxu0
    %v2200 = vadd.f32 %v2007, %v2199
    %2201 = vmatprep.mubr.bf16.mxu0 %v727
    %2202 = vmatmul.mubr.bf16.gmra.mxu0 %v726
    %v2203 = vpop.f32.mrf.mxu0
    %v2204 = vadd.f32 %v2011, %v2203
    %v2205 = vpop.f32.mrf.mxu0
    %v2206 = vadd.f32 %v2013, %v2205
    %v2207 = vpop.f32.mrf.mxu0
    %v2208 = vadd.f32 %v2015, %v2207
    %v2209 = vpop.f32.mrf.mxu0
    %v2210 = vadd.f32 %v2017, %v2209
    %2211 = vmatprep.mubr.bf16.mxu0 %v731
    %2212 = vmatmul.mubr.bf16.gmra.mxu0 %v730
    %v2213 = vpop.f32.mrf.mxu0
    %v2214 = vadd.f32 %v2021, %v2213
    %v2215 = vpop.f32.mrf.mxu0
    %v2216 = vadd.f32 %v2023, %v2215
    %v2217 = vpop.f32.mrf.mxu0
    %v2218 = vadd.f32 %v2025, %v2217
    %v2219 = vpop.f32.mrf.mxu0
    %v2220 = vadd.f32 %v2027, %v2219
    %2221 = vmatprep.mubr.bf16.mxu0 %v735
    %2222 = vmatmul.mubr.bf16.gmra.mxu0 %v734
    %v2223 = vpop.f32.mrf.mxu0
    %v2224 = vadd.f32 %v2031, %v2223
    %v2225 = vpop.f32.mrf.mxu0
    %v2226 = vadd.f32 %v2033, %v2225
    %v2227 = vpop.f32.mrf.mxu0
    %v2228 = vadd.f32 %v2035, %v2227
    %v2229 = vpop.f32.mrf.mxu0
    %v2230 = vadd.f32 %v2037, %v2229
    %2231 = vmatprep.mubr.bf16.mxu0 %v739
    %2232 = vmatmul.mubr.bf16.gmra.mxu0 %v738
    %v2233 = vpop.f32.mrf.mxu0
    %v2234 = vadd.f32 %v2041, %v2233
    %v2235 = vpop.f32.mrf.mxu0
    %v2236 = vadd.f32 %v2043, %v2235
    %v2237 = vpop.f32.mrf.mxu0
    %v2238 = vadd.f32 %v2045, %v2237
    %v2239 = vpop.f32.mrf.mxu0
    %v2240 = vadd.f32 %v2047, %v2239
    %2241 = vmatprep.mubr.bf16.mxu0 %v743
    %2242 = vmatmul.mubr.bf16.gmra.mxu0 %v742
    %v2243 = vpop.f32.mrf.mxu0
    %v2244 = vadd.f32 %v2051, %v2243
    %v2245 = vpop.f32.mrf.mxu0
    %v2246 = vadd.f32 %v2053, %v2245
    %v2247 = vpop.f32.mrf.mxu0
    %v2248 = vadd.f32 %v2055, %v2247
    %v2249 = vpop.f32.mrf.mxu0
    %v2250 = vadd.f32 %v2057, %v2249
    %2251 = vmatprep.mubr.bf16.mxu0 %v747
    %2252 = vmatmul.mubr.bf16.gmra.mxu0 %v746
    %v2253 = vpop.f32.mrf.mxu0
    %v2254 = vadd.f32 %v2061, %v2253
    %v2255 = vpop.f32.mrf.mxu0
    %v2256 = vadd.f32 %v2063, %v2255
    %v2257 = vpop.f32.mrf.mxu0
    %v2258 = vadd.f32 %v2065, %v2257
    %v2259 = vpop.f32.mrf.mxu0
    %v2260 = vadd.f32 %v2067, %v2259
    %2261 = vmatprep.mubr.bf16.mxu0 %v751
    %2262 = vmatmul.mubr.bf16.gmra.mxu0 %v750
    %v2263 = vpop.f32.mrf.mxu0
    %v2264 = vadd.f32 %v2071, %v2263
    %v2265 = vpop.f32.mrf.mxu0
    %v2266 = vadd.f32 %v2073, %v2265
    %v2267 = vpop.f32.mrf.mxu0
    %v2268 = vadd.f32 %v2075, %v2267
    %v2269 = vpop.f32.mrf.mxu0
    %v2270 = vadd.f32 %v2077, %v2269
    %2271 = vmatprep.mubr.bf16.mxu0 %v755
    %2272 = vmatmul.mubr.bf16.gmra.mxu0 %v754
    %v2273 = vpop.f32.mrf.mxu0
    %v2274 = vadd.f32 %v2081, %v2273
    %v2275 = vpop.f32.mrf.mxu0
    %v2276 = vadd.f32 %v2083, %v2275
    %v2277 = vpop.f32.mrf.mxu0
    %v2278 = vadd.f32 %v2085, %v2277
    %v2279 = vpop.f32.mrf.mxu0
    %v2280 = vadd.f32 %v2087, %v2279
    %2281 = vmatprep.mubr.bf16.mxu0 %v759
    %2282 = vmatmul.mubr.bf16.gmra.mxu0 %v758
    %v2283 = vpop.f32.mrf.mxu0
    %v2284 = vadd.f32 %v2091, %v2283
    %v2285 = vpop.f32.mrf.mxu0
    %v2286 = vadd.f32 %v2093, %v2285
    %v2287 = vpop.f32.mrf.mxu0
    %v2288 = vadd.f32 %v2095, %v2287
    %v2289 = vpop.f32.mrf.mxu0
    %v2290 = vadd.f32 %v2097, %v2289
    %2291 = vmatprep.mubr.bf16.mxu0 %v763
    %2292 = vmatmul.mubr.bf16.gmra.mxu0 %v762
    %v2293 = vpop.f32.mrf.mxu0
    %v2294 = vadd.f32 %v2101, %v2293
    %v2295 = vpop.f32.mrf.mxu0
    %v2296 = vadd.f32 %v2103, %v2295
    %v2297 = vpop.f32.mrf.mxu0
    %v2298 = vadd.f32 %v2105, %v2297
    %v2299 = vpop.f32.mrf.mxu0
    %v2300 = vadd.f32 %v2107, %v2299
    %2301 = vmatprep.mubr.bf16.mxu0 %v767
    %2302 = vmatmul.mubr.bf16.gmra.mxu0 %v766
    %v2303 = vpop.f32.mrf.mxu0
    %v2304 = vadd.f32 %v2111, %v2303
    %v2305 = vpop.f32.mrf.mxu0
    %v2306 = vadd.f32 %v2113, %v2305
    %v2307 = vpop.f32.mrf.mxu0
    %v2308 = vadd.f32 %v2115, %v2307
    %v2309 = vpop.f32.mrf.mxu0
    %v2310 = vadd.f32 %v2117, %v2309
    %2311 = vmatprep.mubr.bf16.mxu0 %v771
    %2312 = vmatmul.mubr.bf16.gmra.mxu0 %v770
    %v2313 = vpop.f32.mrf.mxu0
    %v2314 = vadd.f32 %v2121, %v2313
    %v2315 = vpop.f32.mrf.mxu0
    %v2316 = vadd.f32 %v2123, %v2315
    %v2317 = vpop.f32.mrf.mxu0
    %v2318 = vadd.f32 %v2125, %v2317
    %v2319 = vpop.f32.mrf.mxu0
    %v2320 = vadd.f32 %v2127, %v2319
    %2321 = vmatprep.mubr.bf16.mxu0 %v775
    %2322 = vmatmul.mubr.bf16.gmra.mxu0 %v774
    %v2323 = vpop.f32.mrf.mxu0
    %v2324 = vadd.f32 %v2131, %v2323
    %v2325 = vpop.f32.mrf.mxu0
    %v2326 = vadd.f32 %v2133, %v2325
    %v2327 = vpop.f32.mrf.mxu0
    %v2328 = vadd.f32 %v2135, %v2327
    %v2329 = vpop.f32.mrf.mxu0
    %v2330 = vadd.f32 %v2137, %v2329
    %2331 = vmatprep.mubr.bf16.mxu0 %v779
    %2332 = vmatmul.mubr.bf16.gmra.mxu0 %v778
    %v2333 = vpop.f32.mrf.mxu0
    %v2334 = vadd.f32 %v2141, %v2333
    %v2335 = vpop.f32.mrf.mxu0
    %v2336 = vadd.f32 %v2143, %v2335
    %v2337 = vpop.f32.mrf.mxu0
    %v2338 = vadd.f32 %v2145, %v2337
    %v2339 = vpop.f32.mrf.mxu0
    %v2340 = vadd.f32 %v2147, %v2339
    %2341 = vdwg.mxu0
    %v2342 = vmax.f32 %v1798, 0.0
    %v2343 = vmax.f32 %v1800, 0.0
    %v2344 = vmax.f32 %v2184, 0.0
    %v2345 = vmax.f32 %v2186, 0.0
    %v2346 = vmax.f32 %v1802, 0.0
    %v2347 = vmax.f32 %v1804, 0.0
    %v2348 = vmax.f32 %v2188, 0.0
    %v2349 = vmax.f32 %v2190, 0.0
    %v2350 = vmax.f32 %v1808, 0.0
    %v2351 = vmax.f32 %v1810, 0.0
    %v2352 = vmax.f32 %v2194, 0.0
    %v2353 = vmax.f32 %v2196, 0.0
    %v2354 = vmax.f32 %v1812, 0.0
    %v2355 = vmax.f32 %v1814, 0.0
    %v2356 = vmax.f32 %v2198, 0.0
    %v2357 = vmax.f32 %v2200, 0.0
    %v2358 = vmax.f32 %v1818, 0.0
    %v2359 = vmax.f32 %v1820, 0.0
    %v2360 = vmax.f32 %v2204, 0.0
    %v2361 = vmax.f32 %v2206, 0.0
    %v2362 = vmax.f32 %v1822, 0.0
    %v2363 = vmax.f32 %v1824, 0.0
    %v2364 = vmax.f32 %v2208, 0.0
    %v2365 = vmax.f32 %v2210, 0.0
    %v2366 = vmax.f32 %v1828, 0.0
    %v2367 = vmax.f32 %v1830, 0.0
    %v2368 = vmax.f32 %v2214, 0.0
    %v2369 = vmax.f32 %v2216, 0.0
    %v2370 = vmax.f32 %v1832, 0.0
    %v2371 = vmax.f32 %v1834, 0.0
    %v2372 = vmax.f32 %v2218, 0.0
    %v2373 = vmax.f32 %v2220, 0.0
    %v2374 = vmax.f32 %v1838, 0.0
    %v2375 = vmax.f32 %v1840, 0.0
    %v2376 = vmax.f32 %v2224, 0.0
    %v2377 = vmax.f32 %v2226, 0.0
    %v2378 = vmax.f32 %v1842, 0.0
    %v2379 = vmax.f32 %v1844, 0.0
    %v2380 = vmax.f32 %v2228, 0.0
    %v2381 = vmax.f32 %v2230, 0.0
    %v2382 = vmax.f32 %v1848, 0.0
    %v2383 = vmax.f32 %v1850, 0.0
    %v2384 = vmax.f32 %v2234, 0.0
    %v2385 = vmax.f32 %v2236, 0.0
    %v2386 = vmax.f32 %v1852, 0.0
    %v2387 = vmax.f32 %v1854, 0.0
    %v2388 = vmax.f32 %v2238, 0.0
    %v2389 = vmax.f32 %v2240, 0.0
    %v2390 = vmax.f32 %v1858, 0.0
    %v2391 = vmax.f32 %v1860, 0.0
    %v2392 = vmax.f32 %v2244, 0.0
    %v2393 = vmax.f32 %v2246, 0.0
    %v2394 = vmax.f32 %v1862, 0.0
    %v2395 = vmax.f32 %v1864, 0.0
    %v2396 = vmax.f32 %v2248, 0.0
    %v2397 = vmax.f32 %v2250, 0.0
    %v2398 = vmax.f32 %v1868, 0.0
    %v2399 = vmax.f32 %v1870, 0.0
    %v2400 = vmax.f32 %v2254, 0.0
    %v2401 = vmax.f32 %v2256, 0.0
    %v2402 = vmax.f32 %v1872, 0.0
    %v2403 = vmax.f32 %v1874, 0.0
    %v2404 = vmax.f32 %v2258, 0.0
    %v2405 = vmax.f32 %v2260, 0.0
    %v2406 = vmax.f32 %v1878, 0.0
    %v2407 = vmax.f32 %v1880, 0.0
    %v2408 = vmax.f32 %v2264, 0.0
    %v2409 = vmax.f32 %v2266, 0.0
    %v2410 = vmax.f32 %v1882, 0.0
    %v2411 = vmax.f32 %v1884, 0.0
    %v2412 = vmax.f32 %v2268, 0.0
    %v2413 = vmax.f32 %v2270, 0.0
    %v2414 = vmax.f32 %v1888, 0.0
    %v2415 = vmax.f32 %v1890, 0.0
    %v2416 = vmax.f32 %v2274, 0.0
    %v2417 = vmax.f32 %v2276, 0.0
    %v2418 = vmax.f32 %v1892, 0.0
    %v2419 = vmax.f32 %v1894, 0.0
    %v2420 = vmax.f32 %v2278, 0.0
    %v2421 = vmax.f32 %v2280, 0.0
    %v2422 = vmax.f32 %v1898, 0.0
    %v2423 = vmax.f32 %v1900, 0.0
    %v2424 = vmax.f32 %v2284, 0.0
    %v2425 = vmax.f32 %v2286, 0.0
    %v2426 = vmax.f32 %v1902, 0.0
    %v2427 = vmax.f32 %v1904, 0.0
    %v2428 = vmax.f32 %v2288, 0.0
    %v2429 = vmax.f32 %v2290, 0.0
    %v2430 = vmax.f32 %v1908, 0.0
    %v2431 = vmax.f32 %v1910, 0.0
    %v2432 = vmax.f32 %v2294, 0.0
    %v2433 = vmax.f32 %v2296, 0.0
    %v2434 = vmax.f32 %v1912, 0.0
    %v2435 = vmax.f32 %v1914, 0.0
    %v2436 = vmax.f32 %v2298, 0.0
    %v2437 = vmax.f32 %v2300, 0.0
    %v2438 = vmax.f32 %v1918, 0.0
    %v2439 = vmax.f32 %v1920, 0.0
    %v2440 = vmax.f32 %v2304, 0.0
    %v2441 = vmax.f32 %v2306, 0.0
    %v2442 = vmax.f32 %v1922, 0.0
    %v2443 = vmax.f32 %v1924, 0.0
    %v2444 = vmax.f32 %v2308, 0.0
    %v2445 = vmax.f32 %v2310, 0.0
    %v2446 = vmax.f32 %v1928, 0.0
    %v2447 = vmax.f32 %v1930, 0.0
    %v2448 = vmax.f32 %v2314, 0.0
    %v2449 = vmax.f32 %v2316, 0.0
    %v2450 = vmax.f32 %v1932, 0.0
    %v2451 = vmax.f32 %v1934, 0.0
    %v2452 = vmax.f32 %v2318, 0.0
    %v2453 = vmax.f32 %v2320, 0.0
    %v2454 = vmax.f32 %v1938, 0.0
    %v2455 = vmax.f32 %v1940, 0.0
    %v2456 = vmax.f32 %v2324, 0.0
    %v2457 = vmax.f32 %v2326, 0.0
    %v2458 = vmax.f32 %v1942, 0.0
    %v2459 = vmax.f32 %v1944, 0.0
    %v2460 = vmax.f32 %v2328, 0.0
    %v2461 = vmax.f32 %v2330, 0.0
    %v2462 = vmax.f32 %v1948, 0.0
    %v2463 = vmax.f32 %v1950, 0.0
    %v2464 = vmax.f32 %v2334, 0.0
    %v2465 = vmax.f32 %v2336, 0.0
    %v2466 = vmax.f32 %v1952, 0.0
    %v2467 = vmax.f32 %v1954, 0.0
    %v2468 = vmax.f32 %v2338, 0.0
    %v2469 = vmax.f32 %v2340, 0.0
    %v2470 = vpack.c.bf16 %v2346, %v2342
    %v2471 = vpack.c.bf16 %v2347, %v2343
    %v2472 = vpack.c.bf16 %v2348, %v2344
    %v2473 = vpack.c.bf16 %v2349, %v2345
    %v2474 = vpack.c.bf16 %v2354, %v2350
    %v2475 = vpack.c.bf16 %v2355, %v2351
    %v2476 = vpack.c.bf16 %v2356, %v2352
    %v2477 = vpack.c.bf16 %v2357, %v2353
    %v2478 = vpack.c.bf16 %v2362, %v2358
    %v2479 = vpack.c.bf16 %v2363, %v2359
    %v2480 = vpack.c.bf16 %v2364, %v2360
    %v2481 = vpack.c.bf16 %v2365, %v2361
    %v2482 = vpack.c.bf16 %v2370, %v2366
    %v2483 = vpack.c.bf16 %v2371, %v2367
    %v2484 = vpack.c.bf16 %v2372, %v2368
    %v2485 = vpack.c.bf16 %v2373, %v2369
    %v2486 = vpack.c.bf16 %v2378, %v2374
    %v2487 = vpack.c.bf16 %v2379, %v2375
    %v2488 = vpack.c.bf16 %v2380, %v2376
    %v2489 = vpack.c.bf16 %v2381, %v2377
    %v2490 = vpack.c.bf16 %v2386, %v2382
    %v2491 = vpack.c.bf16 %v2387, %v2383
    %v2492 = vpack.c.bf16 %v2388, %v2384
    %v2493 = vpack.c.bf16 %v2389, %v2385
    %v2494 = vpack.c.bf16 %v2394, %v2390
    %v2495 = vpack.c.bf16 %v2395, %v2391
    %v2496 = vpack.c.bf16 %v2396, %v2392
    %v2497 = vpack.c.bf16 %v2397, %v2393
    %v2498 = vpack.c.bf16 %v2402, %v2398
    %v2499 = vpack.c.bf16 %v2403, %v2399
    %v2500 = vpack.c.bf16 %v2404, %v2400
    %v2501 = vpack.c.bf16 %v2405, %v2401
    %v2502 = vpack.c.bf16 %v2410, %v2406
    %v2503 = vpack.c.bf16 %v2411, %v2407
    %v2504 = vpack.c.bf16 %v2412, %v2408
    %v2505 = vpack.c.bf16 %v2413, %v2409
    %v2506 = vpack.c.bf16 %v2418, %v2414
    %v2507 = vpack.c.bf16 %v2419, %v2415
    %v2508 = vpack.c.bf16 %v2420, %v2416
    %v2509 = vpack.c.bf16 %v2421, %v2417
    %v2510 = vpack.c.bf16 %v2426, %v2422
    %v2511 = vpack.c.bf16 %v2427, %v2423
    %v2512 = vpack.c.bf16 %v2428, %v2424
    %v2513 = vpack.c.bf16 %v2429, %v2425
    %v2514 = vpack.c.bf16 %v2434, %v2430
    %v2515 = vpack.c.bf16 %v2435, %v2431
    %v2516 = vpack.c.bf16 %v2436, %v2432
    %v2517 = vpack.c.bf16 %v2437, %v2433
    %v2518 = vpack.c.bf16 %v2442, %v2438
    %v2519 = vpack.c.bf16 %v2443, %v2439
    %v2520 = vpack.c.bf16 %v2444, %v2440
    %v2521 = vpack.c.bf16 %v2445, %v2441
    %v2522 = vpack.c.bf16 %v2450, %v2446
    %v2523 = vpack.c.bf16 %v2451, %v2447
    %v2524 = vpack.c.bf16 %v2452, %v2448
    %v2525 = vpack.c.bf16 %v2453, %v2449
    %v2526 = vpack.c.bf16 %v2458, %v2454
    %v2527 = vpack.c.bf16 %v2459, %v2455
    %v2528 = vpack.c.bf16 %v2460, %v2456
    %v2529 = vpack.c.bf16 %v2461, %v2457
    %v2530 = vpack.c.bf16 %v2466, %v2462
    %v2531 = vpack.c.bf16 %v2467, %v2463
    %v2532 = vpack.c.bf16 %v2468, %v2464
    %v2533 = vpack.c.bf16 %v2469, %v2465
    %v2534 = vld [vmem:[#allocation4] sm:$0xff]
    %v2535 = vld [vmem:[#allocation4 + $0x8] sm:$0xff]
    %v2536 = vld [vmem:[#allocation4 + $0x10] sm:$0xff]
    %v2537 = vld [vmem:[#allocation4 + $0x18] sm:$0xff]
    %v2538 = vld [vmem:[#allocation4 + $0x20] sm:$0xff]
    %v2539 = vld [vmem:[#allocation4 + $0x28] sm:$0xff]
    %v2540 = vld [vmem:[#allocation4 + $0x30] sm:$0xff]
    %v2541 = vld [vmem:[#allocation4 + $0x38] sm:$0xff]
    %v2542 = vld [vmem:[#allocation4 + $0x40] sm:$0xff]
    %v2543 = vld [vmem:[#allocation4 + $0x48] sm:$0xff]
    %v2544 = vld [vmem:[#allocation4 + $0x50] sm:$0xff]
    %v2545 = vld [vmem:[#allocation4 + $0x58] sm:$0xff]
    %v2546 = vld [vmem:[#allocation4 + $0x60] sm:$0xff]
    %v2547 = vld [vmem:[#allocation4 + $0x68] sm:$0xff]
    %v2548 = vld [vmem:[#allocation4 + $0x70] sm:$0xff]
    %v2549 = vld [vmem:[#allocation4 + $0x78] sm:$0xff]
    %v2550 = vld [vmem:[#allocation4 + $0x80] sm:$0xff]
    %v2551 = vld [vmem:[#allocation4 + $0x88] sm:$0xff]
    %v2552 = vld [vmem:[#allocation4 + $0x90] sm:$0xff]
    %v2553 = vld [vmem:[#allocation4 + $0x98] sm:$0xff]
    %v2554 = vld [vmem:[#allocation4 + $0xa0] sm:$0xff]
    %v2555 = vld [vmem:[#allocation4 + $0xa8] sm:$0xff]
    %v2556 = vld [vmem:[#allocation4 + $0xb0] sm:$0xff]
    %v2557 = vld [vmem:[#allocation4 + $0xb8] sm:$0xff]
    %v2558 = vld [vmem:[#allocation4 + $0xc0] sm:$0xff]
    %v2559 = vld [vmem:[#allocation4 + $0xc8] sm:$0xff]
    %v2560 = vld [vmem:[#allocation4 + $0xd0] sm:$0xff]
    %v2561 = vld [vmem:[#allocation4 + $0xd8] sm:$0xff]
    %v2562 = vld [vmem:[#allocation4 + $0xe0] sm:$0xff]
    %v2563 = vld [vmem:[#allocation4 + $0xe8] sm:$0xff]
    %v2564 = vld [vmem:[#allocation4 + $0xf0] sm:$0xff]
    %v2565 = vld [vmem:[#allocation4 + $0xf8] sm:$0xff]
    %v2566 = vld [vmem:[#allocation4 + $0x100] sm:$0xff]
    %v2567 = vld [vmem:[#allocation4 + $0x108] sm:$0xff]
    %v2568 = vld [vmem:[#allocation4 + $0x110] sm:$0xff]
    %v2569 = vld [vmem:[#allocation4 + $0x118] sm:$0xff]
    %v2570 = vld [vmem:[#allocation4 + $0x120] sm:$0xff]
    %v2571 = vld [vmem:[#allocation4 + $0x128] sm:$0xff]
    %v2572 = vld [vmem:[#allocation4 + $0x130] sm:$0xff]
    %v2573 = vld [vmem:[#allocation4 + $0x138] sm:$0xff]
    %v2574 = vld [vmem:[#allocation4 + $0x140] sm:$0xff]
    %v2575 = vld [vmem:[#allocation4 + $0x148] sm:$0xff]
    %v2576 = vld [vmem:[#allocation4 + $0x150] sm:$0xff]
    %v2577 = vld [vmem:[#allocation4 + $0x158] sm:$0xff]
    %v2578 = vld [vmem:[#allocation4 + $0x160] sm:$0xff]
    %v2579 = vld [vmem:[#allocation4 + $0x168] sm:$0xff]
    %v2580 = vld [vmem:[#allocation4 + $0x170] sm:$0xff]
    %v2581 = vld [vmem:[#allocation4 + $0x178] sm:$0xff]
    %v2582 = vld [vmem:[#allocation4 + $0x180] sm:$0xff]
    %v2583 = vld [vmem:[#allocation4 + $0x188] sm:$0xff]
    %v2584 = vld [vmem:[#allocation4 + $0x190] sm:$0xff]
    %v2585 = vld [vmem:[#allocation4 + $0x198] sm:$0xff]
    %v2586 = vld [vmem:[#allocation4 + $0x1a0] sm:$0xff]
    %v2587 = vld [vmem:[#allocation4 + $0x1a8] sm:$0xff]
    %v2588 = vld [vmem:[#allocation4 + $0x1b0] sm:$0xff]
    %v2589 = vld [vmem:[#allocation4 + $0x1b8] sm:$0xff]
    %v2590 = vld [vmem:[#allocation4 + $0x1c0] sm:$0xff]
    %v2591 = vld [vmem:[#allocation4 + $0x1c8] sm:$0xff]
    %v2592 = vld [vmem:[#allocation4 + $0x1d0] sm:$0xff]
    %v2593 = vld [vmem:[#allocation4 + $0x1d8] sm:$0xff]
    %v2594 = vld [vmem:[#allocation4 + $0x1e0] sm:$0xff]
    %v2595 = vld [vmem:[#allocation4 + $0x1e8] sm:$0xff]
    %v2596 = vld [vmem:[#allocation4 + $0x1f0] sm:$0xff]
    %v2597 = vld [vmem:[#allocation4 + $0x1f8] sm:$0xff]
    %v2598 = vld [vmem:[#allocation4 + $0x200] sm:$0xff]
    %v2599 = vld [vmem:[#allocation4 + $0x208] sm:$0xff]
    %v2600 = vld [vmem:[#allocation4 + $0x210] sm:$0xff]
    %v2601 = vld [vmem:[#allocation4 + $0x218] sm:$0xff]
    %v2602 = vld [vmem:[#allocation4 + $0x220] sm:$0xff]
    %v2603 = vld [vmem:[#allocation4 + $0x228] sm:$0xff]
    %v2604 = vld [vmem:[#allocation4 + $0x230] sm:$0xff]
    %v2605 = vld [vmem:[#allocation4 + $0x238] sm:$0xff]
    %v2606 = vld [vmem:[#allocation4 + $0x240] sm:$0xff]
    %v2607 = vld [vmem:[#allocation4 + $0x248] sm:$0xff]
    %v2608 = vld [vmem:[#allocation4 + $0x250] sm:$0xff]
    %v2609 = vld [vmem:[#allocation4 + $0x258] sm:$0xff]
    %v2610 = vld [vmem:[#allocation4 + $0x260] sm:$0xff]
    %v2611 = vld [vmem:[#allocation4 + $0x268] sm:$0xff]
    %v2612 = vld [vmem:[#allocation4 + $0x270] sm:$0xff]
    %v2613 = vld [vmem:[#allocation4 + $0x278] sm:$0xff]
    %v2614 = vld [vmem:[#allocation4 + $0x280] sm:$0xff]
    %v2615 = vld [vmem:[#allocation4 + $0x288] sm:$0xff]
    %v2616 = vld [vmem:[#allocation4 + $0x290] sm:$0xff]
    %v2617 = vld [vmem:[#allocation4 + $0x298] sm:$0xff]
    %v2618 = vld [vmem:[#allocation4 + $0x2a0] sm:$0xff]
    %v2619 = vld [vmem:[#allocation4 + $0x2a8] sm:$0xff]
    %v2620 = vld [vmem:[#allocation4 + $0x2b0] sm:$0xff]
    %v2621 = vld [vmem:[#allocation4 + $0x2b8] sm:$0xff]
    %v2622 = vld [vmem:[#allocation4 + $0x2c0] sm:$0xff]
    %v2623 = vld [vmem:[#allocation4 + $0x2c8] sm:$0xff]
    %v2624 = vld [vmem:[#allocation4 + $0x2d0] sm:$0xff]
    %v2625 = vld [vmem:[#allocation4 + $0x2d8] sm:$0xff]
    %v2626 = vld [vmem:[#allocation4 + $0x2e0] sm:$0xff]
    %v2627 = vld [vmem:[#allocation4 + $0x2e8] sm:$0xff]
    %v2628 = vld [vmem:[#allocation4 + $0x2f0] sm:$0xff]
    %v2629 = vld [vmem:[#allocation4 + $0x2f8] sm:$0xff]
    %v2630 = vld [vmem:[#allocation4 + $0x300] sm:$0xff]
    %v2631 = vld [vmem:[#allocation4 + $0x308] sm:$0xff]
    %v2632 = vld [vmem:[#allocation4 + $0x310] sm:$0xff]
    %v2633 = vld [vmem:[#allocation4 + $0x318] sm:$0xff]
    %v2634 = vld [vmem:[#allocation4 + $0x320] sm:$0xff]
    %v2635 = vld [vmem:[#allocation4 + $0x328] sm:$0xff]
    %v2636 = vld [vmem:[#allocation4 + $0x330] sm:$0xff]
    %v2637 = vld [vmem:[#allocation4 + $0x338] sm:$0xff]
    %v2638 = vld [vmem:[#allocation4 + $0x340] sm:$0xff]
    %v2639 = vld [vmem:[#allocation4 + $0x348] sm:$0xff]
    %v2640 = vld [vmem:[#allocation4 + $0x350] sm:$0xff]
    %v2641 = vld [vmem:[#allocation4 + $0x358] sm:$0xff]
    %v2642 = vld [vmem:[#allocation4 + $0x360] sm:$0xff]
    %v2643 = vld [vmem:[#allocation4 + $0x368] sm:$0xff]
    %v2644 = vld [vmem:[#allocation4 + $0x370] sm:$0xff]
    %v2645 = vld [vmem:[#allocation4 + $0x378] sm:$0xff]
    %v2646 = vld [vmem:[#allocation4 + $0x380] sm:$0xff]
    %v2647 = vld [vmem:[#allocation4 + $0x388] sm:$0xff]
    %v2648 = vld [vmem:[#allocation4 + $0x390] sm:$0xff]
    %v2649 = vld [vmem:[#allocation4 + $0x398] sm:$0xff]
    %v2650 = vld [vmem:[#allocation4 + $0x3a0] sm:$0xff]
    %v2651 = vld [vmem:[#allocation4 + $0x3a8] sm:$0xff]
    %v2652 = vld [vmem:[#allocation4 + $0x3b0] sm:$0xff]
    %v2653 = vld [vmem:[#allocation4 + $0x3b8] sm:$0xff]
    %v2654 = vld [vmem:[#allocation4 + $0x3c0] sm:$0xff]
    %v2655 = vld [vmem:[#allocation4 + $0x3c8] sm:$0xff]
    %v2656 = vld [vmem:[#allocation4 + $0x3d0] sm:$0xff]
    %v2657 = vld [vmem:[#allocation4 + $0x3d8] sm:$0xff]
    %v2658 = vld [vmem:[#allocation4 + $0x3e0] sm:$0xff]
    %v2659 = vld [vmem:[#allocation4 + $0x3e8] sm:$0xff]
    %v2660 = vld [vmem:[#allocation4 + $0x3f0] sm:$0xff]
    %v2661 = vld [vmem:[#allocation4 + $0x3f8] sm:$0xff]
    %v2662 = vld [vmem:[%s6] sm:$0xf]
    %v2664 = vlaneseq
    %v2665 = vshrl.u32 %v2664, 7
    %v2666 = vsub.s32 0, %v2665
    %v2667 = vrot.slane %v2662, %v2666
    %v2668 = vlaneseq
    %v2669 = vshrl.u32 %v2668, 7
    %v2670 = vsub.s32 1, %v2669
    %v2671 = vrot.slane %v2662, %v2670
    %v2672 = vlaneseq
    %v2673 = vshrl.u32 %v2672, 7
    %v2674 = vsub.s32 2, %v2673
    %v2675 = vrot.slane %v2662, %v2674
    %v2676 = vlaneseq
    %v2677 = vshrl.u32 %v2676, 7
    %v2678 = vsub.s32 3, %v2677
    %v2679 = vrot.slane %v2662, %v2678
    %v2812 = vunpack.c.l.b16 %v2534
    %v2813 = vunpack.c.h.b16 %v2534
    %v2814 = vunpack.c.l.b16 %v2535
    %v2815 = vunpack.c.h.b16 %v2535
    %v2816 = vunpack.c.l.b16 %v2536
    %v2817 = vunpack.c.h.b16 %v2536
    %v2818 = vunpack.c.l.b16 %v2537
    %v2819 = vunpack.c.h.b16 %v2537
    %v2820 = vunpack.c.l.b16 %v2538
    %v2821 = vunpack.c.h.b16 %v2538
    %v2822 = vunpack.c.l.b16 %v2539
    %v2823 = vunpack.c.h.b16 %v2539
    %v2824 = vunpack.c.l.b16 %v2540
    %v2825 = vunpack.c.h.b16 %v2540
    %v2826 = vunpack.c.l.b16 %v2541
    %v2827 = vunpack.c.h.b16 %v2541
    %v2828 = vunpack.c.l.b16 %v2542
    %v2829 = vunpack.c.h.b16 %v2542
    %v2830 = vunpack.c.l.b16 %v2543
    %v2831 = vunpack.c.h.b16 %v2543
    %v2832 = vunpack.c.l.b16 %v2544
    %v2833 = vunpack.c.h.b16 %v2544
    %v2834 = vunpack.c.l.b16 %v2545
    %v2835 = vunpack.c.h.b16 %v2545
    %v2836 = vunpack.c.l.b16 %v2546
    %v2837 = vunpack.c.h.b16 %v2546
    %v2838 = vunpack.c.l.b16 %v2547
    %v2839 = vunpack.c.h.b16 %v2547
    %v2840 = vunpack.c.l.b16 %v2548
    %v2841 = vunpack.c.h.b16 %v2548
    %v2842 = vunpack.c.l.b16 %v2549
    %v2843 = vunpack.c.h.b16 %v2549
    %v2844 = vunpack.c.l.b16 %v2550
    %v2845 = vunpack.c.h.b16 %v2550
    %v2846 = vunpack.c.l.b16 %v2551
    %v2847 = vunpack.c.h.b16 %v2551
    %v2848 = vunpack.c.l.b16 %v2552
    %v2849 = vunpack.c.h.b16 %v2552
    %v2850 = vunpack.c.l.b16 %v2553
    %v2851 = vunpack.c.h.b16 %v2553
    %v2852 = vunpack.c.l.b16 %v2554
    %v2853 = vunpack.c.h.b16 %v2554
    %v2854 = vunpack.c.l.b16 %v2555
    %v2855 = vunpack.c.h.b16 %v2555
    %v2856 = vunpack.c.l.b16 %v2556
    %v2857 = vunpack.c.h.b16 %v2556
    %v2858 = vunpack.c.l.b16 %v2557
    %v2859 = vunpack.c.h.b16 %v2557
    %v2860 = vunpack.c.l.b16 %v2558
    %v2861 = vunpack.c.h.b16 %v2558
    %v2862 = vunpack.c.l.b16 %v2559
    %v2863 = vunpack.c.h.b16 %v2559
    %v2864 = vunpack.c.l.b16 %v2560
    %v2865 = vunpack.c.h.b16 %v2560
    %v2866 = vunpack.c.l.b16 %v2561
    %v2867 = vunpack.c.h.b16 %v2561
    %v2868 = vunpack.c.l.b16 %v2562
    %v2869 = vunpack.c.h.b16 %v2562
    %v2870 = vunpack.c.l.b16 %v2563
    %v2871 = vunpack.c.h.b16 %v2563
    %v2872 = vunpack.c.l.b16 %v2564
    %v2873 = vunpack.c.h.b16 %v2564
    %v2874 = vunpack.c.l.b16 %v2565
    %v2875 = vunpack.c.h.b16 %v2565
    %v2876 = vunpack.c.l.b16 %v2566
    %v2877 = vunpack.c.h.b16 %v2566
    %v2878 = vunpack.c.l.b16 %v2567
    %v2879 = vunpack.c.h.b16 %v2567
    %v2880 = vunpack.c.l.b16 %v2568
    %v2881 = vunpack.c.h.b16 %v2568
    %v2882 = vunpack.c.l.b16 %v2569
    %v2883 = vunpack.c.h.b16 %v2569
    %v2884 = vunpack.c.l.b16 %v2570
    %v2885 = vunpack.c.h.b16 %v2570
    %v2886 = vunpack.c.l.b16 %v2571
    %v2887 = vunpack.c.h.b16 %v2571
    %v2888 = vunpack.c.l.b16 %v2572
    %v2889 = vunpack.c.h.b16 %v2572
    %v2890 = vunpack.c.l.b16 %v2573
    %v2891 = vunpack.c.h.b16 %v2573
    %v2892 = vunpack.c.l.b16 %v2574
    %v2893 = vunpack.c.h.b16 %v2574
    %v2894 = vunpack.c.l.b16 %v2575
    %v2895 = vunpack.c.h.b16 %v2575
    %v2896 = vunpack.c.l.b16 %v2576
    %v2897 = vunpack.c.h.b16 %v2576
    %v2898 = vunpack.c.l.b16 %v2577
    %v2899 = vunpack.c.h.b16 %v2577
    %v2900 = vunpack.c.l.b16 %v2578
    %v2901 = vunpack.c.h.b16 %v2578
    %v2902 = vunpack.c.l.b16 %v2579
    %v2903 = vunpack.c.h.b16 %v2579
    %v2904 = vunpack.c.l.b16 %v2580
    %v2905 = vunpack.c.h.b16 %v2580
    %v2906 = vunpack.c.l.b16 %v2581
    %v2907 = vunpack.c.h.b16 %v2581
    %v2908 = vunpack.c.l.b16 %v2582
    %v2909 = vunpack.c.h.b16 %v2582
    %v2910 = vunpack.c.l.b16 %v2583
    %v2911 = vunpack.c.h.b16 %v2583
    %v2912 = vunpack.c.l.b16 %v2584
    %v2913 = vunpack.c.h.b16 %v2584
    %v2914 = vunpack.c.l.b16 %v2585
    %v2915 = vunpack.c.h.b16 %v2585
    %v2916 = vunpack.c.l.b16 %v2586
    %v2917 = vunpack.c.h.b16 %v2586
    %v2918 = vunpack.c.l.b16 %v2587
    %v2919 = vunpack.c.h.b16 %v2587
    %v2920 = vunpack.c.l.b16 %v2588
    %v2921 = vunpack.c.h.b16 %v2588
    %v2922 = vunpack.c.l.b16 %v2589
    %v2923 = vunpack.c.h.b16 %v2589
    %v2924 = vunpack.c.l.b16 %v2590
    %v2925 = vunpack.c.h.b16 %v2590
    %v2926 = vunpack.c.l.b16 %v2591
    %v2927 = vunpack.c.h.b16 %v2591
    %v2928 = vunpack.c.l.b16 %v2592
    %v2929 = vunpack.c.h.b16 %v2592
    %v2930 = vunpack.c.l.b16 %v2593
    %v2931 = vunpack.c.h.b16 %v2593
    %v2932 = vunpack.c.l.b16 %v2594
    %v2933 = vunpack.c.h.b16 %v2594
    %v2934 = vunpack.c.l.b16 %v2595
    %v2935 = vunpack.c.h.b16 %v2595
    %v2936 = vunpack.c.l.b16 %v2596
    %v2937 = vunpack.c.h.b16 %v2596
    %v2938 = vunpack.c.l.b16 %v2597
    %v2939 = vunpack.c.h.b16 %v2597
    %v2940 = vunpack.c.l.b16 %v2598
    %v2941 = vunpack.c.h.b16 %v2598
    %v2942 = vunpack.c.l.b16 %v2599
    %v2943 = vunpack.c.h.b16 %v2599
    %v2944 = vunpack.c.l.b16 %v2600
    %v2945 = vunpack.c.h.b16 %v2600
    %v2946 = vunpack.c.l.b16 %v2601
    %v2947 = vunpack.c.h.b16 %v2601
    %v2948 = vunpack.c.l.b16 %v2602
    %v2949 = vunpack.c.h.b16 %v2602
    %v2950 = vunpack.c.l.b16 %v2603
    %v2951 = vunpack.c.h.b16 %v2603
    %v2952 = vunpack.c.l.b16 %v2604
    %v2953 = vunpack.c.h.b16 %v2604
    %v2954 = vunpack.c.l.b16 %v2605
    %v2955 = vunpack.c.h.b16 %v2605
    %v2956 = vunpack.c.l.b16 %v2606
    %v2957 = vunpack.c.h.b16 %v2606
    %v2958 = vunpack.c.l.b16 %v2607
    %v2959 = vunpack.c.h.b16 %v2607
    %v2960 = vunpack.c.l.b16 %v2608
    %v2961 = vunpack.c.h.b16 %v2608
    %v2962 = vunpack.c.l.b16 %v2609
    %v2963 = vunpack.c.h.b16 %v2609
    %v2964 = vunpack.c.l.b16 %v2610
    %v2965 = vunpack.c.h.b16 %v2610
    %v2966 = vunpack.c.l.b16 %v2611
    %v2967 = vunpack.c.h.b16 %v2611
    %v2968 = vunpack.c.l.b16 %v2612
    %v2969 = vunpack.c.h.b16 %v2612
    %v2970 = vunpack.c.l.b16 %v2613
    %v2971 = vunpack.c.h.b16 %v2613
    %v2972 = vunpack.c.l.b16 %v2614
    %v2973 = vunpack.c.h.b16 %v2614
    %v2974 = vunpack.c.l.b16 %v2615
    %v2975 = vunpack.c.h.b16 %v2615
    %v2976 = vunpack.c.l.b16 %v2616
    %v2977 = vunpack.c.h.b16 %v2616
    %v2978 = vunpack.c.l.b16 %v2617
    %v2979 = vunpack.c.h.b16 %v2617
    %v2980 = vunpack.c.l.b16 %v2618
    %v2981 = vunpack.c.h.b16 %v2618
    %v2982 = vunpack.c.l.b16 %v2619
    %v2983 = vunpack.c.h.b16 %v2619
    %v2984 = vunpack.c.l.b16 %v2620
    %v2985 = vunpack.c.h.b16 %v2620
    %v2986 = vunpack.c.l.b16 %v2621
    %v2987 = vunpack.c.h.b16 %v2621
    %v2988 = vunpack.c.l.b16 %v2622
    %v2989 = vunpack.c.h.b16 %v2622
    %v2990 = vunpack.c.l.b16 %v2623
    %v2991 = vunpack.c.h.b16 %v2623
    %v2992 = vunpack.c.l.b16 %v2624
    %v2993 = vunpack.c.h.b16 %v2624
    %v2994 = vunpack.c.l.b16 %v2625
    %v2995 = vunpack.c.h.b16 %v2625
    %v2996 = vunpack.c.l.b16 %v2626
    %v2997 = vunpack.c.h.b16 %v2626
    %v2998 = vunpack.c.l.b16 %v2627
    %v2999 = vunpack.c.h.b16 %v2627
    %v3000 = vunpack.c.l.b16 %v2628
    %v3001 = vunpack.c.h.b16 %v2628
    %v3002 = vunpack.c.l.b16 %v2629
    %v3003 = vunpack.c.h.b16 %v2629
    %v3004 = vunpack.c.l.b16 %v2630
    %v3005 = vunpack.c.h.b16 %v2630
    %v3006 = vunpack.c.l.b16 %v2631
    %v3007 = vunpack.c.h.b16 %v2631
    %v3008 = vunpack.c.l.b16 %v2632
    %v3009 = vunpack.c.h.b16 %v2632
    %v3010 = vunpack.c.l.b16 %v2633
    %v3011 = vunpack.c.h.b16 %v2633
    %v3012 = vunpack.c.l.b16 %v2634
    %v3013 = vunpack.c.h.b16 %v2634
    %v3014 = vunpack.c.l.b16 %v2635
    %v3015 = vunpack.c.h.b16 %v2635
    %v3016 = vunpack.c.l.b16 %v2636
    %v3017 = vunpack.c.h.b16 %v2636
    %v3018 = vunpack.c.l.b16 %v2637
    %v3019 = vunpack.c.h.b16 %v2637
    %v3020 = vunpack.c.l.b16 %v2638
    %v3021 = vunpack.c.h.b16 %v2638
    %v3022 = vunpack.c.l.b16 %v2639
    %v3023 = vunpack.c.h.b16 %v2639
    %v3024 = vunpack.c.l.b16 %v2640
    %v3025 = vunpack.c.h.b16 %v2640
    %v3026 = vunpack.c.l.b16 %v2641
    %v3027 = vunpack.c.h.b16 %v2641
    %v3028 = vunpack.c.l.b16 %v2642
    %v3029 = vunpack.c.h.b16 %v2642
    %v3030 = vunpack.c.l.b16 %v2643
    %v3031 = vunpack.c.h.b16 %v2643
    %v3032 = vunpack.c.l.b16 %v2644
    %v3033 = vunpack.c.h.b16 %v2644
    %v3034 = vunpack.c.l.b16 %v2645
    %v3035 = vunpack.c.h.b16 %v2645
    %v3036 = vunpack.c.l.b16 %v2646
    %v3037 = vunpack.c.h.b16 %v2646
    %v3038 = vunpack.c.l.b16 %v2647
    %v3039 = vunpack.c.h.b16 %v2647
    %v3040 = vunpack.c.l.b16 %v2648
    %v3041 = vunpack.c.h.b16 %v2648
    %v3042 = vunpack.c.l.b16 %v2649
    %v3043 = vunpack.c.h.b16 %v2649
    %v3044 = vunpack.c.l.b16 %v2650
    %v3045 = vunpack.c.h.b16 %v2650
    %v3046 = vunpack.c.l.b16 %v2651
    %v3047 = vunpack.c.h.b16 %v2651
    %v3048 = vunpack.c.l.b16 %v2652
    %v3049 = vunpack.c.h.b16 %v2652
    %v3050 = vunpack.c.l.b16 %v2653
    %v3051 = vunpack.c.h.b16 %v2653
    %v3052 = vunpack.c.l.b16 %v2654
    %v3053 = vunpack.c.h.b16 %v2654
    %v3054 = vunpack.c.l.b16 %v2655
    %v3055 = vunpack.c.h.b16 %v2655
    %v3056 = vunpack.c.l.b16 %v2656
    %v3057 = vunpack.c.h.b16 %v2656
    %v3058 = vunpack.c.l.b16 %v2657
    %v3059 = vunpack.c.h.b16 %v2657
    %v3060 = vunpack.c.l.b16 %v2658
    %v3061 = vunpack.c.h.b16 %v2658
    %v3062 = vunpack.c.l.b16 %v2659
    %v3063 = vunpack.c.h.b16 %v2659
    %v3064 = vunpack.c.l.b16 %v2660
    %v3065 = vunpack.c.h.b16 %v2660
    %v3066 = vunpack.c.l.b16 %v2661
    %v3067 = vunpack.c.h.b16 %v2661
    %v3068 = vpack.c.b16 %v2816, %v2812
    %v3069 = vpack.c.b16 %v2817, %v2813
    %v3070 = vpack.c.b16 %v2818, %v2814
    %v3071 = vpack.c.b16 %v2819, %v2815
    %v3072 = vpack.c.b16 %v2824, %v2820
    %v3073 = vpack.c.b16 %v2825, %v2821
    %v3074 = vpack.c.b16 %v2826, %v2822
    %v3075 = vpack.c.b16 %v2827, %v2823
    %v3076 = vpack.c.b16 %v2832, %v2828
    %v3077 = vpack.c.b16 %v2833, %v2829
    %v3078 = vpack.c.b16 %v2834, %v2830
    %v3079 = vpack.c.b16 %v2835, %v2831
    %v3080 = vpack.c.b16 %v2840, %v2836
    %v3081 = vpack.c.b16 %v2841, %v2837
    %v3082 = vpack.c.b16 %v2842, %v2838
    %v3083 = vpack.c.b16 %v2843, %v2839
    %v3084 = vpack.c.b16 %v2848, %v2844
    %v3085 = vpack.c.b16 %v2849, %v2845
    %v3086 = vpack.c.b16 %v2850, %v2846
    %v3087 = vpack.c.b16 %v2851, %v2847
    %v3088 = vpack.c.b16 %v2856, %v2852
    %v3089 = vpack.c.b16 %v2857, %v2853
    %v3090 = vpack.c.b16 %v2858, %v2854
    %v3091 = vpack.c.b16 %v2859, %v2855
    %v3092 = vpack.c.b16 %v2864, %v2860
    %v3093 = vpack.c.b16 %v2865, %v2861
    %v3094 = vpack.c.b16 %v2866, %v2862
    %v3095 = vpack.c.b16 %v2867, %v2863
    %v3096 = vpack.c.b16 %v2872, %v2868
    %v3097 = vpack.c.b16 %v2873, %v2869
    %v3098 = vpack.c.b16 %v2874, %v2870
    %v3099 = vpack.c.b16 %v2875, %v2871
    %v3100 = vpack.c.b16 %v2880, %v2876
    %v3101 = vpack.c.b16 %v2881, %v2877
    %v3102 = vpack.c.b16 %v2882, %v2878
    %v3103 = vpack.c.b16 %v2883, %v2879
    %v3104 = vpack.c.b16 %v2888, %v2884
    %v3105 = vpack.c.b16 %v2889, %v2885
    %v3106 = vpack.c.b16 %v2890, %v2886
    %v3107 = vpack.c.b16 %v2891, %v2887
    %v3108 = vpack.c.b16 %v2896, %v2892
    %v3109 = vpack.c.b16 %v2897, %v2893
    %v3110 = vpack.c.b16 %v2898, %v2894
    %v3111 = vpack.c.b16 %v2899, %v2895
    %v3112 = vpack.c.b16 %v2904, %v2900
    %v3113 = vpack.c.b16 %v2905, %v2901
    %v3114 = vpack.c.b16 %v2906, %v2902
    %v3115 = vpack.c.b16 %v2907, %v2903
    %v3116 = vpack.c.b16 %v2912, %v2908
    %v3117 = vpack.c.b16 %v2913, %v2909
    %v3118 = vpack.c.b16 %v2914, %v2910
    %v3119 = vpack.c.b16 %v2915, %v2911
    %v3120 = vpack.c.b16 %v2920, %v2916
    %v3121 = vpack.c.b16 %v2921, %v2917
    %v3122 = vpack.c.b16 %v2922, %v2918
    %v3123 = vpack.c.b16 %v2923, %v2919
    %v3124 = vpack.c.b16 %v2928, %v2924
    %v3125 = vpack.c.b16 %v2929, %v2925
    %v3126 = vpack.c.b16 %v2930, %v2926
    %v3127 = vpack.c.b16 %v2931, %v2927
    %v3128 = vpack.c.b16 %v2936, %v2932
    %v3129 = vpack.c.b16 %v2937, %v2933
    %v3130 = vpack.c.b16 %v2938, %v2934
    %v3131 = vpack.c.b16 %v2939, %v2935
    %v3132 = vpack.c.b16 %v2944, %v2940
    %v3133 = vpack.c.b16 %v2945, %v2941
    %v3134 = vpack.c.b16 %v2946, %v2942
    %v3135 = vpack.c.b16 %v2947, %v2943
    %v3136 = vpack.c.b16 %v2952, %v2948
    %v3137 = vpack.c.b16 %v2953, %v2949
    %v3138 = vpack.c.b16 %v2954, %v2950
    %v3139 = vpack.c.b16 %v2955, %v2951
    %v3140 = vpack.c.b16 %v2960, %v2956
    %v3141 = vpack.c.b16 %v2961, %v2957
    %v3142 = vpack.c.b16 %v2962, %v2958
    %v3143 = vpack.c.b16 %v2963, %v2959
    %v3144 = vpack.c.b16 %v2968, %v2964
    %v3145 = vpack.c.b16 %v2969, %v2965
    %v3146 = vpack.c.b16 %v2970, %v2966
    %v3147 = vpack.c.b16 %v2971, %v2967
    %v3148 = vpack.c.b16 %v2976, %v2972
    %v3149 = vpack.c.b16 %v2977, %v2973
    %v3150 = vpack.c.b16 %v2978, %v2974
    %v3151 = vpack.c.b16 %v2979, %v2975
    %v3152 = vpack.c.b16 %v2984, %v2980
    %v3153 = vpack.c.b16 %v2985, %v2981
    %v3154 = vpack.c.b16 %v2986, %v2982
    %v3155 = vpack.c.b16 %v2987, %v2983
    %v3156 = vpack.c.b16 %v2992, %v2988
    %v3157 = vpack.c.b16 %v2993, %v2989
    %v3158 = vpack.c.b16 %v2994, %v2990
    %v3159 = vpack.c.b16 %v2995, %v2991
    %v3160 = vpack.c.b16 %v3000, %v2996
    %v3161 = vpack.c.b16 %v3001, %v2997
    %v3162 = vpack.c.b16 %v3002, %v2998
    %v3163 = vpack.c.b16 %v3003, %v2999
    %v3164 = vpack.c.b16 %v3008, %v3004
    %v3165 = vpack.c.b16 %v3009, %v3005
    %v3166 = vpack.c.b16 %v3010, %v3006
    %v3167 = vpack.c.b16 %v3011, %v3007
    %v3168 = vpack.c.b16 %v3016, %v3012
    %v3169 = vpack.c.b16 %v3017, %v3013
    %v3170 = vpack.c.b16 %v3018, %v3014
    %v3171 = vpack.c.b16 %v3019, %v3015
    %v3172 = vpack.c.b16 %v3024, %v3020
    %v3173 = vpack.c.b16 %v3025, %v3021
    %v3174 = vpack.c.b16 %v3026, %v3022
    %v3175 = vpack.c.b16 %v3027, %v3023
    %v3176 = vpack.c.b16 %v3032, %v3028
    %v3177 = vpack.c.b16 %v3033, %v3029
    %v3178 = vpack.c.b16 %v3034, %v3030
    %v3179 = vpack.c.b16 %v3035, %v3031
    %v3180 = vpack.c.b16 %v3040, %v3036
    %v3181 = vpack.c.b16 %v3041, %v3037
    %v3182 = vpack.c.b16 %v3042, %v3038
    %v3183 = vpack.c.b16 %v3043, %v3039
    %v3184 = vpack.c.b16 %v3048, %v3044
    %v3185 = vpack.c.b16 %v3049, %v3045
    %v3186 = vpack.c.b16 %v3050, %v3046
    %v3187 = vpack.c.b16 %v3051, %v3047
    %v3188 = vpack.c.b16 %v3056, %v3052
    %v3189 = vpack.c.b16 %v3057, %v3053
    %v3190 = vpack.c.b16 %v3058, %v3054
    %v3191 = vpack.c.b16 %v3059, %v3055
    %v3192 = vpack.c.b16 %v3064, %v3060
    %v3193 = vpack.c.b16 %v3065, %v3061
    %v3194 = vpack.c.b16 %v3066, %v3062
    %v3195 = vpack.c.b16 %v3067, %v3063
    %3324 = vmatprep.subr.bf16.mxu0 %v3097
    %3325 = vmatpush1.bf16.msra.mxu0 %v3096
    %3326 = vmatprep.subr.bf16.mxu0 %v3093
    %3327 = vmatpush1.bf16.msra.mxu0 %v3092
    %3328 = vmatprep.subr.bf16.mxu0 %v3089
    %3329 = vmatpush1.bf16.msra.mxu0 %v3088
    %3330 = vmatprep.subr.bf16.mxu0 %v3085
    %3331 = vmatpush1.bf16.msra.mxu0 %v3084
    %3332 = vmatprep.subr.bf16.mxu0 %v3081
    %3333 = vmatpush1.bf16.msra.mxu0 %v3080
    %3334 = vmatprep.subr.bf16.mxu0 %v3077
    %3335 = vmatpush1.bf16.msra.mxu0 %v3076
    %3336 = vmatprep.subr.bf16.mxu0 %v3073
    %3337 = vmatpush1.bf16.msra.mxu0 %v3072
    %3338 = vmatprep.subr.bf16.mxu0 %v3069
    %3339 = vmatpush1.bf16.msra.mxu0 %v3068
    %3340 = vmatprep.subr.bf16.mxu0 %v3129
    %3341 = vmatpush2.bf16.msra.mxu0 %v3128
    %3342 = vmatprep.subr.bf16.mxu0 %v3125
    %3343 = vmatpush2.bf16.msra.mxu0 %v3124
    %3344 = vmatprep.subr.bf16.mxu0 %v3121
    %3345 = vmatpush2.bf16.msra.mxu0 %v3120
    %3346 = vmatprep.subr.bf16.mxu0 %v3117
    %3347 = vmatpush2.bf16.msra.mxu0 %v3116
    %3348 = vmatprep.subr.bf16.mxu0 %v3113
    %3349 = vmatpush2.bf16.msra.mxu0 %v3112
    %3350 = vmatprep.subr.bf16.mxu0 %v3109
    %3351 = vmatpush2.bf16.msra.mxu0 %v3108
    %3352 = vmatprep.subr.bf16.mxu0 %v3105
    %3353 = vmatpush2.bf16.msra.mxu0 %v3104
    %3354 = vmatprep.subr.bf16.mxu0 %v3101
    %3355 = vmatpush2.bf16.msra.mxu0 %v3100
    %3356 = vmatprep.mubr.bf16.mxu0 %v2471
    %3357 = vmatmul.mubr.bf16.gmra.mxu0 %v2470
    %v3358 = vpop.f32.mrf.mxu0
    %v3359 = vadd.f32 %v2667, %v3358
    %v3360 = vpop.f32.mrf.mxu0
    %v3361 = vadd.f32 %v2671, %v3360
    %v3362 = vpop.f32.mrf.mxu0
    %v3363 = vadd.f32 %v2667, %v3362
    %v3364 = vpop.f32.mrf.mxu0
    %v3365 = vadd.f32 %v2671, %v3364
    %3366 = vmatprep.mubr.bf16.mxu0 %v2475
    %3367 = vmatmul.mubr.bf16.gmra.mxu0 %v2474
    %v3368 = vpop.f32.mrf.mxu0
    %v3369 = vadd.f32 %v2667, %v3368
    %v3370 = vpop.f32.mrf.mxu0
    %v3371 = vadd.f32 %v2671, %v3370
    %v3372 = vpop.f32.mrf.mxu0
    %v3373 = vadd.f32 %v2667, %v3372
    %v3374 = vpop.f32.mrf.mxu0
    %v3375 = vadd.f32 %v2671, %v3374
    %3376 = vmatprep.mubr.bf16.mxu0 %v2479
    %3377 = vmatmul.mubr.bf16.gmra.mxu0 %v2478
    %v3378 = vpop.f32.mrf.mxu0
    %v3379 = vadd.f32 %v2667, %v3378
    %v3380 = vpop.f32.mrf.mxu0
    %v3381 = vadd.f32 %v2671, %v3380
    %v3382 = vpop.f32.mrf.mxu0
    %v3383 = vadd.f32 %v2667, %v3382
    %v3384 = vpop.f32.mrf.mxu0
    %v3385 = vadd.f32 %v2671, %v3384
    %3386 = vmatprep.mubr.bf16.mxu0 %v2483
    %3387 = vmatmul.mubr.bf16.gmra.mxu0 %v2482
    %v3388 = vpop.f32.mrf.mxu0
    %v3389 = vadd.f32 %v2667, %v3388
    %v3390 = vpop.f32.mrf.mxu0
    %v3391 = vadd.f32 %v2671, %v3390
    %v3392 = vpop.f32.mrf.mxu0
    %v3393 = vadd.f32 %v2667, %v3392
    %v3394 = vpop.f32.mrf.mxu0
    %v3395 = vadd.f32 %v2671, %v3394
    %3396 = vmatprep.mubr.bf16.mxu0 %v2487
    %3397 = vmatmul.mubr.bf16.gmra.mxu0 %v2486
    %v3398 = vpop.f32.mrf.mxu0
    %v3399 = vadd.f32 %v2667, %v3398
    %v3400 = vpop.f32.mrf.mxu0
    %v3401 = vadd.f32 %v2671, %v3400
    %v3402 = vpop.f32.mrf.mxu0
    %v3403 = vadd.f32 %v2667, %v3402
    %v3404 = vpop.f32.mrf.mxu0
    %v3405 = vadd.f32 %v2671, %v3404
    %3406 = vmatprep.mubr.bf16.mxu0 %v2491
    %3407 = vmatmul.mubr.bf16.gmra.mxu0 %v2490
    %v3408 = vpop.f32.mrf.mxu0
    %v3409 = vadd.f32 %v2667, %v3408
    %v3410 = vpop.f32.mrf.mxu0
    %v3411 = vadd.f32 %v2671, %v3410
    %v3412 = vpop.f32.mrf.mxu0
    %v3413 = vadd.f32 %v2667, %v3412
    %v3414 = vpop.f32.mrf.mxu0
    %v3415 = vadd.f32 %v2671, %v3414
    %3416 = vmatprep.mubr.bf16.mxu0 %v2495
    %3417 = vmatmul.mubr.bf16.gmra.mxu0 %v2494
    %v3418 = vpop.f32.mrf.mxu0
    %v3419 = vadd.f32 %v2667, %v3418
    %v3420 = vpop.f32.mrf.mxu0
    %v3421 = vadd.f32 %v2671, %v3420
    %v3422 = vpop.f32.mrf.mxu0
    %v3423 = vadd.f32 %v2667, %v3422
    %v3424 = vpop.f32.mrf.mxu0
    %v3425 = vadd.f32 %v2671, %v3424
    %3426 = vmatprep.mubr.bf16.mxu0 %v2499
    %3427 = vmatmul.mubr.bf16.gmra.mxu0 %v2498
    %v3428 = vpop.f32.mrf.mxu0
    %v3429 = vadd.f32 %v2667, %v3428
    %v3430 = vpop.f32.mrf.mxu0
    %v3431 = vadd.f32 %v2671, %v3430
    %v3432 = vpop.f32.mrf.mxu0
    %v3433 = vadd.f32 %v2667, %v3432
    %v3434 = vpop.f32.mrf.mxu0
    %v3435 = vadd.f32 %v2671, %v3434
    %3436 = vmatprep.mubr.bf16.mxu0 %v2503
    %3437 = vmatmul.mubr.bf16.gmra.mxu0 %v2502
    %v3438 = vpop.f32.mrf.mxu0
    %v3439 = vadd.f32 %v2667, %v3438
    %v3440 = vpop.f32.mrf.mxu0
    %v3441 = vadd.f32 %v2671, %v3440
    %v3442 = vpop.f32.mrf.mxu0
    %v3443 = vadd.f32 %v2667, %v3442
    %v3444 = vpop.f32.mrf.mxu0
    %v3445 = vadd.f32 %v2671, %v3444
    %3446 = vmatprep.mubr.bf16.mxu0 %v2507
    %3447 = vmatmul.mubr.bf16.gmra.mxu0 %v2506
    %v3448 = vpop.f32.mrf.mxu0
    %v3449 = vadd.f32 %v2667, %v3448
    %v3450 = vpop.f32.mrf.mxu0
    %v3451 = vadd.f32 %v2671, %v3450
    %v3452 = vpop.f32.mrf.mxu0
    %v3453 = vadd.f32 %v2667, %v3452
    %v3454 = vpop.f32.mrf.mxu0
    %v3455 = vadd.f32 %v2671, %v3454
    %3456 = vmatprep.mubr.bf16.mxu0 %v2511
    %3457 = vmatmul.mubr.bf16.gmra.mxu0 %v2510
    %v3458 = vpop.f32.mrf.mxu0
    %v3459 = vadd.f32 %v2667, %v3458
    %v3460 = vpop.f32.mrf.mxu0
    %v3461 = vadd.f32 %v2671, %v3460
    %v3462 = vpop.f32.mrf.mxu0
    %v3463 = vadd.f32 %v2667, %v3462
    %v3464 = vpop.f32.mrf.mxu0
    %v3465 = vadd.f32 %v2671, %v3464
    %3466 = vmatprep.mubr.bf16.mxu0 %v2515
    %3467 = vmatmul.mubr.bf16.gmra.mxu0 %v2514
    %v3468 = vpop.f32.mrf.mxu0
    %v3469 = vadd.f32 %v2667, %v3468
    %v3470 = vpop.f32.mrf.mxu0
    %v3471 = vadd.f32 %v2671, %v3470
    %v3472 = vpop.f32.mrf.mxu0
    %v3473 = vadd.f32 %v2667, %v3472
    %v3474 = vpop.f32.mrf.mxu0
    %v3475 = vadd.f32 %v2671, %v3474
    %3476 = vmatprep.mubr.bf16.mxu0 %v2519
    %3477 = vmatmul.mubr.bf16.gmra.mxu0 %v2518
    %v3478 = vpop.f32.mrf.mxu0
    %v3479 = vadd.f32 %v2667, %v3478
    %v3480 = vpop.f32.mrf.mxu0
    %v3481 = vadd.f32 %v2671, %v3480
    %v3482 = vpop.f32.mrf.mxu0
    %v3483 = vadd.f32 %v2667, %v3482
    %v3484 = vpop.f32.mrf.mxu0
    %v3485 = vadd.f32 %v2671, %v3484
    %3486 = vmatprep.mubr.bf16.mxu0 %v2523
    %3487 = vmatmul.mubr.bf16.gmra.mxu0 %v2522
    %v3488 = vpop.f32.mrf.mxu0
    %v3489 = vadd.f32 %v2667, %v3488
    %v3490 = vpop.f32.mrf.mxu0
    %v3491 = vadd.f32 %v2671, %v3490
    %v3492 = vpop.f32.mrf.mxu0
    %v3493 = vadd.f32 %v2667, %v3492
    %v3494 = vpop.f32.mrf.mxu0
    %v3495 = vadd.f32 %v2671, %v3494
    %3496 = vmatprep.mubr.bf16.mxu0 %v2527
    %3497 = vmatmul.mubr.bf16.gmra.mxu0 %v2526
    %v3498 = vpop.f32.mrf.mxu0
    %v3499 = vadd.f32 %v2667, %v3498
    %v3500 = vpop.f32.mrf.mxu0
    %v3501 = vadd.f32 %v2671, %v3500
    %v3502 = vpop.f32.mrf.mxu0
    %v3503 = vadd.f32 %v2667, %v3502
    %v3504 = vpop.f32.mrf.mxu0
    %v3505 = vadd.f32 %v2671, %v3504
    %3506 = vmatprep.mubr.bf16.mxu0 %v2531
    %3507 = vmatmul.mubr.bf16.gmra.mxu0 %v2530
    %v3508 = vpop.f32.mrf.mxu0
    %v3509 = vadd.f32 %v2667, %v3508
    %v3510 = vpop.f32.mrf.mxu0
    %v3511 = vadd.f32 %v2671, %v3510
    %v3512 = vpop.f32.mrf.mxu0
    %v3513 = vadd.f32 %v2667, %v3512
    %v3514 = vpop.f32.mrf.mxu0
    %v3515 = vadd.f32 %v2671, %v3514
    %3516 = vdwg.mxu0
    %3517 = vmatprep.subr.bf16.mxu0 %v3161
    %3518 = vmatpush1.bf16.msra.mxu0 %v3160
    %3519 = vmatprep.subr.bf16.mxu0 %v3157
    %3520 = vmatpush1.bf16.msra.mxu0 %v3156
    %3521 = vmatprep.subr.bf16.mxu0 %v3153
    %3522 = vmatpush1.bf16.msra.mxu0 %v3152
    %3523 = vmatprep.subr.bf16.mxu0 %v3149
    %3524 = vmatpush1.bf16.msra.mxu0 %v3148
    %3525 = vmatprep.subr.bf16.mxu0 %v3145
    %3526 = vmatpush1.bf16.msra.mxu0 %v3144
    %3527 = vmatprep.subr.bf16.mxu0 %v3141
    %3528 = vmatpush1.bf16.msra.mxu0 %v3140
    %3529 = vmatprep.subr.bf16.mxu0 %v3137
    %3530 = vmatpush1.bf16.msra.mxu0 %v3136
    %3531 = vmatprep.subr.bf16.mxu0 %v3133
    %3532 = vmatpush1.bf16.msra.mxu0 %v3132
    %3533 = vmatprep.subr.bf16.mxu0 %v3193
    %3534 = vmatpush2.bf16.msra.mxu0 %v3192
    %3535 = vmatprep.subr.bf16.mxu0 %v3189
    %3536 = vmatpush2.bf16.msra.mxu0 %v3188
    %3537 = vmatprep.subr.bf16.mxu0 %v3185
    %3538 = vmatpush2.bf16.msra.mxu0 %v3184
    %3539 = vmatprep.subr.bf16.mxu0 %v3181
    %3540 = vmatpush2.bf16.msra.mxu0 %v3180
    %3541 = vmatprep.subr.bf16.mxu0 %v3177
    %3542 = vmatpush2.bf16.msra.mxu0 %v3176
    %3543 = vmatprep.subr.bf16.mxu0 %v3173
    %3544 = vmatpush2.bf16.msra.mxu0 %v3172
    %3545 = vmatprep.subr.bf16.mxu0 %v3169
    %3546 = vmatpush2.bf16.msra.mxu0 %v3168
    %3547 = vmatprep.subr.bf16.mxu0 %v3165
    %3548 = vmatpush2.bf16.msra.mxu0 %v3164
    %3549 = vmatprep.mubr.bf16.mxu0 %v2473
    %3550 = vmatmul.mubr.bf16.gmra.mxu0 %v2472
    %v3551 = vpop.f32.mrf.mxu0
    %v3552 = vadd.f32 %v3359, %v3551
    %v3553 = vpop.f32.mrf.mxu0
    %v3554 = vadd.f32 %v3361, %v3553
    %v3555 = vpop.f32.mrf.mxu0
    %v3556 = vadd.f32 %v3363, %v3555
    %v3557 = vpop.f32.mrf.mxu0
    %v3558 = vadd.f32 %v3365, %v3557
    %3559 = vmatprep.mubr.bf16.mxu0 %v2477
    %3560 = vmatmul.mubr.bf16.gmra.mxu0 %v2476
    %v3561 = vpop.f32.mrf.mxu0
    %v3562 = vadd.f32 %v3369, %v3561
    %v3563 = vpop.f32.mrf.mxu0
    %v3564 = vadd.f32 %v3371, %v3563
    %v3565 = vpop.f32.mrf.mxu0
    %v3566 = vadd.f32 %v3373, %v3565
    %v3567 = vpop.f32.mrf.mxu0
    %v3568 = vadd.f32 %v3375, %v3567
    %3569 = vmatprep.mubr.bf16.mxu0 %v2481
    %3570 = vmatmul.mubr.bf16.gmra.mxu0 %v2480
    %v3571 = vpop.f32.mrf.mxu0
    %v3572 = vadd.f32 %v3379, %v3571
    %v3573 = vpop.f32.mrf.mxu0
    %v3574 = vadd.f32 %v3381, %v3573
    %v3575 = vpop.f32.mrf.mxu0
    %v3576 = vadd.f32 %v3383, %v3575
    %v3577 = vpop.f32.mrf.mxu0
    %v3578 = vadd.f32 %v3385, %v3577
    %3579 = vmatprep.mubr.bf16.mxu0 %v2485
    %3580 = vmatmul.mubr.bf16.gmra.mxu0 %v2484
    %v3581 = vpop.f32.mrf.mxu0
    %v3582 = vadd.f32 %v3389, %v3581
    %v3583 = vpop.f32.mrf.mxu0
    %v3584 = vadd.f32 %v3391, %v3583
    %v3585 = vpop.f32.mrf.mxu0
    %v3586 = vadd.f32 %v3393, %v3585
    %v3587 = vpop.f32.mrf.mxu0
    %v3588 = vadd.f32 %v3395, %v3587
    %3589 = vmatprep.mubr.bf16.mxu0 %v2489
    %3590 = vmatmul.mubr.bf16.gmra.mxu0 %v2488
    %v3591 = vpop.f32.mrf.mxu0
    %v3592 = vadd.f32 %v3399, %v3591
    %v3593 = vpop.f32.mrf.mxu0
    %v3594 = vadd.f32 %v3401, %v3593
    %v3595 = vpop.f32.mrf.mxu0
    %v3596 = vadd.f32 %v3403, %v3595
    %v3597 = vpop.f32.mrf.mxu0
    %v3598 = vadd.f32 %v3405, %v3597
    %3599 = vmatprep.mubr.bf16.mxu0 %v2493
    %3600 = vmatmul.mubr.bf16.gmra.mxu0 %v2492
    %v3601 = vpop.f32.mrf.mxu0
    %v3602 = vadd.f32 %v3409, %v3601
    %v3603 = vpop.f32.mrf.mxu0
    %v3604 = vadd.f32 %v3411, %v3603
    %v3605 = vpop.f32.mrf.mxu0
    %v3606 = vadd.f32 %v3413, %v3605
    %v3607 = vpop.f32.mrf.mxu0
    %v3608 = vadd.f32 %v3415, %v3607
    %3609 = vmatprep.mubr.bf16.mxu0 %v2497
    %3610 = vmatmul.mubr.bf16.gmra.mxu0 %v2496
    %v3611 = vpop.f32.mrf.mxu0
    %v3612 = vadd.f32 %v3419, %v3611
    %v3613 = vpop.f32.mrf.mxu0
    %v3614 = vadd.f32 %v3421, %v3613
    %v3615 = vpop.f32.mrf.mxu0
    %v3616 = vadd.f32 %v3423, %v3615
    %v3617 = vpop.f32.mrf.mxu0
    %v3618 = vadd.f32 %v3425, %v3617
    %3619 = vmatprep.mubr.bf16.mxu0 %v2501
    %3620 = vmatmul.mubr.bf16.gmra.mxu0 %v2500
    %v3621 = vpop.f32.mrf.mxu0
    %v3622 = vadd.f32 %v3429, %v3621
    %v3623 = vpop.f32.mrf.mxu0
    %v3624 = vadd.f32 %v3431, %v3623
    %v3625 = vpop.f32.mrf.mxu0
    %v3626 = vadd.f32 %v3433, %v3625
    %v3627 = vpop.f32.mrf.mxu0
    %v3628 = vadd.f32 %v3435, %v3627
    %3629 = vmatprep.mubr.bf16.mxu0 %v2505
    %3630 = vmatmul.mubr.bf16.gmra.mxu0 %v2504
    %v3631 = vpop.f32.mrf.mxu0
    %v3632 = vadd.f32 %v3439, %v3631
    %v3633 = vpop.f32.mrf.mxu0
    %v3634 = vadd.f32 %v3441, %v3633
    %v3635 = vpop.f32.mrf.mxu0
    %v3636 = vadd.f32 %v3443, %v3635
    %v3637 = vpop.f32.mrf.mxu0
    %v3638 = vadd.f32 %v3445, %v3637
    %3639 = vmatprep.mubr.bf16.mxu0 %v2509
    %3640 = vmatmul.mubr.bf16.gmra.mxu0 %v2508
    %v3641 = vpop.f32.mrf.mxu0
    %v3642 = vadd.f32 %v3449, %v3641
    %v3643 = vpop.f32.mrf.mxu0
    %v3644 = vadd.f32 %v3451, %v3643
    %v3645 = vpop.f32.mrf.mxu0
    %v3646 = vadd.f32 %v3453, %v3645
    %v3647 = vpop.f32.mrf.mxu0
    %v3648 = vadd.f32 %v3455, %v3647
    %3649 = vmatprep.mubr.bf16.mxu0 %v2513
    %3650 = vmatmul.mubr.bf16.gmra.mxu0 %v2512
    %v3651 = vpop.f32.mrf.mxu0
    %v3652 = vadd.f32 %v3459, %v3651
    %v3653 = vpop.f32.mrf.mxu0
    %v3654 = vadd.f32 %v3461, %v3653
    %v3655 = vpop.f32.mrf.mxu0
    %v3656 = vadd.f32 %v3463, %v3655
    %v3657 = vpop.f32.mrf.mxu0
    %v3658 = vadd.f32 %v3465, %v3657
    %3659 = vmatprep.mubr.bf16.mxu0 %v2517
    %3660 = vmatmul.mubr.bf16.gmra.mxu0 %v2516
    %v3661 = vpop.f32.mrf.mxu0
    %v3662 = vadd.f32 %v3469, %v3661
    %v3663 = vpop.f32.mrf.mxu0
    %v3664 = vadd.f32 %v3471, %v3663
    %v3665 = vpop.f32.mrf.mxu0
    %v3666 = vadd.f32 %v3473, %v3665
    %v3667 = vpop.f32.mrf.mxu0
    %v3668 = vadd.f32 %v3475, %v3667
    %3669 = vmatprep.mubr.bf16.mxu0 %v2521
    %3670 = vmatmul.mubr.bf16.gmra.mxu0 %v2520
    %v3671 = vpop.f32.mrf.mxu0
    %v3672 = vadd.f32 %v3479, %v3671
    %v3673 = vpop.f32.mrf.mxu0
    %v3674 = vadd.f32 %v3481, %v3673
    %v3675 = vpop.f32.mrf.mxu0
    %v3676 = vadd.f32 %v3483, %v3675
    %v3677 = vpop.f32.mrf.mxu0
    %v3678 = vadd.f32 %v3485, %v3677
    %3679 = vmatprep.mubr.bf16.mxu0 %v2525
    %3680 = vmatmul.mubr.bf16.gmra.mxu0 %v2524
    %v3681 = vpop.f32.mrf.mxu0
    %v3682 = vadd.f32 %v3489, %v3681
    %v3683 = vpop.f32.mrf.mxu0
    %v3684 = vadd.f32 %v3491, %v3683
    %v3685 = vpop.f32.mrf.mxu0
    %v3686 = vadd.f32 %v3493, %v3685
    %v3687 = vpop.f32.mrf.mxu0
    %v3688 = vadd.f32 %v3495, %v3687
    %3689 = vmatprep.mubr.bf16.mxu0 %v2529
    %3690 = vmatmul.mubr.bf16.gmra.mxu0 %v2528
    %v3691 = vpop.f32.mrf.mxu0
    %v3692 = vadd.f32 %v3499, %v3691
    %v3693 = vpop.f32.mrf.mxu0
    %v3694 = vadd.f32 %v3501, %v3693
    %v3695 = vpop.f32.mrf.mxu0
    %v3696 = vadd.f32 %v3503, %v3695
    %v3697 = vpop.f32.mrf.mxu0
    %v3698 = vadd.f32 %v3505, %v3697
    %3699 = vmatprep.mubr.bf16.mxu0 %v2533
    %3700 = vmatmul.mubr.bf16.gmra.mxu0 %v2532
    %v3701 = vpop.f32.mrf.mxu0
    %v3702 = vadd.f32 %v3509, %v3701
    %v3703 = vpop.f32.mrf.mxu0
    %v3704 = vadd.f32 %v3511, %v3703
    %v3705 = vpop.f32.mrf.mxu0
    %v3706 = vadd.f32 %v3513, %v3705
    %v3707 = vpop.f32.mrf.mxu0
    %v3708 = vadd.f32 %v3515, %v3707
    %3709 = vdwg.mxu0
    %3710 = vmatprep.subr.bf16.mxu0 %v3099
    %3711 = vmatpush1.bf16.msra.mxu0 %v3098
    %3712 = vmatprep.subr.bf16.mxu0 %v3095
    %3713 = vmatpush1.bf16.msra.mxu0 %v3094
    %3714 = vmatprep.subr.bf16.mxu0 %v3091
    %3715 = vmatpush1.bf16.msra.mxu0 %v3090
    %3716 = vmatprep.subr.bf16.mxu0 %v3087
    %3717 = vmatpush1.bf16.msra.mxu0 %v3086
    %3718 = vmatprep.subr.bf16.mxu0 %v3083
    %3719 = vmatpush1.bf16.msra.mxu0 %v3082
    %3720 = vmatprep.subr.bf16.mxu0 %v3079
    %3721 = vmatpush1.bf16.msra.mxu0 %v3078
    %3722 = vmatprep.subr.bf16.mxu0 %v3075
    %3723 = vmatpush1.bf16.msra.mxu0 %v3074
    %3724 = vmatprep.subr.bf16.mxu0 %v3071
    %3725 = vmatpush1.bf16.msra.mxu0 %v3070
    %3726 = vmatprep.subr.bf16.mxu0 %v3131
    %3727 = vmatpush2.bf16.msra.mxu0 %v3130
    %3728 = vmatprep.subr.bf16.mxu0 %v3127
    %3729 = vmatpush2.bf16.msra.mxu0 %v3126
    %3730 = vmatprep.subr.bf16.mxu0 %v3123
    %3731 = vmatpush2.bf16.msra.mxu0 %v3122
    %3732 = vmatprep.subr.bf16.mxu0 %v3119
    %3733 = vmatpush2.bf16.msra.mxu0 %v3118
    %3734 = vmatprep.subr.bf16.mxu0 %v3115
    %3735 = vmatpush2.bf16.msra.mxu0 %v3114
    %3736 = vmatprep.subr.bf16.mxu0 %v3111
    %3737 = vmatpush2.bf16.msra.mxu0 %v3110
    %3738 = vmatprep.subr.bf16.mxu0 %v3107
    %3739 = vmatpush2.bf16.msra.mxu0 %v3106
    %3740 = vmatprep.subr.bf16.mxu0 %v3103
    %3741 = vmatpush2.bf16.msra.mxu0 %v3102
    %3742 = vmatprep.mubr.bf16.mxu0 %v2471
    %3743 = vmatmul.mubr.bf16.gmra.mxu0 %v2470
    %v3744 = vpop.f32.mrf.mxu0
    %v3745 = vadd.f32 %v2675, %v3744
    %v3746 = vpop.f32.mrf.mxu0
    %v3747 = vadd.f32 %v2679, %v3746
    %v3748 = vpop.f32.mrf.mxu0
    %v3749 = vadd.f32 %v2675, %v3748
    %v3750 = vpop.f32.mrf.mxu0
    %v3751 = vadd.f32 %v2679, %v3750
    %3752 = vmatprep.mubr.bf16.mxu0 %v2475
    %3753 = vmatmul.mubr.bf16.gmra.mxu0 %v2474
    %v3754 = vpop.f32.mrf.mxu0
    %v3755 = vadd.f32 %v2675, %v3754
    %v3756 = vpop.f32.mrf.mxu0
    %v3757 = vadd.f32 %v2679, %v3756
    %v3758 = vpop.f32.mrf.mxu0
    %v3759 = vadd.f32 %v2675, %v3758
    %v3760 = vpop.f32.mrf.mxu0
    %v3761 = vadd.f32 %v2679, %v3760
    %3762 = vmatprep.mubr.bf16.mxu0 %v2479
    %3763 = vmatmul.mubr.bf16.gmra.mxu0 %v2478
    %v3764 = vpop.f32.mrf.mxu0
    %v3765 = vadd.f32 %v2675, %v3764
    %v3766 = vpop.f32.mrf.mxu0
    %v3767 = vadd.f32 %v2679, %v3766
    %v3768 = vpop.f32.mrf.mxu0
    %v3769 = vadd.f32 %v2675, %v3768
    %v3770 = vpop.f32.mrf.mxu0
    %v3771 = vadd.f32 %v2679, %v3770
    %3772 = vmatprep.mubr.bf16.mxu0 %v2483
    %3773 = vmatmul.mubr.bf16.gmra.mxu0 %v2482
    %v3774 = vpop.f32.mrf.mxu0
    %v3775 = vadd.f32 %v2675, %v3774
    %v3776 = vpop.f32.mrf.mxu0
    %v3777 = vadd.f32 %v2679, %v3776
    %v3778 = vpop.f32.mrf.mxu0
    %v3779 = vadd.f32 %v2675, %v3778
    %v3780 = vpop.f32.mrf.mxu0
    %v3781 = vadd.f32 %v2679, %v3780
    %3782 = vmatprep.mubr.bf16.mxu0 %v2487
    %3783 = vmatmul.mubr.bf16.gmra.mxu0 %v2486
    %v3784 = vpop.f32.mrf.mxu0
    %v3785 = vadd.f32 %v2675, %v3784
    %v3786 = vpop.f32.mrf.mxu0
    %v3787 = vadd.f32 %v2679, %v3786
    %v3788 = vpop.f32.mrf.mxu0
    %v3789 = vadd.f32 %v2675, %v3788
    %v3790 = vpop.f32.mrf.mxu0
    %v3791 = vadd.f32 %v2679, %v3790
    %3792 = vmatprep.mubr.bf16.mxu0 %v2491
    %3793 = vmatmul.mubr.bf16.gmra.mxu0 %v2490
    %v3794 = vpop.f32.mrf.mxu0
    %v3795 = vadd.f32 %v2675, %v3794
    %v3796 = vpop.f32.mrf.mxu0
    %v3797 = vadd.f32 %v2679, %v3796
    %v3798 = vpop.f32.mrf.mxu0
    %v3799 = vadd.f32 %v2675, %v3798
    %v3800 = vpop.f32.mrf.mxu0
    %v3801 = vadd.f32 %v2679, %v3800
    %3802 = vmatprep.mubr.bf16.mxu0 %v2495
    %3803 = vmatmul.mubr.bf16.gmra.mxu0 %v2494
    %v3804 = vpop.f32.mrf.mxu0
    %v3805 = vadd.f32 %v2675, %v3804
    %v3806 = vpop.f32.mrf.mxu0
    %v3807 = vadd.f32 %v2679, %v3806
    %v3808 = vpop.f32.mrf.mxu0
    %v3809 = vadd.f32 %v2675, %v3808
    %v3810 = vpop.f32.mrf.mxu0
    %v3811 = vadd.f32 %v2679, %v3810
    %3812 = vmatprep.mubr.bf16.mxu0 %v2499
    %3813 = vmatmul.mubr.bf16.gmra.mxu0 %v2498
    %v3814 = vpop.f32.mrf.mxu0
    %v3815 = vadd.f32 %v2675, %v3814
    %v3816 = vpop.f32.mrf.mxu0
    %v3817 = vadd.f32 %v2679, %v3816
    %v3818 = vpop.f32.mrf.mxu0
    %v3819 = vadd.f32 %v2675, %v3818
    %v3820 = vpop.f32.mrf.mxu0
    %v3821 = vadd.f32 %v2679, %v3820
    %3822 = vmatprep.mubr.bf16.mxu0 %v2503
    %3823 = vmatmul.mubr.bf16.gmra.mxu0 %v2502
    %v3824 = vpop.f32.mrf.mxu0
    %v3825 = vadd.f32 %v2675, %v3824
    %v3826 = vpop.f32.mrf.mxu0
    %v3827 = vadd.f32 %v2679, %v3826
    %v3828 = vpop.f32.mrf.mxu0
    %v3829 = vadd.f32 %v2675, %v3828
    %v3830 = vpop.f32.mrf.mxu0
    %v3831 = vadd.f32 %v2679, %v3830
    %3832 = vmatprep.mubr.bf16.mxu0 %v2507
    %3833 = vmatmul.mubr.bf16.gmra.mxu0 %v2506
    %v3834 = vpop.f32.mrf.mxu0
    %v3835 = vadd.f32 %v2675, %v3834
    %v3836 = vpop.f32.mrf.mxu0
    %v3837 = vadd.f32 %v2679, %v3836
    %v3838 = vpop.f32.mrf.mxu0
    %v3839 = vadd.f32 %v2675, %v3838
    %v3840 = vpop.f32.mrf.mxu0
    %v3841 = vadd.f32 %v2679, %v3840
    %3842 = vmatprep.mubr.bf16.mxu0 %v2511
    %3843 = vmatmul.mubr.bf16.gmra.mxu0 %v2510
    %v3844 = vpop.f32.mrf.mxu0
    %v3845 = vadd.f32 %v2675, %v3844
    %v3846 = vpop.f32.mrf.mxu0
    %v3847 = vadd.f32 %v2679, %v3846
    %v3848 = vpop.f32.mrf.mxu0
    %v3849 = vadd.f32 %v2675, %v3848
    %v3850 = vpop.f32.mrf.mxu0
    %v3851 = vadd.f32 %v2679, %v3850
    %3852 = vmatprep.mubr.bf16.mxu0 %v2515
    %3853 = vmatmul.mubr.bf16.gmra.mxu0 %v2514
    %v3854 = vpop.f32.mrf.mxu0
    %v3855 = vadd.f32 %v2675, %v3854
    %v3856 = vpop.f32.mrf.mxu0
    %v3857 = vadd.f32 %v2679, %v3856
    %v3858 = vpop.f32.mrf.mxu0
    %v3859 = vadd.f32 %v2675, %v3858
    %v3860 = vpop.f32.mrf.mxu0
    %v3861 = vadd.f32 %v2679, %v3860
    %3862 = vmatprep.mubr.bf16.mxu0 %v2519
    %3863 = vmatmul.mubr.bf16.gmra.mxu0 %v2518
    %v3864 = vpop.f32.mrf.mxu0
    %v3865 = vadd.f32 %v2675, %v3864
    %v3866 = vpop.f32.mrf.mxu0
    %v3867 = vadd.f32 %v2679, %v3866
    %v3868 = vpop.f32.mrf.mxu0
    %v3869 = vadd.f32 %v2675, %v3868
    %v3870 = vpop.f32.mrf.mxu0
    %v3871 = vadd.f32 %v2679, %v3870
    %3872 = vmatprep.mubr.bf16.mxu0 %v2523
    %3873 = vmatmul.mubr.bf16.gmra.mxu0 %v2522
    %v3874 = vpop.f32.mrf.mxu0
    %v3875 = vadd.f32 %v2675, %v3874
    %v3876 = vpop.f32.mrf.mxu0
    %v3877 = vadd.f32 %v2679, %v3876
    %v3878 = vpop.f32.mrf.mxu0
    %v3879 = vadd.f32 %v2675, %v3878
    %v3880 = vpop.f32.mrf.mxu0
    %v3881 = vadd.f32 %v2679, %v3880
    %3882 = vmatprep.mubr.bf16.mxu0 %v2527
    %3883 = vmatmul.mubr.bf16.gmra.mxu0 %v2526
    %v3884 = vpop.f32.mrf.mxu0
    %v3885 = vadd.f32 %v2675, %v3884
    %v3886 = vpop.f32.mrf.mxu0
    %v3887 = vadd.f32 %v2679, %v3886
    %v3888 = vpop.f32.mrf.mxu0
    %v3889 = vadd.f32 %v2675, %v3888
    %v3890 = vpop.f32.mrf.mxu0
    %v3891 = vadd.f32 %v2679, %v3890
    %3892 = vmatprep.mubr.bf16.mxu0 %v2531
    %3893 = vmatmul.mubr.bf16.gmra.mxu0 %v2530
    %v3894 = vpop.f32.mrf.mxu0
    %v3895 = vadd.f32 %v2675, %v3894
    %v3896 = vpop.f32.mrf.mxu0
    %v3897 = vadd.f32 %v2679, %v3896
    %v3898 = vpop.f32.mrf.mxu0
    %v3899 = vadd.f32 %v2675, %v3898
    %v3900 = vpop.f32.mrf.mxu0
    %v3901 = vadd.f32 %v2679, %v3900
    %3902 = vdwg.mxu0
    %3903 = vmatprep.subr.bf16.mxu0 %v3163
    %3904 = vmatpush1.bf16.msra.mxu0 %v3162
    %3905 = vmatprep.subr.bf16.mxu0 %v3159
    %3906 = vmatpush1.bf16.msra.mxu0 %v3158
    %3907 = vmatprep.subr.bf16.mxu0 %v3155
    %3908 = vmatpush1.bf16.msra.mxu0 %v3154
    %3909 = vmatprep.subr.bf16.mxu0 %v3151
    %3910 = vmatpush1.bf16.msra.mxu0 %v3150
    %3911 = vmatprep.subr.bf16.mxu0 %v3147
    %3912 = vmatpush1.bf16.msra.mxu0 %v3146
    %3913 = vmatprep.subr.bf16.mxu0 %v3143
    %3914 = vmatpush1.bf16.msra.mxu0 %v3142
    %3915 = vmatprep.subr.bf16.mxu0 %v3139
    %3916 = vmatpush1.bf16.msra.mxu0 %v3138
    %3917 = vmatprep.subr.bf16.mxu0 %v3135
    %3918 = vmatpush1.bf16.msra.mxu0 %v3134
    %3919 = vmatprep.subr.bf16.mxu0 %v3195
    %3920 = vmatpush2.bf16.msra.mxu0 %v3194
    %3921 = vmatprep.subr.bf16.mxu0 %v3191
    %3922 = vmatpush2.bf16.msra.mxu0 %v3190
    %3923 = vmatprep.subr.bf16.mxu0 %v3187
    %3924 = vmatpush2.bf16.msra.mxu0 %v3186
    %3925 = vmatprep.subr.bf16.mxu0 %v3183
    %3926 = vmatpush2.bf16.msra.mxu0 %v3182
    %3927 = vmatprep.subr.bf16.mxu0 %v3179
    %3928 = vmatpush2.bf16.msra.mxu0 %v3178
    %3929 = vmatprep.subr.bf16.mxu0 %v3175
    %3930 = vmatpush2.bf16.msra.mxu0 %v3174
    %3931 = vmatprep.subr.bf16.mxu0 %v3171
    %3932 = vmatpush2.bf16.msra.mxu0 %v3170
    %3933 = vmatprep.subr.bf16.mxu0 %v3167
    %3934 = vmatpush2.bf16.msra.mxu0 %v3166
    %3935 = vmatprep.mubr.bf16.mxu0 %v2473
    %3936 = vmatmul.mubr.bf16.gmra.mxu0 %v2472
    %v3937 = vpop.f32.mrf.mxu0
    %v3938 = vadd.f32 %v3745, %v3937
    %v3939 = vpop.f32.mrf.mxu0
    %v3940 = vadd.f32 %v3747, %v3939
    %v3941 = vpop.f32.mrf.mxu0
    %v3942 = vadd.f32 %v3749, %v3941
    %v3943 = vpop.f32.mrf.mxu0
    %v3944 = vadd.f32 %v3751, %v3943
    %3945 = vmatprep.mubr.bf16.mxu0 %v2477
    %3946 = vmatmul.mubr.bf16.gmra.mxu0 %v2476
    %v3947 = vpop.f32.mrf.mxu0
    %v3948 = vadd.f32 %v3755, %v3947
    %v3949 = vpop.f32.mrf.mxu0
    %v3950 = vadd.f32 %v3757, %v3949
    %v3951 = vpop.f32.mrf.mxu0
    %v3952 = vadd.f32 %v3759, %v3951
    %v3953 = vpop.f32.mrf.mxu0
    %v3954 = vadd.f32 %v3761, %v3953
    %3955 = vmatprep.mubr.bf16.mxu0 %v2481
    %3956 = vmatmul.mubr.bf16.gmra.mxu0 %v2480
    %v3957 = vpop.f32.mrf.mxu0
    %v3958 = vadd.f32 %v3765, %v3957
    %v3959 = vpop.f32.mrf.mxu0
    %v3960 = vadd.f32 %v3767, %v3959
    %v3961 = vpop.f32.mrf.mxu0
    %v3962 = vadd.f32 %v3769, %v3961
    %v3963 = vpop.f32.mrf.mxu0
    %v3964 = vadd.f32 %v3771, %v3963
    %3965 = vmatprep.mubr.bf16.mxu0 %v2485
    %3966 = vmatmul.mubr.bf16.gmra.mxu0 %v2484
    %v3967 = vpop.f32.mrf.mxu0
    %v3968 = vadd.f32 %v3775, %v3967
    %v3969 = vpop.f32.mrf.mxu0
    %v3970 = vadd.f32 %v3777, %v3969
    %v3971 = vpop.f32.mrf.mxu0
    %v3972 = vadd.f32 %v3779, %v3971
    %v3973 = vpop.f32.mrf.mxu0
    %v3974 = vadd.f32 %v3781, %v3973
    %3975 = vmatprep.mubr.bf16.mxu0 %v2489
    %3976 = vmatmul.mubr.bf16.gmra.mxu0 %v2488
    %v3977 = vpop.f32.mrf.mxu0
    %v3978 = vadd.f32 %v3785, %v3977
    %v3979 = vpop.f32.mrf.mxu0
    %v3980 = vadd.f32 %v3787, %v3979
    %v3981 = vpop.f32.mrf.mxu0
    %v3982 = vadd.f32 %v3789, %v3981
    %v3983 = vpop.f32.mrf.mxu0
    %v3984 = vadd.f32 %v3791, %v3983
    %3985 = vmatprep.mubr.bf16.mxu0 %v2493
    %3986 = vmatmul.mubr.bf16.gmra.mxu0 %v2492
    %v3987 = vpop.f32.mrf.mxu0
    %v3988 = vadd.f32 %v3795, %v3987
    %v3989 = vpop.f32.mrf.mxu0
    %v3990 = vadd.f32 %v3797, %v3989
    %v3991 = vpop.f32.mrf.mxu0
    %v3992 = vadd.f32 %v3799, %v3991
    %v3993 = vpop.f32.mrf.mxu0
    %v3994 = vadd.f32 %v3801, %v3993
    %3995 = vmatprep.mubr.bf16.mxu0 %v2497
    %3996 = vmatmul.mubr.bf16.gmra.mxu0 %v2496
    %v3997 = vpop.f32.mrf.mxu0
    %v3998 = vadd.f32 %v3805, %v3997
    %v3999 = vpop.f32.mrf.mxu0
    %v4000 = vadd.f32 %v3807, %v3999
    %v4001 = vpop.f32.mrf.mxu0
    %v4002 = vadd.f32 %v3809, %v4001
    %v4003 = vpop.f32.mrf.mxu0
    %v4004 = vadd.f32 %v3811, %v4003
    %4005 = vmatprep.mubr.bf16.mxu0 %v2501
    %4006 = vmatmul.mubr.bf16.gmra.mxu0 %v2500
    %v4007 = vpop.f32.mrf.mxu0
    %v4008 = vadd.f32 %v3815, %v4007
    %v4009 = vpop.f32.mrf.mxu0
    %v4010 = vadd.f32 %v3817, %v4009
    %v4011 = vpop.f32.mrf.mxu0
    %v4012 = vadd.f32 %v3819, %v4011
    %v4013 = vpop.f32.mrf.mxu0
    %v4014 = vadd.f32 %v3821, %v4013
    %4015 = vmatprep.mubr.bf16.mxu0 %v2505
    %4016 = vmatmul.mubr.bf16.gmra.mxu0 %v2504
    %v4017 = vpop.f32.mrf.mxu0
    %v4018 = vadd.f32 %v3825, %v4017
    %v4019 = vpop.f32.mrf.mxu0
    %v4020 = vadd.f32 %v3827, %v4019
    %v4021 = vpop.f32.mrf.mxu0
    %v4022 = vadd.f32 %v3829, %v4021
    %v4023 = vpop.f32.mrf.mxu0
    %v4024 = vadd.f32 %v3831, %v4023
    %4025 = vmatprep.mubr.bf16.mxu0 %v2509
    %4026 = vmatmul.mubr.bf16.gmra.mxu0 %v2508
    %v4027 = vpop.f32.mrf.mxu0
    %v4028 = vadd.f32 %v3835, %v4027
    %v4029 = vpop.f32.mrf.mxu0
    %v4030 = vadd.f32 %v3837, %v4029
    %v4031 = vpop.f32.mrf.mxu0
    %v4032 = vadd.f32 %v3839, %v4031
    %v4033 = vpop.f32.mrf.mxu0
    %v4034 = vadd.f32 %v3841, %v4033
    %4035 = vmatprep.mubr.bf16.mxu0 %v2513
    %4036 = vmatmul.mubr.bf16.gmra.mxu0 %v2512
    %v4037 = vpop.f32.mrf.mxu0
    %v4038 = vadd.f32 %v3845, %v4037
    %v4039 = vpop.f32.mrf.mxu0
    %v4040 = vadd.f32 %v3847, %v4039
    %v4041 = vpop.f32.mrf.mxu0
    %v4042 = vadd.f32 %v3849, %v4041
    %v4043 = vpop.f32.mrf.mxu0
    %v4044 = vadd.f32 %v3851, %v4043
    %4045 = vmatprep.mubr.bf16.mxu0 %v2517
    %4046 = vmatmul.mubr.bf16.gmra.mxu0 %v2516
    %v4047 = vpop.f32.mrf.mxu0
    %v4048 = vadd.f32 %v3855, %v4047
    %v4049 = vpop.f32.mrf.mxu0
    %v4050 = vadd.f32 %v3857, %v4049
    %v4051 = vpop.f32.mrf.mxu0
    %v4052 = vadd.f32 %v3859, %v4051
    %v4053 = vpop.f32.mrf.mxu0
    %v4054 = vadd.f32 %v3861, %v4053
    %4055 = vmatprep.mubr.bf16.mxu0 %v2521
    %4056 = vmatmul.mubr.bf16.gmra.mxu0 %v2520
    %v4057 = vpop.f32.mrf.mxu0
    %v4058 = vadd.f32 %v3865, %v4057
    %v4059 = vpop.f32.mrf.mxu0
    %v4060 = vadd.f32 %v3867, %v4059
    %v4061 = vpop.f32.mrf.mxu0
    %v4062 = vadd.f32 %v3869, %v4061
    %v4063 = vpop.f32.mrf.mxu0
    %v4064 = vadd.f32 %v3871, %v4063
    %4065 = vmatprep.mubr.bf16.mxu0 %v2525
    %4066 = vmatmul.mubr.bf16.gmra.mxu0 %v2524
    %v4067 = vpop.f32.mrf.mxu0
    %v4068 = vadd.f32 %v3875, %v4067
    %v4069 = vpop.f32.mrf.mxu0
    %v4070 = vadd.f32 %v3877, %v4069
    %v4071 = vpop.f32.mrf.mxu0
    %v4072 = vadd.f32 %v3879, %v4071
    %v4073 = vpop.f32.mrf.mxu0
    %v4074 = vadd.f32 %v3881, %v4073
    %4075 = vmatprep.mubr.bf16.mxu0 %v2529
    %4076 = vmatmul.mubr.bf16.gmra.mxu0 %v2528
    %v4077 = vpop.f32.mrf.mxu0
    %v4078 = vadd.f32 %v3885, %v4077
    %v4079 = vpop.f32.mrf.mxu0
    %v4080 = vadd.f32 %v3887, %v4079
    %v4081 = vpop.f32.mrf.mxu0
    %v4082 = vadd.f32 %v3889, %v4081
    %v4083 = vpop.f32.mrf.mxu0
    %v4084 = vadd.f32 %v3891, %v4083
    %4085 = vmatprep.mubr.bf16.mxu0 %v2533
    %4086 = vmatmul.mubr.bf16.gmra.mxu0 %v2532
    %v4087 = vpop.f32.mrf.mxu0
    %v4088 = vadd.f32 %v3895, %v4087
    %v4089 = vpop.f32.mrf.mxu0
    %v4090 = vadd.f32 %v3897, %v4089
    %v4091 = vpop.f32.mrf.mxu0
    %v4092 = vadd.f32 %v3899, %v4091
    %v4093 = vpop.f32.mrf.mxu0
    %v4094 = vadd.f32 %v3901, %v4093
    %4095 = vdwg.mxu0
    %v4096 = vmax.f32 %v3552, 0.0
    %v4097 = vmax.f32 %v3554, 0.0
    %v4098 = vmax.f32 %v3938, 0.0
    %v4099 = vmax.f32 %v3940, 0.0
    %v4100 = vmax.f32 %v3556, 0.0
    %v4101 = vmax.f32 %v3558, 0.0
    %v4102 = vmax.f32 %v3942, 0.0
    %v4103 = vmax.f32 %v3944, 0.0
    %v4104 = vmax.f32 %v3562, 0.0
    %v4105 = vmax.f32 %v3564, 0.0
    %v4106 = vmax.f32 %v3948, 0.0
    %v4107 = vmax.f32 %v3950, 0.0
    %v4108 = vmax.f32 %v3566, 0.0
    %v4109 = vmax.f32 %v3568, 0.0
    %v4110 = vmax.f32 %v3952, 0.0
    %v4111 = vmax.f32 %v3954, 0.0
    %v4112 = vmax.f32 %v3572, 0.0
    %v4113 = vmax.f32 %v3574, 0.0
    %v4114 = vmax.f32 %v3958, 0.0
    %v4115 = vmax.f32 %v3960, 0.0
    %v4116 = vmax.f32 %v3576, 0.0
    %v4117 = vmax.f32 %v3578, 0.0
    %v4118 = vmax.f32 %v3962, 0.0
    %v4119 = vmax.f32 %v3964, 0.0
    %v4120 = vmax.f32 %v3582, 0.0
    %v4121 = vmax.f32 %v3584, 0.0
    %v4122 = vmax.f32 %v3968, 0.0
    %v4123 = vmax.f32 %v3970, 0.0
    %v4124 = vmax.f32 %v3586, 0.0
    %v4125 = vmax.f32 %v3588, 0.0
    %v4126 = vmax.f32 %v3972, 0.0
    %v4127 = vmax.f32 %v3974, 0.0
    %v4128 = vmax.f32 %v3592, 0.0
    %v4129 = vmax.f32 %v3594, 0.0
    %v4130 = vmax.f32 %v3978, 0.0
    %v4131 = vmax.f32 %v3980, 0.0
    %v4132 = vmax.f32 %v3596, 0.0
    %v4133 = vmax.f32 %v3598, 0.0
    %v4134 = vmax.f32 %v3982, 0.0
    %v4135 = vmax.f32 %v3984, 0.0
    %v4136 = vmax.f32 %v3602, 0.0
    %v4137 = vmax.f32 %v3604, 0.0
    %v4138 = vmax.f32 %v3988, 0.0
    %v4139 = vmax.f32 %v3990, 0.0
    %v4140 = vmax.f32 %v3606, 0.0
    %v4141 = vmax.f32 %v3608, 0.0
    %v4142 = vmax.f32 %v3992, 0.0
    %v4143 = vmax.f32 %v3994, 0.0
    %v4144 = vmax.f32 %v3612, 0.0
    %v4145 = vmax.f32 %v3614, 0.0
    %v4146 = vmax.f32 %v3998, 0.0
    %v4147 = vmax.f32 %v4000, 0.0
    %v4148 = vmax.f32 %v3616, 0.0
    %v4149 = vmax.f32 %v3618, 0.0
    %v4150 = vmax.f32 %v4002, 0.0
    %v4151 = vmax.f32 %v4004, 0.0
    %v4152 = vmax.f32 %v3622, 0.0
    %v4153 = vmax.f32 %v3624, 0.0
    %v4154 = vmax.f32 %v4008, 0.0
    %v4155 = vmax.f32 %v4010, 0.0
    %v4156 = vmax.f32 %v3626, 0.0
    %v4157 = vmax.f32 %v3628, 0.0
    %v4158 = vmax.f32 %v4012, 0.0
    %v4159 = vmax.f32 %v4014, 0.0
    %v4160 = vmax.f32 %v3632, 0.0
    %v4161 = vmax.f32 %v3634, 0.0
    %v4162 = vmax.f32 %v4018, 0.0
    %v4163 = vmax.f32 %v4020, 0.0
    %v4164 = vmax.f32 %v3636, 0.0
    %v4165 = vmax.f32 %v3638, 0.0
    %v4166 = vmax.f32 %v4022, 0.0
    %v4167 = vmax.f32 %v4024, 0.0
    %v4168 = vmax.f32 %v3642, 0.0
    %v4169 = vmax.f32 %v3644, 0.0
    %v4170 = vmax.f32 %v4028, 0.0
    %v4171 = vmax.f32 %v4030, 0.0
    %v4172 = vmax.f32 %v3646, 0.0
    %v4173 = vmax.f32 %v3648, 0.0
    %v4174 = vmax.f32 %v4032, 0.0
    %v4175 = vmax.f32 %v4034, 0.0
    %v4176 = vmax.f32 %v3652, 0.0
    %v4177 = vmax.f32 %v3654, 0.0
    %v4178 = vmax.f32 %v4038, 0.0
    %v4179 = vmax.f32 %v4040, 0.0
    %v4180 = vmax.f32 %v3656, 0.0
    %v4181 = vmax.f32 %v3658, 0.0
    %v4182 = vmax.f32 %v4042, 0.0
    %v4183 = vmax.f32 %v4044, 0.0
    %v4184 = vmax.f32 %v3662, 0.0
    %v4185 = vmax.f32 %v3664, 0.0
    %v4186 = vmax.f32 %v4048, 0.0
    %v4187 = vmax.f32 %v4050, 0.0
    %v4188 = vmax.f32 %v3666, 0.0
    %v4189 = vmax.f32 %v3668, 0.0
    %v4190 = vmax.f32 %v4052, 0.0
    %v4191 = vmax.f32 %v4054, 0.0
    %v4192 = vmax.f32 %v3672, 0.0
    %v4193 = vmax.f32 %v3674, 0.0
    %v4194 = vmax.f32 %v4058, 0.0
    %v4195 = vmax.f32 %v4060, 0.0
    %v4196 = vmax.f32 %v3676, 0.0
    %v4197 = vmax.f32 %v3678, 0.0
    %v4198 = vmax.f32 %v4062, 0.0
    %v4199 = vmax.f32 %v4064, 0.0
    %v4200 = vmax.f32 %v3682, 0.0
    %v4201 = vmax.f32 %v3684, 0.0
    %v4202 = vmax.f32 %v4068, 0.0
    %v4203 = vmax.f32 %v4070, 0.0
    %v4204 = vmax.f32 %v3686, 0.0
    %v4205 = vmax.f32 %v3688, 0.0
    %v4206 = vmax.f32 %v4072, 0.0
    %v4207 = vmax.f32 %v4074, 0.0
    %v4208 = vmax.f32 %v3692, 0.0
    %v4209 = vmax.f32 %v3694, 0.0
    %v4210 = vmax.f32 %v4078, 0.0
    %v4211 = vmax.f32 %v4080, 0.0
    %v4212 = vmax.f32 %v3696, 0.0
    %v4213 = vmax.f32 %v3698, 0.0
    %v4214 = vmax.f32 %v4082, 0.0
    %v4215 = vmax.f32 %v4084, 0.0
    %v4216 = vmax.f32 %v3702, 0.0
    %v4217 = vmax.f32 %v3704, 0.0
    %v4218 = vmax.f32 %v4088, 0.0
    %v4219 = vmax.f32 %v4090, 0.0
    %v4220 = vmax.f32 %v3706, 0.0
    %v4221 = vmax.f32 %v3708, 0.0
    %v4222 = vmax.f32 %v4092, 0.0
    %v4223 = vmax.f32 %v4094, 0.0
    %v4224 = vpack.c.bf16 %v4100, %v4096
    %v4225 = vpack.c.bf16 %v4101, %v4097
    %v4226 = vpack.c.bf16 %v4102, %v4098
    %v4227 = vpack.c.bf16 %v4103, %v4099
    %v4228 = vpack.c.bf16 %v4108, %v4104
    %v4229 = vpack.c.bf16 %v4109, %v4105
    %v4230 = vpack.c.bf16 %v4110, %v4106
    %v4231 = vpack.c.bf16 %v4111, %v4107
    %v4232 = vpack.c.bf16 %v4116, %v4112
    %v4233 = vpack.c.bf16 %v4117, %v4113
    %v4234 = vpack.c.bf16 %v4118, %v4114
    %v4235 = vpack.c.bf16 %v4119, %v4115
    %v4236 = vpack.c.bf16 %v4124, %v4120
    %v4237 = vpack.c.bf16 %v4125, %v4121
    %v4238 = vpack.c.bf16 %v4126, %v4122
    %v4239 = vpack.c.bf16 %v4127, %v4123
    %v4240 = vpack.c.bf16 %v4132, %v4128
    %v4241 = vpack.c.bf16 %v4133, %v4129
    %v4242 = vpack.c.bf16 %v4134, %v4130
    %v4243 = vpack.c.bf16 %v4135, %v4131
    %v4244 = vpack.c.bf16 %v4140, %v4136
    %v4245 = vpack.c.bf16 %v4141, %v4137
    %v4246 = vpack.c.bf16 %v4142, %v4138
    %v4247 = vpack.c.bf16 %v4143, %v4139
    %v4248 = vpack.c.bf16 %v4148, %v4144
    %v4249 = vpack.c.bf16 %v4149, %v4145
    %v4250 = vpack.c.bf16 %v4150, %v4146
    %v4251 = vpack.c.bf16 %v4151, %v4147
    %v4252 = vpack.c.bf16 %v4156, %v4152
    %v4253 = vpack.c.bf16 %v4157, %v4153
    %v4254 = vpack.c.bf16 %v4158, %v4154
    %v4255 = vpack.c.bf16 %v4159, %v4155
    %v4256 = vpack.c.bf16 %v4164, %v4160
    %v4257 = vpack.c.bf16 %v4165, %v4161
    %v4258 = vpack.c.bf16 %v4166, %v4162
    %v4259 = vpack.c.bf16 %v4167, %v4163
    %v4260 = vpack.c.bf16 %v4172, %v4168
    %v4261 = vpack.c.bf16 %v4173, %v4169
    %v4262 = vpack.c.bf16 %v4174, %v4170
    %v4263 = vpack.c.bf16 %v4175, %v4171
    %v4264 = vpack.c.bf16 %v4180, %v4176
    %v4265 = vpack.c.bf16 %v4181, %v4177
    %v4266 = vpack.c.bf16 %v4182, %v4178
    %v4267 = vpack.c.bf16 %v4183, %v4179
    %v4268 = vpack.c.bf16 %v4188, %v4184
    %v4269 = vpack.c.bf16 %v4189, %v4185
    %v4270 = vpack.c.bf16 %v4190, %v4186
    %v4271 = vpack.c.bf16 %v4191, %v4187
    %v4272 = vpack.c.bf16 %v4196, %v4192
    %v4273 = vpack.c.bf16 %v4197, %v4193
    %v4274 = vpack.c.bf16 %v4198, %v4194
    %v4275 = vpack.c.bf16 %v4199, %v4195
    %v4276 = vpack.c.bf16 %v4204, %v4200
    %v4277 = vpack.c.bf16 %v4205, %v4201
    %v4278 = vpack.c.bf16 %v4206, %v4202
    %v4279 = vpack.c.bf16 %v4207, %v4203
    %v4280 = vpack.c.bf16 %v4212, %v4208
    %v4281 = vpack.c.bf16 %v4213, %v4209
    %v4282 = vpack.c.bf16 %v4214, %v4210
    %v4283 = vpack.c.bf16 %v4215, %v4211
    %v4284 = vpack.c.bf16 %v4220, %v4216
    %v4285 = vpack.c.bf16 %v4221, %v4217
    %v4286 = vpack.c.bf16 %v4222, %v4218
    %v4287 = vpack.c.bf16 %v4223, %v4219
    %v4288 = vld [vmem:[%s7] sm:$0xf]
    %v4289 = vld [vmem:[%s7 + $0x4] sm:$0xf]
    %v4290 = vld [vmem:[%s7 + $0x8] sm:$0xf]
    %v4291 = vld [vmem:[%s7 + $0xc] sm:$0xf]
    %v4292 = vld [vmem:[%s7 + $0x10] sm:$0xf]
    %v4293 = vld [vmem:[%s7 + $0x14] sm:$0xf]
    %v4294 = vld [vmem:[%s7 + $0x18] sm:$0xf]
    %v4295 = vld [vmem:[%s7 + $0x1c] sm:$0xf]
    %v4296 = vld [vmem:[%s7 + $0x20] sm:$0xf]
    %v4297 = vld [vmem:[%s7 + $0x24] sm:$0xf]
    %v4298 = vld [vmem:[%s7 + $0x28] sm:$0xf]
    %v4299 = vld [vmem:[%s7 + $0x2c] sm:$0xf]
    %v4300 = vld [vmem:[%s7 + $0x30] sm:$0xf]
    %v4301 = vld [vmem:[%s7 + $0x34] sm:$0xf]
    %v4302 = vld [vmem:[%s7 + $0x38] sm:$0xf]
    %v4303 = vld [vmem:[%s7 + $0x3c] sm:$0xf]
    %v4304 = vld [vmem:[%s7 + $0x40] sm:$0xf]
    %v4305 = vld [vmem:[%s7 + $0x44] sm:$0xf]
    %v4306 = vld [vmem:[%s7 + $0x48] sm:$0xf]
    %v4307 = vld [vmem:[%s7 + $0x4c] sm:$0xf]
    %v4308 = vld [vmem:[%s7 + $0x50] sm:$0xf]
    %v4309 = vld [vmem:[%s7 + $0x54] sm:$0xf]
    %v4310 = vld [vmem:[%s7 + $0x58] sm:$0xf]
    %v4311 = vld [vmem:[%s7 + $0x5c] sm:$0xf]
    %v4312 = vld [vmem:[%s7 + $0x60] sm:$0xf]
    %v4313 = vld [vmem:[%s7 + $0x64] sm:$0xf]
    %v4314 = vld [vmem:[%s7 + $0x68] sm:$0xf]
    %v4315 = vld [vmem:[%s7 + $0x6c] sm:$0xf]
    %v4316 = vld [vmem:[%s7 + $0x70] sm:$0xf]
    %v4317 = vld [vmem:[%s7 + $0x74] sm:$0xf]
    %v4318 = vld [vmem:[%s7 + $0x78] sm:$0xf]
    %v4319 = vld [vmem:[%s7 + $0x7c] sm:$0xf]
    %v4320 = vld [vmem:[%s7 + $0x80] sm:$0xf]
    %v4321 = vld [vmem:[%s7 + $0x84] sm:$0xf]
    %v4322 = vld [vmem:[%s7 + $0x88] sm:$0xf]
    %v4323 = vld [vmem:[%s7 + $0x8c] sm:$0xf]
    %v4324 = vld [vmem:[%s7 + $0x90] sm:$0xf]
    %v4325 = vld [vmem:[%s7 + $0x94] sm:$0xf]
    %v4326 = vld [vmem:[%s7 + $0x98] sm:$0xf]
    %v4327 = vld [vmem:[%s7 + $0x9c] sm:$0xf]
    %v4328 = vld [vmem:[%s7 + $0xa0] sm:$0xf]
    %v4329 = vld [vmem:[%s7 + $0xa4] sm:$0xf]
    %v4330 = vld [vmem:[%s7 + $0xa8] sm:$0xf]
    %v4331 = vld [vmem:[%s7 + $0xac] sm:$0xf]
    %v4332 = vld [vmem:[%s7 + $0xb0] sm:$0xf]
    %v4333 = vld [vmem:[%s7 + $0xb4] sm:$0xf]
    %v4334 = vld [vmem:[%s7 + $0xb8] sm:$0xf]
    %v4335 = vld [vmem:[%s7 + $0xbc] sm:$0xf]
    %v4336 = vld [vmem:[%s7 + $0xc0] sm:$0xf]
    %v4337 = vld [vmem:[%s7 + $0xc4] sm:$0xf]
    %v4338 = vld [vmem:[%s7 + $0xc8] sm:$0xf]
    %v4339 = vld [vmem:[%s7 + $0xcc] sm:$0xf]
    %v4340 = vld [vmem:[%s7 + $0xd0] sm:$0xf]
    %v4341 = vld [vmem:[%s7 + $0xd4] sm:$0xf]
    %v4342 = vld [vmem:[%s7 + $0xd8] sm:$0xf]
    %v4343 = vld [vmem:[%s7 + $0xdc] sm:$0xf]
    %v4344 = vld [vmem:[%s7 + $0xe0] sm:$0xf]
    %v4345 = vld [vmem:[%s7 + $0xe4] sm:$0xf]
    %v4346 = vld [vmem:[%s7 + $0xe8] sm:$0xf]
    %v4347 = vld [vmem:[%s7 + $0xec] sm:$0xf]
    %v4348 = vld [vmem:[%s7 + $0xf0] sm:$0xf]
    %v4349 = vld [vmem:[%s7 + $0xf4] sm:$0xf]
    %v4350 = vld [vmem:[%s7 + $0xf8] sm:$0xf]
    %v4351 = vld [vmem:[%s7 + $0xfc] sm:$0xf]
    %v4352 = vld [vmem:[%s8] sm:$0x1]
    %v4354 = vlaneseq
    %v4355 = vshrl.u32 %v4354, 7
    %v4356 = vsub.s32 0, %v4355
    %v4357 = vrot.slane %v4352, %v4356
    %v4423 = vunpack.c.l.b16 %v4288
    %v4424 = vunpack.c.l.b16 %v4289
    %v4425 = vunpack.c.l.b16 %v4290
    %v4426 = vunpack.c.l.b16 %v4291
    %v4427 = vunpack.c.l.b16 %v4292
    %v4428 = vunpack.c.l.b16 %v4293
    %v4429 = vunpack.c.l.b16 %v4294
    %v4430 = vunpack.c.l.b16 %v4295
    %v4431 = vunpack.c.l.b16 %v4296
    %v4432 = vunpack.c.l.b16 %v4297
    %v4433 = vunpack.c.l.b16 %v4298
    %v4434 = vunpack.c.l.b16 %v4299
    %v4435 = vunpack.c.l.b16 %v4300
    %v4436 = vunpack.c.l.b16 %v4301
    %v4437 = vunpack.c.l.b16 %v4302
    %v4438 = vunpack.c.l.b16 %v4303
    %v4439 = vunpack.c.l.b16 %v4304
    %v4440 = vunpack.c.l.b16 %v4305
    %v4441 = vunpack.c.l.b16 %v4306
    %v4442 = vunpack.c.l.b16 %v4307
    %v4443 = vunpack.c.l.b16 %v4308
    %v4444 = vunpack.c.l.b16 %v4309
    %v4445 = vunpack.c.l.b16 %v4310
    %v4446 = vunpack.c.l.b16 %v4311
    %v4447 = vunpack.c.l.b16 %v4312
    %v4448 = vunpack.c.l.b16 %v4313
    %v4449 = vunpack.c.l.b16 %v4314
    %v4450 = vunpack.c.l.b16 %v4315
    %v4451 = vunpack.c.l.b16 %v4316
    %v4452 = vunpack.c.l.b16 %v4317
    %v4453 = vunpack.c.l.b16 %v4318
    %v4454 = vunpack.c.l.b16 %v4319
    %v4455 = vunpack.c.l.b16 %v4320
    %v4456 = vunpack.c.l.b16 %v4321
    %v4457 = vunpack.c.l.b16 %v4322
    %v4458 = vunpack.c.l.b16 %v4323
    %v4459 = vunpack.c.l.b16 %v4324
    %v4460 = vunpack.c.l.b16 %v4325
    %v4461 = vunpack.c.l.b16 %v4326
    %v4462 = vunpack.c.l.b16 %v4327
    %v4463 = vunpack.c.l.b16 %v4328
    %v4464 = vunpack.c.l.b16 %v4329
    %v4465 = vunpack.c.l.b16 %v4330
    %v4466 = vunpack.c.l.b16 %v4331
    %v4467 = vunpack.c.l.b16 %v4332
    %v4468 = vunpack.c.l.b16 %v4333
    %v4469 = vunpack.c.l.b16 %v4334
    %v4470 = vunpack.c.l.b16 %v4335
    %v4471 = vunpack.c.l.b16 %v4336
    %v4472 = vunpack.c.l.b16 %v4337
    %v4473 = vunpack.c.l.b16 %v4338
    %v4474 = vunpack.c.l.b16 %v4339
    %v4475 = vunpack.c.l.b16 %v4340
    %v4476 = vunpack.c.l.b16 %v4341
    %v4477 = vunpack.c.l.b16 %v4342
    %v4478 = vunpack.c.l.b16 %v4343
    %v4479 = vunpack.c.l.b16 %v4344
    %v4480 = vunpack.c.l.b16 %v4345
    %v4481 = vunpack.c.l.b16 %v4346
    %v4482 = vunpack.c.l.b16 %v4347
    %v4483 = vunpack.c.l.b16 %v4348
    %v4484 = vunpack.c.l.b16 %v4349
    %v4485 = vunpack.c.l.b16 %v4350
    %v4486 = vunpack.c.l.b16 %v4351
    %v4487 = vpack.c.b16 %v4424, %v4423
    %v4488 = vpack.c.b16 %v4426, %v4425
    %v4489 = vpack.c.b16 %v4428, %v4427
    %v4490 = vpack.c.b16 %v4430, %v4429
    %v4491 = vpack.c.b16 %v4432, %v4431
    %v4492 = vpack.c.b16 %v4434, %v4433
    %v4493 = vpack.c.b16 %v4436, %v4435
    %v4494 = vpack.c.b16 %v4438, %v4437
    %v4495 = vpack.c.b16 %v4440, %v4439
    %v4496 = vpack.c.b16 %v4442, %v4441
    %v4497 = vpack.c.b16 %v4444, %v4443
    %v4498 = vpack.c.b16 %v4446, %v4445
    %v4499 = vpack.c.b16 %v4448, %v4447
    %v4500 = vpack.c.b16 %v4450, %v4449
    %v4501 = vpack.c.b16 %v4452, %v4451
    %v4502 = vpack.c.b16 %v4454, %v4453
    %v4503 = vpack.c.b16 %v4456, %v4455
    %v4504 = vpack.c.b16 %v4458, %v4457
    %v4505 = vpack.c.b16 %v4460, %v4459
    %v4506 = vpack.c.b16 %v4462, %v4461
    %v4507 = vpack.c.b16 %v4464, %v4463
    %v4508 = vpack.c.b16 %v4466, %v4465
    %v4509 = vpack.c.b16 %v4468, %v4467
    %v4510 = vpack.c.b16 %v4470, %v4469
    %v4511 = vpack.c.b16 %v4472, %v4471
    %v4512 = vpack.c.b16 %v4474, %v4473
    %v4513 = vpack.c.b16 %v4476, %v4475
    %v4514 = vpack.c.b16 %v4478, %v4477
    %v4515 = vpack.c.b16 %v4480, %v4479
    %v4516 = vpack.c.b16 %v4482, %v4481
    %v4517 = vpack.c.b16 %v4484, %v4483
    %v4518 = vpack.c.b16 %v4486, %v4485
    %4551 = vmatprep.subr.bf16.mxu0 0
    %4552 = vmatpush1.bf16.msra.mxu0 %v4494
    %4553 = vmatprep.subr.bf16.mxu0 0
    %4554 = vmatpush1.bf16.msra.mxu0 %v4493
    %4555 = vmatprep.subr.bf16.mxu0 0
    %4556 = vmatpush1.bf16.msra.mxu0 %v4492
    %4557 = vmatprep.subr.bf16.mxu0 0
    %4558 = vmatpush1.bf16.msra.mxu0 %v4491
    %4559 = vmatprep.subr.bf16.mxu0 0
    %4560 = vmatpush1.bf16.msra.mxu0 %v4490
    %4561 = vmatprep.subr.bf16.mxu0 0
    %4562 = vmatpush1.bf16.msra.mxu0 %v4489
    %4563 = vmatprep.subr.bf16.mxu0 0
    %4564 = vmatpush1.bf16.msra.mxu0 %v4488
    %4565 = vmatprep.subr.bf16.mxu0 0
    %4566 = vmatpush1.bf16.msra.mxu0 %v4487
    %4567 = vmatprep.subr.bf16.mxu0 0
    %4568 = vmatpush2.bf16.msra.mxu0 %v4502
    %4569 = vmatprep.subr.bf16.mxu0 0
    %4570 = vmatpush2.bf16.msra.mxu0 %v4501
    %4571 = vmatprep.subr.bf16.mxu0 0
    %4572 = vmatpush2.bf16.msra.mxu0 %v4500
    %4573 = vmatprep.subr.bf16.mxu0 0
    %4574 = vmatpush2.bf16.msra.mxu0 %v4499
    %4575 = vmatprep.subr.bf16.mxu0 0
    %4576 = vmatpush2.bf16.msra.mxu0 %v4498
    %4577 = vmatprep.subr.bf16.mxu0 0
    %4578 = vmatpush2.bf16.msra.mxu0 %v4497
    %4579 = vmatprep.subr.bf16.mxu0 0
    %4580 = vmatpush2.bf16.msra.mxu0 %v4496
    %4581 = vmatprep.subr.bf16.mxu0 0
    %4582 = vmatpush2.bf16.msra.mxu0 %v4495
    %4583 = vmatprep.mubr.bf16.mxu0 %v4225
    %4584 = vmatmul.mubr.bf16.gmra.mxu0 %v4224
    %v4585 = vpop.f32.mrf.mxu0
    %v4586 = vadd.f32 %v4357, %v4585
    %v4587 = vpop.f32.mrf.mxu0
    %v4588 = vpop.f32.mrf.mxu0
    %v4589 = vadd.f32 %v4357, %v4588
    %v4590 = vpop.f32.mrf.mxu0
    %4591 = vmatprep.mubr.bf16.mxu0 %v4229
    %4592 = vmatmul.mubr.bf16.gmra.mxu0 %v4228
    %v4593 = vpop.f32.mrf.mxu0
    %v4594 = vadd.f32 %v4357, %v4593
    %v4595 = vpop.f32.mrf.mxu0
    %v4596 = vpop.f32.mrf.mxu0
    %v4597 = vadd.f32 %v4357, %v4596
    %v4598 = vpop.f32.mrf.mxu0
    %4599 = vmatprep.mubr.bf16.mxu0 %v4233
    %4600 = vmatmul.mubr.bf16.gmra.mxu0 %v4232
    %v4601 = vpop.f32.mrf.mxu0
    %v4602 = vadd.f32 %v4357, %v4601
    %v4603 = vpop.f32.mrf.mxu0
    %v4604 = vpop.f32.mrf.mxu0
    %v4605 = vadd.f32 %v4357, %v4604
    %v4606 = vpop.f32.mrf.mxu0
    %4607 = vmatprep.mubr.bf16.mxu0 %v4237
    %4608 = vmatmul.mubr.bf16.gmra.mxu0 %v4236
    %v4609 = vpop.f32.mrf.mxu0
    %v4610 = vadd.f32 %v4357, %v4609
    %v4611 = vpop.f32.mrf.mxu0
    %v4612 = vpop.f32.mrf.mxu0
    %v4613 = vadd.f32 %v4357, %v4612
    %v4614 = vpop.f32.mrf.mxu0
    %4615 = vmatprep.mubr.bf16.mxu0 %v4241
    %4616 = vmatmul.mubr.bf16.gmra.mxu0 %v4240
    %v4617 = vpop.f32.mrf.mxu0
    %v4618 = vadd.f32 %v4357, %v4617
    %v4619 = vpop.f32.mrf.mxu0
    %v4620 = vpop.f32.mrf.mxu0
    %v4621 = vadd.f32 %v4357, %v4620
    %v4622 = vpop.f32.mrf.mxu0
    %4623 = vmatprep.mubr.bf16.mxu0 %v4245
    %4624 = vmatmul.mubr.bf16.gmra.mxu0 %v4244
    %v4625 = vpop.f32.mrf.mxu0
    %v4626 = vadd.f32 %v4357, %v4625
    %v4627 = vpop.f32.mrf.mxu0
    %v4628 = vpop.f32.mrf.mxu0
    %v4629 = vadd.f32 %v4357, %v4628
    %v4630 = vpop.f32.mrf.mxu0
    %4631 = vmatprep.mubr.bf16.mxu0 %v4249
    %4632 = vmatmul.mubr.bf16.gmra.mxu0 %v4248
    %v4633 = vpop.f32.mrf.mxu0
    %v4634 = vadd.f32 %v4357, %v4633
    %v4635 = vpop.f32.mrf.mxu0
    %v4636 = vpop.f32.mrf.mxu0
    %v4637 = vadd.f32 %v4357, %v4636
    %v4638 = vpop.f32.mrf.mxu0
    %4639 = vmatprep.mubr.bf16.mxu0 %v4253
    %4640 = vmatmul.mubr.bf16.gmra.mxu0 %v4252
    %v4641 = vpop.f32.mrf.mxu0
    %v4642 = vadd.f32 %v4357, %v4641
    %v4643 = vpop.f32.mrf.mxu0
    %v4644 = vpop.f32.mrf.mxu0
    %v4645 = vadd.f32 %v4357, %v4644
    %v4646 = vpop.f32.mrf.mxu0
    %4647 = vmatprep.mubr.bf16.mxu0 %v4257
    %4648 = vmatmul.mubr.bf16.gmra.mxu0 %v4256
    %v4649 = vpop.f32.mrf.mxu0
    %v4650 = vadd.f32 %v4357, %v4649
    %v4651 = vpop.f32.mrf.mxu0
    %v4652 = vpop.f32.mrf.mxu0
    %v4653 = vadd.f32 %v4357, %v4652
    %v4654 = vpop.f32.mrf.mxu0
    %4655 = vmatprep.mubr.bf16.mxu0 %v4261
    %4656 = vmatmul.mubr.bf16.gmra.mxu0 %v4260
    %v4657 = vpop.f32.mrf.mxu0
    %v4658 = vadd.f32 %v4357, %v4657
    %v4659 = vpop.f32.mrf.mxu0
    %v4660 = vpop.f32.mrf.mxu0
    %v4661 = vadd.f32 %v4357, %v4660
    %v4662 = vpop.f32.mrf.mxu0
    %4663 = vmatprep.mubr.bf16.mxu0 %v4265
    %4664 = vmatmul.mubr.bf16.gmra.mxu0 %v4264
    %v4665 = vpop.f32.mrf.mxu0
    %v4666 = vadd.f32 %v4357, %v4665
    %v4667 = vpop.f32.mrf.mxu0
    %v4668 = vpop.f32.mrf.mxu0
    %v4669 = vadd.f32 %v4357, %v4668
    %v4670 = vpop.f32.mrf.mxu0
    %4671 = vmatprep.mubr.bf16.mxu0 %v4269
    %4672 = vmatmul.mubr.bf16.gmra.mxu0 %v4268
    %v4673 = vpop.f32.mrf.mxu0
    %v4674 = vadd.f32 %v4357, %v4673
    %v4675 = vpop.f32.mrf.mxu0
    %v4676 = vpop.f32.mrf.mxu0
    %v4677 = vadd.f32 %v4357, %v4676
    %v4678 = vpop.f32.mrf.mxu0
    %4679 = vmatprep.mubr.bf16.mxu0 %v4273
    %4680 = vmatmul.mubr.bf16.gmra.mxu0 %v4272
    %v4681 = vpop.f32.mrf.mxu0
    %v4682 = vadd.f32 %v4357, %v4681
    %v4683 = vpop.f32.mrf.mxu0
    %v4684 = vpop.f32.mrf.mxu0
    %v4685 = vadd.f32 %v4357, %v4684
    %v4686 = vpop.f32.mrf.mxu0
    %4687 = vmatprep.mubr.bf16.mxu0 %v4277
    %4688 = vmatmul.mubr.bf16.gmra.mxu0 %v4276
    %v4689 = vpop.f32.mrf.mxu0
    %v4690 = vadd.f32 %v4357, %v4689
    %v4691 = vpop.f32.mrf.mxu0
    %v4692 = vpop.f32.mrf.mxu0
    %v4693 = vadd.f32 %v4357, %v4692
    %v4694 = vpop.f32.mrf.mxu0
    %4695 = vmatprep.mubr.bf16.mxu0 %v4281
    %4696 = vmatmul.mubr.bf16.gmra.mxu0 %v4280
    %v4697 = vpop.f32.mrf.mxu0
    %v4698 = vadd.f32 %v4357, %v4697
    %v4699 = vpop.f32.mrf.mxu0
    %v4700 = vpop.f32.mrf.mxu0
    %v4701 = vadd.f32 %v4357, %v4700
    %v4702 = vpop.f32.mrf.mxu0
    %4703 = vmatprep.mubr.bf16.mxu0 %v4285
    %4704 = vmatmul.mubr.bf16.gmra.mxu0 %v4284
    %v4705 = vpop.f32.mrf.mxu0
    %v4706 = vadd.f32 %v4357, %v4705
    %v4707 = vpop.f32.mrf.mxu0
    %v4708 = vpop.f32.mrf.mxu0
    %v4709 = vadd.f32 %v4357, %v4708
    %v4710 = vpop.f32.mrf.mxu0
    %4711 = vdwg.mxu0
    %4712 = vmatprep.subr.bf16.mxu0 0
    %4713 = vmatpush1.bf16.msra.mxu0 %v4510
    %4714 = vmatprep.subr.bf16.mxu0 0
    %4715 = vmatpush1.bf16.msra.mxu0 %v4509
    %4716 = vmatprep.subr.bf16.mxu0 0
    %4717 = vmatpush1.bf16.msra.mxu0 %v4508
    %4718 = vmatprep.subr.bf16.mxu0 0
    %4719 = vmatpush1.bf16.msra.mxu0 %v4507
    %4720 = vmatprep.subr.bf16.mxu0 0
    %4721 = vmatpush1.bf16.msra.mxu0 %v4506
    %4722 = vmatprep.subr.bf16.mxu0 0
    %4723 = vmatpush1.bf16.msra.mxu0 %v4505
    %4724 = vmatprep.subr.bf16.mxu0 0
    %4725 = vmatpush1.bf16.msra.mxu0 %v4504
    %4726 = vmatprep.subr.bf16.mxu0 0
    %4727 = vmatpush1.bf16.msra.mxu0 %v4503
    %4728 = vmatprep.subr.bf16.mxu0 0
    %4729 = vmatpush2.bf16.msra.mxu0 %v4518
    %4730 = vmatprep.subr.bf16.mxu0 0
    %4731 = vmatpush2.bf16.msra.mxu0 %v4517
    %4732 = vmatprep.subr.bf16.mxu0 0
    %4733 = vmatpush2.bf16.msra.mxu0 %v4516
    %4734 = vmatprep.subr.bf16.mxu0 0
    %4735 = vmatpush2.bf16.msra.mxu0 %v4515
    %4736 = vmatprep.subr.bf16.mxu0 0
    %4737 = vmatpush2.bf16.msra.mxu0 %v4514
    %4738 = vmatprep.subr.bf16.mxu0 0
    %4739 = vmatpush2.bf16.msra.mxu0 %v4513
    %4740 = vmatprep.subr.bf16.mxu0 0
    %4741 = vmatpush2.bf16.msra.mxu0 %v4512
    %4742 = vmatprep.subr.bf16.mxu0 0
    %4743 = vmatpush2.bf16.msra.mxu0 %v4511
    %4744 = vmatprep.mubr.bf16.mxu0 %v4227
    %4745 = vmatmul.mubr.bf16.gmra.mxu0 %v4226
    %v4746 = vpop.f32.mrf.mxu0
    %v4747 = vadd.f32 %v4586, %v4746
    %v4748 = vpop.f32.mrf.mxu0
    %v4749 = vpop.f32.mrf.mxu0
    %v4750 = vadd.f32 %v4589, %v4749
    %v4751 = vpop.f32.mrf.mxu0
    %4752 = vmatprep.mubr.bf16.mxu0 %v4231
    %4753 = vmatmul.mubr.bf16.gmra.mxu0 %v4230
    %v4754 = vpop.f32.mrf.mxu0
    %v4755 = vadd.f32 %v4594, %v4754
    %v4756 = vpop.f32.mrf.mxu0
    %v4757 = vpop.f32.mrf.mxu0
    %v4758 = vadd.f32 %v4597, %v4757
    %v4759 = vpop.f32.mrf.mxu0
    %4760 = vmatprep.mubr.bf16.mxu0 %v4235
    %4761 = vmatmul.mubr.bf16.gmra.mxu0 %v4234
    %v4762 = vpop.f32.mrf.mxu0
    %v4763 = vadd.f32 %v4602, %v4762
    %v4764 = vpop.f32.mrf.mxu0
    %v4765 = vpop.f32.mrf.mxu0
    %v4766 = vadd.f32 %v4605, %v4765
    %v4767 = vpop.f32.mrf.mxu0
    %4768 = vmatprep.mubr.bf16.mxu0 %v4239
    %4769 = vmatmul.mubr.bf16.gmra.mxu0 %v4238
    %v4770 = vpop.f32.mrf.mxu0
    %v4771 = vadd.f32 %v4610, %v4770
    %v4772 = vpop.f32.mrf.mxu0
    %v4773 = vpop.f32.mrf.mxu0
    %v4774 = vadd.f32 %v4613, %v4773
    %v4775 = vpop.f32.mrf.mxu0
    %4776 = vmatprep.mubr.bf16.mxu0 %v4243
    %4777 = vmatmul.mubr.bf16.gmra.mxu0 %v4242
    %v4778 = vpop.f32.mrf.mxu0
    %v4779 = vadd.f32 %v4618, %v4778
    %v4780 = vpop.f32.mrf.mxu0
    %v4781 = vpop.f32.mrf.mxu0
    %v4782 = vadd.f32 %v4621, %v4781
    %v4783 = vpop.f32.mrf.mxu0
    %4784 = vmatprep.mubr.bf16.mxu0 %v4247
    %4785 = vmatmul.mubr.bf16.gmra.mxu0 %v4246
    %v4786 = vpop.f32.mrf.mxu0
    %v4787 = vadd.f32 %v4626, %v4786
    %v4788 = vpop.f32.mrf.mxu0
    %v4789 = vpop.f32.mrf.mxu0
    %v4790 = vadd.f32 %v4629, %v4789
    %v4791 = vpop.f32.mrf.mxu0
    %4792 = vmatprep.mubr.bf16.mxu0 %v4251
    %4793 = vmatmul.mubr.bf16.gmra.mxu0 %v4250
    %v4794 = vpop.f32.mrf.mxu0
    %v4795 = vadd.f32 %v4634, %v4794
    %v4796 = vpop.f32.mrf.mxu0
    %v4797 = vpop.f32.mrf.mxu0
    %v4798 = vadd.f32 %v4637, %v4797
    %v4799 = vpop.f32.mrf.mxu0
    %4800 = vmatprep.mubr.bf16.mxu0 %v4255
    %4801 = vmatmul.mubr.bf16.gmra.mxu0 %v4254
    %v4802 = vpop.f32.mrf.mxu0
    %v4803 = vadd.f32 %v4642, %v4802
    %v4804 = vpop.f32.mrf.mxu0
    %v4805 = vpop.f32.mrf.mxu0
    %v4806 = vadd.f32 %v4645, %v4805
    %v4807 = vpop.f32.mrf.mxu0
    %4808 = vmatprep.mubr.bf16.mxu0 %v4259
    %4809 = vmatmul.mubr.bf16.gmra.mxu0 %v4258
    %v4810 = vpop.f32.mrf.mxu0
    %v4811 = vadd.f32 %v4650, %v4810
    %v4812 = vpop.f32.mrf.mxu0
    %v4813 = vpop.f32.mrf.mxu0
    %v4814 = vadd.f32 %v4653, %v4813
    %v4815 = vpop.f32.mrf.mxu0
    %4816 = vmatprep.mubr.bf16.mxu0 %v4263
    %4817 = vmatmul.mubr.bf16.gmra.mxu0 %v4262
    %v4818 = vpop.f32.mrf.mxu0
    %v4819 = vadd.f32 %v4658, %v4818
    %v4820 = vpop.f32.mrf.mxu0
    %v4821 = vpop.f32.mrf.mxu0
    %v4822 = vadd.f32 %v4661, %v4821
    %v4823 = vpop.f32.mrf.mxu0
    %4824 = vmatprep.mubr.bf16.mxu0 %v4267
    %4825 = vmatmul.mubr.bf16.gmra.mxu0 %v4266
    %v4826 = vpop.f32.mrf.mxu0
    %v4827 = vadd.f32 %v4666, %v4826
    %v4828 = vpop.f32.mrf.mxu0
    %v4829 = vpop.f32.mrf.mxu0
    %v4830 = vadd.f32 %v4669, %v4829
    %v4831 = vpop.f32.mrf.mxu0
    %4832 = vmatprep.mubr.bf16.mxu0 %v4271
    %4833 = vmatmul.mubr.bf16.gmra.mxu0 %v4270
    %v4834 = vpop.f32.mrf.mxu0
    %v4835 = vadd.f32 %v4674, %v4834
    %v4836 = vpop.f32.mrf.mxu0
    %v4837 = vpop.f32.mrf.mxu0
    %v4838 = vadd.f32 %v4677, %v4837
    %v4839 = vpop.f32.mrf.mxu0
    %4840 = vmatprep.mubr.bf16.mxu0 %v4275
    %4841 = vmatmul.mubr.bf16.gmra.mxu0 %v4274
    %v4842 = vpop.f32.mrf.mxu0
    %v4843 = vadd.f32 %v4682, %v4842
    %v4844 = vpop.f32.mrf.mxu0
    %v4845 = vpop.f32.mrf.mxu0
    %v4846 = vadd.f32 %v4685, %v4845
    %v4847 = vpop.f32.mrf.mxu0
    %4848 = vmatprep.mubr.bf16.mxu0 %v4279
    %4849 = vmatmul.mubr.bf16.gmra.mxu0 %v4278
    %v4850 = vpop.f32.mrf.mxu0
    %v4851 = vadd.f32 %v4690, %v4850
    %v4852 = vpop.f32.mrf.mxu0
    %v4853 = vpop.f32.mrf.mxu0
    %v4854 = vadd.f32 %v4693, %v4853
    %v4855 = vpop.f32.mrf.mxu0
    %4856 = vmatprep.mubr.bf16.mxu0 %v4283
    %4857 = vmatmul.mubr.bf16.gmra.mxu0 %v4282
    %v4858 = vpop.f32.mrf.mxu0
    %v4859 = vadd.f32 %v4698, %v4858
    %v4860 = vpop.f32.mrf.mxu0
    %v4861 = vpop.f32.mrf.mxu0
    %v4862 = vadd.f32 %v4701, %v4861
    %v4863 = vpop.f32.mrf.mxu0
    %4864 = vmatprep.mubr.bf16.mxu0 %v4287
    %4865 = vmatmul.mubr.bf16.gmra.mxu0 %v4286
    %v4866 = vpop.f32.mrf.mxu0
    %v4867 = vadd.f32 %v4706, %v4866
    %v4868 = vpop.f32.mrf.mxu0
    %v4869 = vpop.f32.mrf.mxu0
    %v4870 = vadd.f32 %v4709, %v4869
    %v4871 = vpop.f32.mrf.mxu0
    %4872 = vdwg.mxu0
    %4873 = vst [vmem:[%s9] sm:$0xff] %v4747
    %4874 = vst [vmem:[%s9 + $0x8] sm:$0xff] %v4750
    %4875 = vst [vmem:[%s9 + $0x10] sm:$0xff] %v4755
    %4876 = vst [vmem:[%s9 + $0x18] sm:$0xff] %v4758
    %4877 = vst [vmem:[%s9 + $0x20] sm:$0xff] %v4763
    %4878 = vst [vmem:[%s9 + $0x28] sm:$0xff] %v4766
    %4879 = vst [vmem:[%s9 + $0x30] sm:$0xff] %v4771
    %4880 = vst [vmem:[%s9 + $0x38] sm:$0xff] %v4774
    %4881 = vst [vmem:[%s9 + $0x40] sm:$0xff] %v4779
    %4882 = vst [vmem:[%s9 + $0x48] sm:$0xff] %v4782
    %4883 = vst [vmem:[%s9 + $0x50] sm:$0xff] %v4787
    %4884 = vst [vmem:[%s9 + $0x58] sm:$0xff] %v4790
    %4885 = vst [vmem:[%s9 + $0x60] sm:$0xff] %v4795
    %4886 = vst [vmem:[%s9 + $0x68] sm:$0xff] %v4798
    %4887 = vst [vmem:[%s9 + $0x70] sm:$0xff] %v4803
    %4888 = vst [vmem:[%s9 + $0x78] sm:$0xff] %v4806
    %4889 = vst [vmem:[%s9 + $0x80] sm:$0xff] %v4811
    %4890 = vst [vmem:[%s9 + $0x88] sm:$0xff] %v4814
    %4891 = vst [vmem:[%s9 + $0x90] sm:$0xff] %v4819
    %4892 = vst [vmem:[%s9 + $0x98] sm:$0xff] %v4822
    %4893 = vst [vmem:[%s9 + $0xa0] sm:$0xff] %v4827
    %4894 = vst [vmem:[%s9 + $0xa8] sm:$0xff] %v4830
    %4895 = vst [vmem:[%s9 + $0xb0] sm:$0xff] %v4835
    %4896 = vst [vmem:[%s9 + $0xb8] sm:$0xff] %v4838
    %4897 = vst [vmem:[%s9 + $0xc0] sm:$0xff] %v4843
    %4898 = vst [vmem:[%s9 + $0xc8] sm:$0xff] %v4846
    %4899 = vst [vmem:[%s9 + $0xd0] sm:$0xff] %v4851
    %4900 = vst [vmem:[%s9 + $0xd8] sm:$0xff] %v4854
    %4901 = vst [vmem:[%s9 + $0xe0] sm:$0xff] %v4859
    %4902 = vst [vmem:[%s9 + $0xe8] sm:$0xff] %v4862
    %4903 = vst [vmem:[%s9 + $0xf0] sm:$0xff] %v4867
    %4904 = vst [vmem:[%s9 + $0xf8] sm:$0xff] %v4870
    // Predicated region
    $region46: #{simple_net_forward.1} parent=1 // pred_check
      _
    $region47: #{simple_net_forward.1} parent=1 // pred_check_branch
      %4906 = sbr.rel (0) target = $region49
    $region48: #{simple_net_forward.1} parent=1 // pred_region
      _
    $region49: #{simple_net_forward.1} parent=1 // pred_fallthru
      _
    // Predicated region
    $region50: #{simple_net_forward.1} parent=1 // pred_check
      _
    $region51: #{simple_net_forward.1} parent=1 // pred_check_branch
      %4908 = sbr.rel (0) target = $region53
    $region52: #{simple_net_forward.1} parent=1 // pred_region
      _
    $region53: #{simple_net_forward.1} parent=1 // pred_fallthru
      _
    %4909 = vsyncpa [#allocation3], 1
    %4910 = vsyncpa [#allocation5], 1

</llo_original>
